<compile_context>
chip_gen: v7x
topology: tpu7x:2x2x1
jax: 0.10.0
libtpu: 0.0.40
codegen_flags: <defaults>
</compile_context>

<pallas_src>
import jax
import jax.numpy as jnp
from jax import lax
from jax.experimental import pallas as pl
from jax.experimental.pallas import tpu as pltpu


_VMEM_LIMIT = 32 * 1024 * 1024   # safe on v5e/v6e/v7x; tiles below use far less


def _round_up(x, m):
    return ((x + m - 1) // m) * m


# ---------------------------------------------------------------------------
# Pallas kernels
# ---------------------------------------------------------------------------
def _matmul_bias_relu_kernel(x_ref, w_ref, b_ref, o_ref):
    acc = jnp.dot(x_ref[...], w_ref[...], preferred_element_type=jnp.float32)
    o_ref[...] = jnp.maximum(acc + b_ref[...], 0.0)


def matmul_bias_relu(x, w, b, *, tm=256):
    """ReLU((M,K) @ (K,N) + b), tiled over M.

    M (rows = B*Ho*Wo) is tiled so Pallas pipelines the patch DMAs under the
    matmul, VMEM stays bounded independent of batch size, and the grid axis is
    'parallel' (megacore sharding on v7x).  Weights/bias stay resident
    (constant block index across the grid).
    """
    M, K = x.shape
    N = w.shape[1]
    tm = min(tm, _round_up(M, 8))
    Mp = _round_up(M, tm)
    if Mp != M:
        x = jnp.pad(x, ((0, Mp - M), (0, 0)))   # padded rows -> ReLU(b), discarded below
    out = pl.pallas_call(
        _matmul_bias_relu_kernel,
        out_shape=jax.ShapeDtypeStruct((Mp, N), jnp.float32),
        grid=(Mp // tm,),
        in_specs=[
            pl.BlockSpec((tm, K), lambda i: (i, 0)),
            pl.BlockSpec((K, N), lambda i: (0, 0)),
            pl.BlockSpec((1, N), lambda i: (0, 0)),
        ],
        out_specs=pl.BlockSpec((tm, N), lambda i: (i, 0)),
        compiler_params=pltpu.CompilerParams(
            dimension_semantics=("parallel",),
            vmem_limit_bytes=_VMEM_LIMIT),
    )(x, w, b.reshape(1, N))
    # TODO(synk): block-Toeplitz weight packing to widen N (64/32 -> 256/128)
    # toward the 256-wide MXU, and optional bf16 inputs with f32 accumulation.
    return out[:M] if Mp != M else out


def _duel_head_kernel(x_ref, w1_ref, b1_ref, w2_ref, b2_ref, o_ref):
    # Fused first layer: [hv || ha] = ReLU(feat @ [wv1 || wa1] + [bv1 || ba1]).
    # N = 128 -> lane-dense, single MXU pass over K = 2048.
    h = jnp.maximum(
        jnp.dot(x_ref[...], w1_ref[...], preferred_element_type=jnp.float32)
        + b1_ref[...], 0.0)
    # Block-diagonal second layer [wv2, 0; 0, wa2]:
    #   column 0      -> state value
    #   columns 1..A  -> advantages
    out2 = jnp.dot(h, w2_ref[...], preferred_element_type=jnp.float32) + b2_ref[...]
    v = out2[:, :1]                                   # (B, 1) state value
    B, no = out2.shape
    n_adv = B * (no - 1)
    # PyTorch `advantage.mean()`: mean over ALL (batch x action) elements.
    a_mean = (jnp.sum(out2) - jnp.sum(v)) * (1.0 / n_adv)
    # Columns 1..A become v + (a - mean(a)); column 0 is garbage and is
    # sliced off by the caller (keeps in-kernel ops to lane-offset-0 slices).
    o_ref[...] = out2 + v - a_mean


def duel_head(x, wcat, bcat, wblk, bblk):
    B, F = x.shape
    H = wcat.shape[1]
    NO = wblk.shape[1]
    return pl.pallas_call(
        _duel_head_kernel,
        out_shape=jax.ShapeDtypeStruct((B, NO), jnp.float32),
        grid=(1,),
        in_specs=[
            pl.BlockSpec((B, F), lambda i: (0, 0)),
            pl.BlockSpec((F, H), lambda i: (0, 0)),
            pl.BlockSpec((1, H), lambda i: (0, 0)),
            pl.BlockSpec((H, NO), lambda i: (0, 0)),
            pl.BlockSpec((1, NO), lambda i: (0, 0)),
        ],
        out_specs=pl.BlockSpec((B, NO), lambda i: (0, 0)),
        compiler_params=pltpu.CompilerParams(
            dimension_semantics=("arbitrary",),
            vmem_limit_bytes=_VMEM_LIMIT),
    )(x, wcat, bcat.reshape(1, H), wblk, bblk.reshape(1, NO))


# ---------------------------------------------------------------------------
# Glue: im2col patch extraction (data movement only, no FLOPs)
# ---------------------------------------------------------------------------
def im2col_nhwc(x, kh, kw, stride):
    B, H, W, C = x.shape
    Ho = (H - kh) // stride + 1
    Wo = (W - kw) // stride + 1
    cols = []
    for i in range(kh):
        for j in range(kw):
            patch = lax.slice(
                x, (0, i, j, 0),
                (B, i + stride * (Ho - 1) + 1, j + stride * (Wo - 1) + 1, C),
                (1, stride, stride, 1))
            cols.append(patch)                      # (B, Ho, Wo, C)
    patches = jnp.stack(cols, axis=3)               # (B, Ho, Wo, kh*kw, C)
    return patches.reshape(B, Ho, Wo, kh * kw * C), Ho, Wo


# ---------------------------------------------------------------------------
# Parameter preparation: fold layout work into weights once (init-time)
# ---------------------------------------------------------------------------
def prepare_params(p):
    """Produces kernel-ready parameters:
      * conv kernels flattened to matmul form,
      * value/advantage first layers concatenated (lane-dense N = 128),
      * first-layer rows permuted so the head consumes NHWC-flattened features
        (removes the runtime NCHW transpose on the critical path),
      * block-diagonal second-layer weight [wv2, 0; 0, wa2] + fused biases.
    """
    H2, W2, C2 = 8, 8, 32
    h_i = jnp.arange(H2).reshape(H2, 1, 1)
    w_i = jnp.arange(W2).reshape(1, W2, 1)
    c_i = jnp.arange(C2).reshape(1, 1, C2)
    # perm[NHWC flat index] = NCHW flat index (PyTorch x.view(B,-1) order)
    perm = (c_i * (H2 * W2) + h_i * W2 + w_i).reshape(-1)

    wcat = jnp.concatenate([p['wv1'], p['wa1']], axis=1)[perm, :]   # (2048, 128)
    bcat = jnp.concatenate([p['bv1'], p['ba1']])                    # (128,)

    A = p['wa2'].shape[1]
    H = p['wv2'].shape[0]                                           # 64
    wblk = jnp.zeros((2 * H, 1 + A), jnp.float32)
    wblk = wblk.at[:H, 0].set(p['wv2'][:, 0])
    wblk = wblk.at[H:, 1:].set(p['wa2'])
    bblk = jnp.concatenate([p['bv2'], p['ba2']])                    # (1+A,)

    return {
        'w1m': p['w1'].reshape(8 * 8 * 4, 64), 'b1': p['b1'],
        'w2m': p['w2'].reshape(5 * 5 * 64, 32), 'b2': p['b2'],
        'wcat': wcat, 'bcat': bcat, 'wblk': wblk, 'bblk': bblk,
    }


# ---------------------------------------------------------------------------
# Forward pass (DuelCNN.forward equivalent); expects prepare_params() output
# ---------------------------------------------------------------------------
def duel_cnn_forward(x_nchw, fp):
    B = x_nchw.shape[0]
    x = jnp.transpose(x_nchw, (0, 2, 3, 1))                       # NCHW -> NHWC

    # conv1: Conv2d(4, 64, kernel=8, stride=4) + ReLU
    # TODO(synk): gather conv windows in-kernel (manual DMA / index_map window
    # walk) instead of materializing im2col patches in HBM; and fuse conv2 +
    # head into one pallas_call once Mosaic reshape of the (64,32) tile to
    # (1,2048) is safe -- kept as separate calls here for robust lowering.
    patches1, H1, W1 = im2col_nhwc(x, 8, 8, 4)                    # (B,19,19,256)
    y = matmul_bias_relu(patches1.reshape(B * H1 * W1, -1), fp['w1m'], fp['b1'])
    y = y.reshape(B, H1, W1, 64)

    # conv2: Conv2d(64, 32, kernel=5, stride=2) + ReLU
    patches2, H2, W2 = im2col_nhwc(y, 5, 5, 2)                    # (B,8,8,1600)
    z = matmul_bias_relu(patches2.reshape(B * H2 * W2, -1), fp['w2m'], fp['b2'])

    # NHWC flatten is a free (contiguous) reshape; PyTorch's NCHW x.view(B,-1)
    # order was folded into the head weights via the row permutation above.
    feat = z.reshape(B, H2 * W2 * 32)                             # (B, 2048)

    head = duel_head(feat, fp['wcat'], fp['bcat'], fp['wblk'], fp['bblk'])
    return head[:, 1:]                                            # drop value column


# ---------------------------------------------------------------------------
# Deterministic synthetic parameters (shapes from DuelCNN.__init__)
# ---------------------------------------------------------------------------
def init_params(key, action_dim):
    ks = jax.random.split(key, 12)
    s = 0.02
    n = lambda k, shape: s * jax.random.normal(k, shape, jnp.float32)
    return {
        'w1': n(ks[0], (8, 8, 4, 64)),      # (KH, KW, Cin, Cout)
        'b1': n(ks[1], (64,)),
        'w2': n(ks[2], (5, 5, 64, 32)),
        'b2': n(ks[3], (32,)),
        'wv1': n(ks[4], (2048, 64)), 'bv1': n(ks[5], (64,)),
        'wv2': n(ks[6], (64, 1)),    'bv2': n(ks[7], (1,)),
        'wa1': n(ks[8], (2048, 64)), 'ba1': n(ks[9], (64,)),
        'wa2': n(ks[10], (64, action_dim)), 'ba2': n(ks[11], (action_dim,)),
    }


# ---------------------------------------------------------------------------
# Pure-JAX reference (for correctness check) — uses the ORIGINAL params
# ---------------------------------------------------------------------------
def reference_forward(x_nchw, p):
    hp = lax.Precision.HIGHEST
    w1 = jnp.transpose(p['w1'], (3, 2, 0, 1))   # -> OIHW
    w2 = jnp.transpose(p['w2'], (3, 2, 0, 1))
    y = lax.conv_general_dilated(x_nchw, w1, (4, 4), 'VALID',
                                 dimension_numbers=('NCHW', 'OIHW', 'NCHW'),
                                 precision=hp)
    y = jax.nn.relu(y + p['b1'][None, :, None, None])
    z = lax.conv_general_dilated(y, w2, (2, 2), 'VALID',
                                 dimension_numbers=('NCHW', 'OIHW', 'NCHW'),
                                 precision=hp)
    z = jax.nn.relu(z + p['b2'][None, :, None, None])
    feat = z.reshape(z.shape[0], -1)
    hv = jax.nn.relu(jnp.matmul(feat, p['wv1'], precision=hp) + p['bv1'])
    v = jnp.matmul(hv, p['wv2'], precision=hp) + p['bv2']
    ha = jax.nn.relu(jnp.matmul(feat, p['wa1'], precision=hp) + p['ba1'])
    a = jnp.matmul(ha, p['wa2'], precision=hp) + p['ba2']
    return v + (a - a.mean())


if __name__ == "__main__":
    key = jax.random.PRNGKey(0)
    k_x, k_p = jax.random.split(key)
    B, ACTION_DIM = 2, 6
    # 80x80 spatial size is required by the Linear(2048, ...) layers.
    x = jax.random.normal(k_x, (B, 4, 80, 80), jnp.float32)
    params = init_params(k_p, ACTION_DIM)
    fparams = prepare_params(params)          # layout folded into weights once

    out = jax.jit(duel_cnn_forward)(x, fparams)
    out = jax.block_until_ready(out)

    ref = reference_forward(x, params)
    assert out.shape == (B, ACTION_DIM)
    max_diff = float(jnp.max(jnp.abs(out - ref)))
    assert max_diff < 1e-3, f"mismatch vs reference: {max_diff}"
    print("KERNEL_OK")
</pallas_src>

<mosaic_0001>
module attributes {stable_mosaic.version = 11 : i64} {
  func.func @_matmul_bias_relu_kernel(%arg0: i32, %arg1: memref<256x256xf32, #tpu.memory_space<vmem>>, %arg2: memref<256x64xf32, #tpu.memory_space<vmem>>, %arg3: memref<1x64xf32, #tpu.memory_space<vmem>>, %arg4: memref<256x64xf32, #tpu.memory_space<vmem>>) attributes {dimension_semantics = [#tpu.dimension_semantics<parallel>], iteration_bounds = array<i64: 3>, scalar_prefetch = 0 : i64, scratch_operands = 0 : i64, tpu.core_type = #tpu.core_type<tc>, window_params = [{transform_indices = @transform_0, window_bounds = array<i64: 256, 256>}, {pipeline_mode = #tpu.pipeline_mode<synchronous>, transform_indices = @transform_1, window_bounds = array<i64: 256, 64>}, {pipeline_mode = #tpu.pipeline_mode<synchronous>, transform_indices = @transform_2, window_bounds = array<i64: 1, 64>}, {transform_indices = @transform_3, window_bounds = array<i64: 256, 64>}]} {
    %c0 = arith.constant 0 : index
    %c0_0 = arith.constant 0 : index
    %0 = vector.load %arg1[%c0, %c0_0] : memref<256x256xf32, #tpu.memory_space<vmem>>, vector<256x256xf32>
    %c0_1 = arith.constant 0 : index
    %c0_2 = arith.constant 0 : index
    %1 = vector.load %arg2[%c0_1, %c0_2] : memref<256x64xf32, #tpu.memory_space<vmem>>, vector<256x64xf32>
    %cst = arith.constant dense<0.000000e+00> : vector<256x64xf32>
    %2 = tpu.matmul %0, %1, %cst {dimension_numbers = #tpu.dot_dimension_numbers<[1], [0], [0], [1], [0, 0, 1, 1], [], []>} : vector<256x256xf32>, vector<256x64xf32>, vector<256x64xf32> -> vector<256x64xf32>
    %c0_3 = arith.constant 0 : index
    %c0_4 = arith.constant 0 : index
    %3 = vector.load %arg3[%c0_3, %c0_4] : memref<1x64xf32, #tpu.memory_space<vmem>>, vector<1x64xf32>
    %4 = vector.broadcast %3 : vector<1x64xf32> to vector<256x64xf32>
    %5 = arith.addf %2, %4 : vector<256x64xf32>
    %cst_5 = arith.constant 0.000000e+00 : f32
    %6 = vector.broadcast %cst_5 : f32 to vector<256x64xf32>
    %7 = arith.maximumf %5, %6 : vector<256x64xf32>
    %c0_6 = arith.constant 0 : index
    %c0_7 = arith.constant 0 : index
    %8 = vector.load %arg4[%c0_6, %c0_7] : memref<256x64xf32, #tpu.memory_space<vmem>>, vector<256x64xf32>
    tpu.vector_store %arg4[%c0_6, %c0_7], %7 {strides = array<i32>} : memref<256x64xf32, #tpu.memory_space<vmem>>, vector<256x64xf32>,
    return
  }
  func.func @transform_0(%arg0: i32) -> (i32, i32) {
    %c0_i32 = arith.constant 0 : i32
    %c0_i32_0 = arith.constant 0 : i32
    return %arg0, %c0_i32 : i32, i32
  }
  func.func @transform_1(%arg0: i32) -> (i32, i32) {
    %c0_i32 = arith.constant 0 : i32
    %c0_i32_0 = arith.constant 0 : i32
    %c0_i32_1 = arith.constant 0 : i32
    return %c0_i32, %c0_i32_0 : i32, i32
  }
  func.func @transform_2(%arg0: i32) -> (i32, i32) {
    %c0_i32 = arith.constant 0 : i32
    %c0_i32_0 = arith.constant 0 : i32
    %c0_i32_1 = arith.constant 0 : i32
    return %c0_i32, %c0_i32_0 : i32, i32
  }
  func.func @transform_3(%arg0: i32) -> (i32, i32) {
    %c0_i32 = arith.constant 0 : i32
    %c0_i32_0 = arith.constant 0 : i32
    return %arg0, %c0_i32 : i32, i32
  }
}

module attributes {stable_mosaic.version = 11 : i64} {
  func.func @_matmul_bias_relu_kernel(%arg0: i32, %arg1: memref<128x1600xf32, #tpu.memory_space<vmem>>, %arg2: memref<1600x32xf32, #tpu.memory_space<vmem>>, %arg3: memref<1x32xf32, #tpu.memory_space<vmem>>, %arg4: memref<128x32xf32, #tpu.memory_space<vmem>>) attributes {dimension_semantics = [#tpu.dimension_semantics<parallel>], iteration_bounds = array<i64: 1>, scalar_prefetch = 0 : i64, scratch_operands = 0 : i64, tpu.core_type = #tpu.core_type<tc>, window_params = [{transform_indices = @transform_0, window_bounds = array<i64: 128, 1600>}, {pipeline_mode = #tpu.pipeline_mode<synchronous>, transform_indices = @transform_1, window_bounds = array<i64: 1600, 32>}, {pipeline_mode = #tpu.pipeline_mode<synchronous>, transform_indices = @transform_2, window_bounds = array<i64: 1, 32>}, {transform_indices = @transform_3, window_bounds = array<i64: 128, 32>}]} {
    %c0 = arith.constant 0 : index
    %c0_0 = arith.constant 0 : index
    %0 = vector.load %arg1[%c0, %c0_0] : memref<128x1600xf32, #tpu.memory_space<vmem>>, vector<128x1600xf32>
    %c0_1 = arith.constant 0 : index
    %c0_2 = arith.constant 0 : index
    %1 = vector.load %arg2[%c0_1, %c0_2] : memref<1600x32xf32, #tpu.memory_space<vmem>>, vector<1600x32xf32>
    %cst = arith.constant dense<0.000000e+00> : vector<128x32xf32>
    %2 = tpu.matmul %0, %1, %cst {dimension_numbers = #tpu.dot_dimension_numbers<[1], [0], [0], [1], [0, 0, 1, 1], [], []>} : vector<128x1600xf32>, vector<1600x32xf32>, vector<128x32xf32> -> vector<128x32xf32>
    %c0_3 = arith.constant 0 : index
    %c0_4 = arith.constant 0 : index
    %3 = vector.load %arg3[%c0_3, %c0_4] : memref<1x32xf32, #tpu.memory_space<vmem>>, vector<1x32xf32>
    %4 = vector.broadcast %3 : vector<1x32xf32> to vector<128x32xf32>
    %5 = arith.addf %2, %4 : vector<128x32xf32>
    %cst_5 = arith.constant 0.000000e+00 : f32
    %6 = vector.broadcast %cst_5 : f32 to vector<128x32xf32>
    %7 = arith.maximumf %5, %6 : vector<128x32xf32>
    %c0_6 = arith.constant 0 : index
    %c0_7 = arith.constant 0 : index
    %8 = vector.load %arg4[%c0_6, %c0_7] : memref<128x32xf32, #tpu.memory_space<vmem>>, vector<128x32xf32>
    tpu.vector_store %arg4[%c0_6, %c0_7], %7 {strides = array<i32>} : memref<128x32xf32, #tpu.memory_space<vmem>>, vector<128x32xf32>,
    return
  }
  func.func @transform_0(%arg0: i32) -> (i32, i32) {
    %c0_i32 = arith.constant 0 : i32
    %c0_i32_0 = arith.constant 0 : i32
    return %arg0, %c0_i32 : i32, i32
  }
  func.func @transform_1(%arg0: i32) -> (i32, i32) {
    %c0_i32 = arith.constant 0 : i32
    %c0_i32_0 = arith.constant 0 : i32
    %c0_i32_1 = arith.constant 0 : i32
    return %c0_i32, %c0_i32_0 : i32, i32
  }
  func.func @transform_2(%arg0: i32) -> (i32, i32) {
    %c0_i32 = arith.constant 0 : i32
    %c0_i32_0 = arith.constant 0 : i32
    %c0_i32_1 = arith.constant 0 : i32
    return %c0_i32, %c0_i32_0 : i32, i32
  }
  func.func @transform_3(%arg0: i32) -> (i32, i32) {
    %c0_i32 = arith.constant 0 : i32
    %c0_i32_0 = arith.constant 0 : i32
    return %arg0, %c0_i32 : i32, i32
  }
}

module attributes {stable_mosaic.version = 11 : i64} {
  func.func @_duel_head_kernel(%arg0: i32, %arg1: memref<2x2048xf32, #tpu.memory_space<vmem>>, %arg2: memref<2048x128xf32, #tpu.memory_space<vmem>>, %arg3: memref<1x128xf32, #tpu.memory_space<vmem>>, %arg4: memref<128x7xf32, #tpu.memory_space<vmem>>, %arg5: memref<1x7xf32, #tpu.memory_space<vmem>>, %arg6: memref<2x7xf32, #tpu.memory_space<vmem>>) attributes {dimension_semantics = [#tpu.dimension_semantics<arbitrary>], iteration_bounds = array<i64: 1>, scalar_prefetch = 0 : i64, scratch_operands = 0 : i64, tpu.core_type = #tpu.core_type<tc>, window_params = [{pipeline_mode = #tpu.pipeline_mode<synchronous>, transform_indices = @transform_0, window_bounds = array<i64: 2, 2048>}, {pipeline_mode = #tpu.pipeline_mode<synchronous>, transform_indices = @transform_1, window_bounds = array<i64: 2048, 128>}, {pipeline_mode = #tpu.pipeline_mode<synchronous>, transform_indices = @transform_2, window_bounds = array<i64: 1, 128>}, {pipeline_mode = #tpu.pipeline_mode<synchronous>, transform_indices = @transform_3, window_bounds = array<i64: 128, 7>}, {pipeline_mode = #tpu.pipeline_mode<synchronous>, transform_indices = @transform_4, window_bounds = array<i64: 1, 7>}, {pipeline_mode = #tpu.pipeline_mode<synchronous>, transform_indices = @transform_5, window_bounds = array<i64: 2, 7>}]} {
    %c0 = arith.constant 0 : index
    %c0_0 = arith.constant 0 : index
    %0 = vector.load %arg1[%c0, %c0_0] : memref<2x2048xf32, #tpu.memory_space<vmem>>, vector<2x2048xf32>
    %c0_1 = arith.constant 0 : index
    %c0_2 = arith.constant 0 : index
    %1 = vector.load %arg2[%c0_1, %c0_2] : memref<2048x128xf32, #tpu.memory_space<vmem>>, vector<2048x128xf32>
    %cst = arith.constant dense<0.000000e+00> : vector<2x128xf32>
    %2 = tpu.matmul %0, %1, %cst {dimension_numbers = #tpu.dot_dimension_numbers<[1], [0], [0], [1], [0, 0, 1, 1], [], []>} : vector<2x2048xf32>, vector<2048x128xf32>, vector<2x128xf32> -> vector<2x128xf32>
    %c0_3 = arith.constant 0 : index
    %c0_4 = arith.constant 0 : index
    %3 = vector.load %arg3[%c0_3, %c0_4] : memref<1x128xf32, #tpu.memory_space<vmem>>, vector<1x128xf32>
    %4 = vector.broadcast %3 : vector<1x128xf32> to vector<2x128xf32>
    %5 = arith.addf %2, %4 : vector<2x128xf32>
    %cst_5 = arith.constant 0.000000e+00 : f32
    %6 = vector.broadcast %cst_5 : f32 to vector<2x128xf32>
    %7 = arith.maximumf %5, %6 : vector<2x128xf32>
    %c0_6 = arith.constant 0 : index
    %c0_7 = arith.constant 0 : index
    %8 = vector.load %arg4[%c0_6, %c0_7] : memref<128x7xf32, #tpu.memory_space<vmem>>, vector<128x7xf32>
    %cst_8 = arith.constant dense<0.000000e+00> : vector<2x7xf32>
    %9 = tpu.matmul %7, %8, %cst_8 {dimension_numbers = #tpu.dot_dimension_numbers<[1], [0], [0], [1], [0, 0, 1, 1], [], []>} : vector<2x128xf32>, vector<128x7xf32>, vector<2x7xf32> -> vector<2x7xf32>
    %c0_9 = arith.constant 0 : index
    %c0_10 = arith.constant 0 : index
    %10 = vector.load %arg5[%c0_9, %c0_10] : memref<1x7xf32, #tpu.memory_space<vmem>>, vector<1x7xf32>
    %11 = vector.broadcast %10 : vector<1x7xf32> to vector<2x7xf32>
    %12 = arith.addf %9, %11 : vector<2x7xf32>
    %13 = vector.extract_strided_slice %12 {offsets = [0, 0], sizes = [2, 1], strides = [1, 1]} : vector<2x7xf32> to vector<2x1xf32>
    %14 = vector.shape_cast %12 : vector<2x7xf32> to vector<1x2x7xf32>
    %cst_11 = arith.constant dense<0.000000e+00> : vector<1xf32>
    %15 = vector.multi_reduction <add>, %14, %cst_11 [1, 2] : vector<1x2x7xf32> to vector<1xf32>
    %16 = vector.shape_cast %15 : vector<1xf32> to vector<1x1x1xf32>
    %17 = vector.extract %16[0, 0, 0] : f32 from vector<1x1x1xf32>
    %18 = vector.shape_cast %13 : vector<2x1xf32> to vector<1x2x1xf32>
    %cst_12 = arith.constant dense<0.000000e+00> : vector<1xf32>
    %19 = vector.multi_reduction <add>, %18, %cst_12 [1, 2] : vector<1x2x1xf32> to vector<1xf32>
    %20 = vector.shape_cast %19 : vector<1xf32> to vector<1x1x1xf32>
    %21 = vector.extract %20[0, 0, 0] : f32 from vector<1x1x1xf32>
    %22 = arith.subf %17, %21 : f32
    %cst_13 = arith.constant 0.0833333358 : f32
    %23 = arith.mulf %22, %cst_13 : f32
    %24 = vector.broadcast %13 : vector<2x1xf32> to vector<2x7xf32>
    %25 = arith.addf %12, %24 : vector<2x7xf32>
    %26 = vector.broadcast %23 : f32 to vector<2x7xf32>
    %27 = arith.subf %25, %26 : vector<2x7xf32>
    %c0_14 = arith.constant 0 : index
    %c0_15 = arith.constant 0 : index
    %28 = vector.load %arg6[%c0_14, %c0_15] : memref<2x7xf32, #tpu.memory_space<vmem>>, vector<2x7xf32>
    tpu.vector_store %arg6[%c0_14, %c0_15], %27 {strides = array<i32>} : memref<2x7xf32, #tpu.memory_space<vmem>>, vector<2x7xf32>,
    return
  }
  func.func @transform_0(%arg0: i32) -> (i32, i32) {
    %c0_i32 = arith.constant 0 : i32
    %c0_i32_0 = arith.constant 0 : i32
    %c0_i32_1 = arith.constant 0 : i32
    return %c0_i32, %c0_i32_0 : i32, i32
  }
  func.func @transform_1(%arg0: i32) -> (i32, i32) {
    %c0_i32 = arith.constant 0 : i32
    %c0_i32_0 = arith.constant 0 : i32
    %c0_i32_1 = arith.constant 0 : i32
    return %c0_i32, %c0_i32_0 : i32, i32
  }
  func.func @transform_2(%arg0: i32) -> (i32, i32) {
    %c0_i32 = arith.constant 0 : i32
    %c0_i32_0 = arith.constant 0 : i32
    %c0_i32_1 = arith.constant 0 : i32
    return %c0_i32, %c0_i32_0 : i32, i32
  }
  func.func @transform_3(%arg0: i32) -> (i32, i32) {
    %c0_i32 = arith.constant 0 : i32
    %c0_i32_0 = arith.constant 0 : i32
    %c0_i32_1 = arith.constant 0 : i32
    return %c0_i32, %c0_i32_0 : i32, i32
  }
  func.func @transform_4(%arg0: i32) -> (i32, i32) {
    %c0_i32 = arith.constant 0 : i32
    %c0_i32_0 = arith.constant 0 : i32
    %c0_i32_1 = arith.constant 0 : i32
    return %c0_i32, %c0_i32_0 : i32, i32
  }
  func.func @transform_5(%arg0: i32) -> (i32, i32) {
    %c0_i32 = arith.constant 0 : i32
    %c0_i32_0 = arith.constant 0 : i32
    %c0_i32_1 = arith.constant 0 : i32
    return %c0_i32, %c0_i32_0 : i32, i32
  }
}

</mosaic_0001>

<llo_original>
// kernel: duel_cnn_forward.3
$region0: #{duel_cnn_forward.3}
  #allocation0 [shape = 'u32[]', space=smem, size = 0x4, offset = 0x4, fixed_abs, tag = 'smem constant byte address 0x4 - core index']
  #allocation1 [shape = 'u32[144,128]{1,0:T(1,128)}', space=vmem, size = 0x12000, scoped, tag = 'internal scratch']
  %s0 = inlined_call_operand.vmem [shape: f32[768,256], index: 0, kind: input, shape index: {}]
  %s1 = inlined_call_operand.vmem [shape: f32[256,64], index: 1, kind: input, shape index: {}]
  %s2 = inlined_call_operand.vmem [shape: f32[1,64], index: 2, kind: input, shape index: {}]
  %s3 = inlined_call_operand.vmem [shape: f32[768,64], index: 3, kind: output, shape index: {}]
  %s4 = sld [smem:[#allocation0]]
  $region45: #{duel_cnn_forward.3} parent=0
    _
  %s6 = ssub.s32 1, %s4
  %s7 = scalar_select 0, %s6, %s4
  loop: start=0, step=1, limit=5
  $region2: #{duel_cnn_forward.3} parent=0 // loop_pre_header
    _
  $region3: #{duel_cnn_forward.3} parent=0 // loop_header
    %s9 = sphi 0, %s13
    %p10 = scmp.ge.s32.totalorder %s9, 5
    %s19 = sphi 0, %s21
    %s22 = sphi 0, %s19
    %s23 = sphi 0, %s22
    %s39 = sphi 0, %s23
    %s43 = sphi 0, %s43
    %s45 = sphi 0, %s43
    %s46 = sphi 0, %s45
    %s60 = sphi 0, %s46
    %s64 = sphi 0, %s64
    %s66 = sphi 0, %s64
    %s67 = sphi 0, %s66
    %s81 = sphi 0, %s67
    %s87 = sphi 0, %s89
    %s90 = sphi 0, %s87
    %s91 = sphi 0, %s90
    %s107 = sphi 0, %s91
  $region4: #{duel_cnn_forward.3} parent=0 // loop_header_branch
    %12 = sbr.rel (%p10) target = $region8
  $region5: #{duel_cnn_forward.3} parent=0 // loop_body
    %s14 = ssub.s32 %s9, 1
    %s15 = ssub.s32 %s9, 2
    %s16 = sadd.s32 %s9, 1
    %s17 = ssub.s32 %s9, %s16
    %p18 = scmp.eq.s32.totalorder %s17, 0
    %s20 = sadd.s32 %s19, 1
    %s21 = scalar_select %p18, %s19, %s20
    %p24 = pneg %p18
    %p25 = scmp.eq.s32.totalorder %s9, 2
    %p26 = por %p24, %p25
    %p27 = scmp.ne.s32.totalorder %s19, %s22
    %p28 = scmp.eq.s32.totalorder %s9, 0
    %p29 = por %p27, %p28
    %p30 = scmp.ne.s32.totalorder %s19, %s22
    %p31 = scmp.eq.s32.totalorder %s14, 2
    %p32 = por %p30, %p31
    %p33 = scmp.ne.s32.totalorder %s22, %s23
    %p34 = scmp.eq.s32.totalorder %s14, 0
    %p35 = por %p33, %p34
    %p36 = scmp.ne.s32.totalorder %s22, %s23
    %p37 = scmp.eq.s32.totalorder %s15, 2
    %p38 = por %p36, %p37
    %p40 = scmp.ne.s32.totalorder %s23, %s39
    %p41 = scmp.eq.s32.totalorder %s15, 0
    %p42 = por %p40, %p41
    %s44 = sadd.s32 %s43, 1
    %p47 = scmp.eq.s32.totalorder %s9, 2
    %p48 = scmp.ne.s32.totalorder %s43, %s45
    %p49 = scmp.eq.s32.totalorder %s9, 0
    %p50 = por %p48, %p49
    %p51 = scmp.ne.s32.totalorder %s43, %s45
    %p52 = scmp.eq.s32.totalorder %s14, 2
    %p53 = por %p51, %p52
    %p54 = scmp.ne.s32.totalorder %s45, %s46
    %p55 = scmp.eq.s32.totalorder %s14, 0
    %p56 = por %p54, %p55
    %p57 = scmp.ne.s32.totalorder %s45, %s46
    %p58 = scmp.eq.s32.totalorder %s15, 2
    %p59 = por %p57, %p58
    %p61 = scmp.ne.s32.totalorder %s46, %s60
    %p62 = scmp.eq.s32.totalorder %s15, 0
    %p63 = por %p61, %p62
    %s65 = sadd.s32 %s64, 1
    %p68 = scmp.eq.s32.totalorder %s9, 2
    %p69 = scmp.ne.s32.totalorder %s64, %s66
    %p70 = scmp.eq.s32.totalorder %s9, 0
    %p71 = por %p69, %p70
    %p72 = scmp.ne.s32.totalorder %s64, %s66
    %p73 = scmp.eq.s32.totalorder %s14, 2
    %p74 = por %p72, %p73
    %p75 = scmp.ne.s32.totalorder %s66, %s67
    %p76 = scmp.eq.s32.totalorder %s14, 0
    %p77 = por %p75, %p76
    %p78 = scmp.ne.s32.totalorder %s66, %s67
    %p79 = scmp.eq.s32.totalorder %s15, 2
    %p80 = por %p78, %p79
    %p82 = scmp.ne.s32.totalorder %s67, %s81
    %p83 = scmp.eq.s32.totalorder %s15, 0
    %p84 = por %p82, %p83
    %s85 = ssub.s32 %s9, %s16
    %p86 = scmp.eq.s32.totalorder %s85, 0
    %s88 = sadd.s32 %s87, 1
    %s89 = scalar_select %p86, %s87, %s88
    %p92 = pneg %p86
    %p93 = scmp.eq.s32.totalorder %s9, 2
    %p94 = por %p92, %p93
    %p95 = scmp.ne.s32.totalorder %s87, %s90
    %p96 = scmp.eq.s32.totalorder %s9, 0
    %p97 = por %p95, %p96
    %p98 = scmp.ne.s32.totalorder %s87, %s90
    %p99 = scmp.eq.s32.totalorder %s14, 2
    %p100 = por %p98, %p99
    %p101 = scmp.ne.s32.totalorder %s90, %s91
    %p102 = scmp.eq.s32.totalorder %s14, 0
    %p103 = por %p101, %p102
    %p104 = scmp.ne.s32.totalorder %s90, %s91
    %p105 = scmp.eq.s32.totalorder %s15, 2
    %p106 = por %p104, %p105
    %p108 = scmp.ne.s32.totalorder %s91, %s107
    %p109 = scmp.eq.s32.totalorder %s15, 0
    %p110 = por %p108, %p109
    %p111 = scmp.le.s32.totalorder 1, %s9
    %p112 = scmp.lt.s32.totalorder %s9, 4
    %p113 = pnand %p111, %p112
    %p114 = pneg %p113
    // Predicated region
    $region9: #{duel_cnn_forward.3} parent=5 // pred_check
      _
    $region10: #{duel_cnn_forward.3} parent=5 // pred_check_branch
      %116 = sbr.rel (%p113) target = $region12
    $region11: #{duel_cnn_forward.3} parent=5 // pred_region
      %s117 = ssub.s32 %s9, 1
      // Predicated region
      $region13: #{duel_cnn_forward.3} parent=11 // pred_check
        %p118 = pneg %p56
      $region14: #{duel_cnn_forward.3} parent=11 // pred_check_branch
        %120 = sbr.rel (%p118) target = $region16
      $region15: #{duel_cnn_forward.3} parent=11 // pred_region
        _
      $region16: #{duel_cnn_forward.3} parent=11 // pred_fallthru
        _
      // Predicated region
      $region17: #{duel_cnn_forward.3} parent=11 // pred_check
        %p121 = pneg %p77
      $region18: #{duel_cnn_forward.3} parent=11 // pred_check_branch
        %123 = sbr.rel (%p121) target = $region20
      $region19: #{duel_cnn_forward.3} parent=11 // pred_region
        _
      $region20: #{duel_cnn_forward.3} parent=11 // pred_fallthru
        _
    $region12: #{duel_cnn_forward.3} parent=5 // pred_fallthru
      _
    %p124 = scmp.lt.s32.totalorder %s9, 3
    // Predicated region
    $region21: #{duel_cnn_forward.3} parent=5 // pred_check
      %p125 = pneg %p124
    $region22: #{duel_cnn_forward.3} parent=5 // pred_check_branch
      %127 = sbr.rel (%p125) target = $region24
    $region23: #{duel_cnn_forward.3} parent=5 // pred_region
      // Predicated region
      $region25: #{duel_cnn_forward.3} parent=23 // pred_check
        %p128 = pneg %p29
      $region26: #{duel_cnn_forward.3} parent=23 // pred_check_branch
        %130 = sbr.rel (%p128) target = $region28
      $region27: #{duel_cnn_forward.3} parent=23 // pred_region
        %s131 = smul.u32 32, %s9
        %p132 = scmp.lt.s32.totalorder %s131, 95
        %s133 = scalar_select %p132, %s131, 95
        %s134 = smul.addr %s133, 2
        %s135 = smul.addr %s134, 8
        %s136 = scalar_lea.vmem %s0, %s135
        %s137 = smul.u32 32, %s9
      $region28: #{duel_cnn_forward.3} parent=23 // pred_fallthru
        _
    $region24: #{duel_cnn_forward.3} parent=5 // pred_fallthru
      _
    %p138 = scmp.le.s32.totalorder 1, %s9
    %p139 = scmp.lt.s32.totalorder %s9, 4
    %p140 = pnand %p138, %p139
    %p141 = pneg %p140
    // Predicated region
    $region29: #{duel_cnn_forward.3} parent=5 // pred_check
      _
    $region30: #{duel_cnn_forward.3} parent=5 // pred_check_branch
      %143 = sbr.rel (%p140) target = $region32
    $region31: #{duel_cnn_forward.3} parent=5 // pred_region
      %s144 = ssub.s32 %s9, 1
      %s145 = smul.u32 32, %s14
      %p146 = scmp.lt.s32.totalorder %s145, 95
      %s147 = scalar_select %p146, %s145, 95
      %s148 = smul.addr %s147, 2
      %s149 = smul.addr %s148, 8
      %s150 = scalar_lea.vmem %s0, %s149
      %p151 = pneg %p35
      %p152 = pneg %p32
      %p153 = pneg %p56
      %p154 = pneg %p53
      %p155 = pneg %p77
      %p156 = pneg %p74
      %p157 = pneg %p103
      %p158 = pneg %p100
      %s159 = smul.u32 32, %s14
      %p160 = scmp.lt.s32.totalorder %s159, 95
      %s161 = scalar_select %p160, %s159, 95
      %s162 = smul.addr %s161, 8
      %s163 = scalar_lea.vmem %s3, %s162
      %s164 = smul.u32 32, %s14
      %p165 = scmp.lt.s32.totalorder %s164, 95
      %s166 = scalar_select %p165, %s164, 95
      %s167 = smul.addr %s166, 2
      %s168 = smul.addr %s167, 8
      %s169 = scalar_lea.vmem %s0, %s168
      %s170 = smul.u32 32, %s14
      %s171 = smul.u32 32, %s14
      %p172 = scmp.lt.s32.totalorder %s171, 95
      %s173 = scalar_select %p172, %s171, 95
      %s174 = smul.addr %s173, 8
      %s175 = scalar_lea.vmem %s3, %s174
      %s176 = smul.u32 32, %s14
      %v177 = vld [vmem:[%s169] sm:$0xff]
      %v178 = vld [vmem:[%s169 + $0x8] sm:$0xff]
      %v179 = vld [vmem:[%s169 + $0x10] sm:$0xff]
      %v180 = vld [vmem:[%s169 + $0x18] sm:$0xff]
      %v181 = vld [vmem:[%s169 + $0x20] sm:$0xff]
      %v182 = vld [vmem:[%s169 + $0x28] sm:$0xff]
      %v183 = vld [vmem:[%s169 + $0x30] sm:$0xff]
      %v184 = vld [vmem:[%s169 + $0x38] sm:$0xff]
      %v185 = vld [vmem:[%s169 + $0x40] sm:$0xff]
      %v186 = vld [vmem:[%s169 + $0x48] sm:$0xff]
      %v187 = vld [vmem:[%s169 + $0x50] sm:$0xff]
      %v188 = vld [vmem:[%s169 + $0x58] sm:$0xff]
      %v189 = vld [vmem:[%s169 + $0x60] sm:$0xff]
      %v190 = vld [vmem:[%s169 + $0x68] sm:$0xff]
      %v191 = vld [vmem:[%s169 + $0x70] sm:$0xff]
      %v192 = vld [vmem:[%s169 + $0x78] sm:$0xff]
      %v193 = vld [vmem:[%s169 + $0x80] sm:$0xff]
      %v194 = vld [vmem:[%s169 + $0x88] sm:$0xff]
      %v195 = vld [vmem:[%s169 + $0x90] sm:$0xff]
      %v196 = vld [vmem:[%s169 + $0x98] sm:$0xff]
      %v197 = vld [vmem:[%s169 + $0xa0] sm:$0xff]
      %v198 = vld [vmem:[%s169 + $0xa8] sm:$0xff]
      %v199 = vld [vmem:[%s169 + $0xb0] sm:$0xff]
      %v200 = vld [vmem:[%s169 + $0xb8] sm:$0xff]
      %v201 = vld [vmem:[%s169 + $0xc0] sm:$0xff]
      %v202 = vld [vmem:[%s169 + $0xc8] sm:$0xff]
      %v203 = vld [vmem:[%s169 + $0xd0] sm:$0xff]
      %v204 = vld [vmem:[%s169 + $0xd8] sm:$0xff]
      %v205 = vld [vmem:[%s169 + $0xe0] sm:$0xff]
      %v206 = vld [vmem:[%s169 + $0xe8] sm:$0xff]
      %v207 = vld [vmem:[%s169 + $0xf0] sm:$0xff]
      %v208 = vld [vmem:[%s169 + $0xf8] sm:$0xff]
      %v209 = vld [vmem:[%s169 + $0x100] sm:$0xff]
      %v210 = vld [vmem:[%s169 + $0x108] sm:$0xff]
      %v211 = vld [vmem:[%s169 + $0x110] sm:$0xff]
      %v212 = vld [vmem:[%s169 + $0x118] sm:$0xff]
      %v213 = vld [vmem:[%s169 + $0x120] sm:$0xff]
      %v214 = vld [vmem:[%s169 + $0x128] sm:$0xff]
      %v215 = vld [vmem:[%s169 + $0x130] sm:$0xff]
      %v216 = vld [vmem:[%s169 + $0x138] sm:$0xff]
      %v217 = vld [vmem:[%s169 + $0x140] sm:$0xff]
      %v218 = vld [vmem:[%s169 + $0x148] sm:$0xff]
      %v219 = vld [vmem:[%s169 + $0x150] sm:$0xff]
      %v220 = vld [vmem:[%s169 + $0x158] sm:$0xff]
      %v221 = vld [vmem:[%s169 + $0x160] sm:$0xff]
      %v222 = vld [vmem:[%s169 + $0x168] sm:$0xff]
      %v223 = vld [vmem:[%s169 + $0x170] sm:$0xff]
      %v224 = vld [vmem:[%s169 + $0x178] sm:$0xff]
      %v225 = vld [vmem:[%s169 + $0x180] sm:$0xff]
      %v226 = vld [vmem:[%s169 + $0x188] sm:$0xff]
      %v227 = vld [vmem:[%s169 + $0x190] sm:$0xff]
      %v228 = vld [vmem:[%s169 + $0x198] sm:$0xff]
      %v229 = vld [vmem:[%s169 + $0x1a0] sm:$0xff]
      %v230 = vld [vmem:[%s169 + $0x1a8] sm:$0xff]
      %v231 = vld [vmem:[%s169 + $0x1b0] sm:$0xff]
      %v232 = vld [vmem:[%s169 + $0x1b8] sm:$0xff]
      %v233 = vld [vmem:[%s169 + $0x1c0] sm:$0xff]
      %v234 = vld [vmem:[%s169 + $0x1c8] sm:$0xff]
      %v235 = vld [vmem:[%s169 + $0x1d0] sm:$0xff]
      %v236 = vld [vmem:[%s169 + $0x1d8] sm:$0xff]
      %v237 = vld [vmem:[%s169 + $0x1e0] sm:$0xff]
      %v238 = vld [vmem:[%s169 + $0x1e8] sm:$0xff]
      %v239 = vld [vmem:[%s169 + $0x1f0] sm:$0xff]
      %v240 = vld [vmem:[%s169 + $0x1f8] sm:$0xff]
      %v241 = vld [vmem:[%s1] sm:$0xff]
      %v242 = vld [vmem:[%s1 + $0x8] sm:$0xff]
      %v243 = vld [vmem:[%s1 + $0x10] sm:$0xff]
      %v244 = vld [vmem:[%s1 + $0x18] sm:$0xff]
      %v245 = vld [vmem:[%s1 + $0x20] sm:$0xff]
      %v246 = vld [vmem:[%s1 + $0x28] sm:$0xff]
      %v247 = vld [vmem:[%s1 + $0x30] sm:$0xff]
      %v248 = vld [vmem:[%s1 + $0x38] sm:$0xff]
      %v249 = vld [vmem:[%s1 + $0x40] sm:$0xff]
      %v250 = vld [vmem:[%s1 + $0x48] sm:$0xff]
      %v251 = vld [vmem:[%s1 + $0x50] sm:$0xff]
      %v252 = vld [vmem:[%s1 + $0x58] sm:$0xff]
      %v253 = vld [vmem:[%s1 + $0x60] sm:$0xff]
      %v254 = vld [vmem:[%s1 + $0x68] sm:$0xff]
      %v255 = vld [vmem:[%s1 + $0x70] sm:$0xff]
      %v256 = vld [vmem:[%s1 + $0x78] sm:$0xff]
      %v257 = vld [vmem:[%s1 + $0x80] sm:$0xff]
      %v258 = vld [vmem:[%s1 + $0x88] sm:$0xff]
      %v259 = vld [vmem:[%s1 + $0x90] sm:$0xff]
      %v260 = vld [vmem:[%s1 + $0x98] sm:$0xff]
      %v261 = vld [vmem:[%s1 + $0xa0] sm:$0xff]
      %v262 = vld [vmem:[%s1 + $0xa8] sm:$0xff]
      %v263 = vld [vmem:[%s1 + $0xb0] sm:$0xff]
      %v264 = vld [vmem:[%s1 + $0xb8] sm:$0xff]
      %v265 = vld [vmem:[%s1 + $0xc0] sm:$0xff]
      %v266 = vld [vmem:[%s1 + $0xc8] sm:$0xff]
      %v267 = vld [vmem:[%s1 + $0xd0] sm:$0xff]
      %v268 = vld [vmem:[%s1 + $0xd8] sm:$0xff]
      %v269 = vld [vmem:[%s1 + $0xe0] sm:$0xff]
      %v270 = vld [vmem:[%s1 + $0xe8] sm:$0xff]
      %v271 = vld [vmem:[%s1 + $0xf0] sm:$0xff]
      %v272 = vld [vmem:[%s1 + $0xf8] sm:$0xff]
      %v273 = vld [vmem:[%s2] sm:$0x1]
      %v275 = vlaneseq
      %v276 = vshrl.u32 %v275, 7
      %v277 = vsub.s32 0, %v276
      %v278 = vrot.slane %v273, %v277
      %280 = vmatprep.subr.mxu0 0.0
      %281 = vmatpush1.msra.mxu0 %v241
      %282 = vmatprep.subr.mxu0 0.0
      %283 = vmatpush1.msra.mxu0 %v242
      %284 = vmatprep.subr.mxu0 0.0
      %285 = vmatpush1.msra.mxu0 %v243
      %286 = vmatprep.subr.mxu0 0.0
      %287 = vmatpush1.msra.mxu0 %v244
      %288 = vmatprep.subr.mxu0 0.0
      %289 = vmatpush1.msra.mxu0 %v245
      %290 = vmatprep.subr.mxu0 0.0
      %291 = vmatpush1.msra.mxu0 %v246
      %292 = vmatprep.subr.mxu0 0.0
      %293 = vmatpush1.msra.mxu0 %v247
      %294 = vmatprep.subr.mxu0 0.0
      %295 = vmatpush1.msra.mxu0 %v248
      %296 = vmatprep.subr.mxu0 0.0
      %297 = vmatpush1.msra.mxu0 %v249
      %298 = vmatprep.subr.mxu0 0.0
      %299 = vmatpush1.msra.mxu0 %v250
      %300 = vmatprep.subr.mxu0 0.0
      %301 = vmatpush1.msra.mxu0 %v251
      %302 = vmatprep.subr.mxu0 0.0
      %303 = vmatpush1.msra.mxu0 %v252
      %304 = vmatprep.subr.mxu0 0.0
      %305 = vmatpush1.msra.mxu0 %v253
      %306 = vmatprep.subr.mxu0 0.0
      %307 = vmatpush1.msra.mxu0 %v254
      %308 = vmatprep.subr.mxu0 0.0
      %309 = vmatpush1.msra.mxu0 %v255
      %310 = vmatprep.subr.mxu0 0.0
      %311 = vmatpush1.msra.mxu0 %v256
      %312 = vmatprep.subr.mxu0 0.0
      %313 = vmatpush1.msra.mxu0 %v257
      %314 = vmatprep.subr.mxu0 0.0
      %315 = vmatpush1.msra.mxu0 %v258
      %316 = vmatprep.subr.mxu0 0.0
      %317 = vmatpush1.msra.mxu0 %v259
      %318 = vmatprep.subr.mxu0 0.0
      %319 = vmatpush1.msra.mxu0 %v260
      %320 = vmatprep.subr.mxu0 0.0
      %321 = vmatpush1.msra.mxu0 %v261
      %322 = vmatprep.subr.mxu0 0.0
      %323 = vmatpush1.msra.mxu0 %v262
      %324 = vmatprep.subr.mxu0 0.0
      %325 = vmatpush1.msra.mxu0 %v263
      %326 = vmatprep.subr.mxu0 0.0
      %327 = vmatpush1.msra.mxu0 %v264
      %328 = vmatprep.subr.mxu0 0.0
      %329 = vmatpush1.msra.mxu0 %v265
      %330 = vmatprep.subr.mxu0 0.0
      %331 = vmatpush1.msra.mxu0 %v266
      %332 = vmatprep.subr.mxu0 0.0
      %333 = vmatpush1.msra.mxu0 %v267
      %334 = vmatprep.subr.mxu0 0.0
      %335 = vmatpush1.msra.mxu0 %v268
      %336 = vmatprep.subr.mxu0 0.0
      %337 = vmatpush1.msra.mxu0 %v269
      %338 = vmatprep.subr.mxu0 0.0
      %339 = vmatpush1.msra.mxu0 %v270
      %340 = vmatprep.subr.mxu0 0.0
      %341 = vmatpush1.msra.mxu0 %v271
      %342 = vmatprep.subr.mxu0 0.0
      %343 = vmatpush1.msra.mxu0 %v272
      %344 = vmatprep.mubr.f32.mxu0 %v178
      %345 = vmatmul.mubr.f32.gmra.mrb[0].mxu0 %v177
      %v346 = vpop.f32.mrb[0].mxu0
      %v347 = vadd.f32 %v278, %v346
      %v348 = vpop.f32.mrb[0].mxu0
      %349 = vmatprep.mubr.f32.mxu0 %v180
      %350 = vmatmul.mubr.f32.gmra.mrb[0].mxu0 %v179
      %v351 = vpop.f32.mrb[0].mxu0
      %v352 = vadd.f32 %v278, %v351
      %v353 = vpop.f32.mrb[0].mxu0
      %354 = vmatprep.mubr.f32.mxu0 %v182
      %355 = vmatmul.mubr.f32.gmra.mrb[0].mxu0 %v181
      %v356 = vpop.f32.mrb[0].mxu0
      %v357 = vadd.f32 %v278, %v356
      %v358 = vpop.f32.mrb[0].mxu0
      %359 = vmatprep.mubr.f32.mxu0 %v184
      %360 = vmatmul.mubr.f32.gmra.mrb[0].mxu0 %v183
      %v361 = vpop.f32.mrb[0].mxu0
      %v362 = vadd.f32 %v278, %v361
      %v363 = vpop.f32.mrb[0].mxu0
      %364 = vmatprep.mubr.f32.mxu0 %v186
      %365 = vmatmul.mubr.f32.gmra.mrb[0].mxu0 %v185
      %v366 = vpop.f32.mrb[0].mxu0
      %v367 = vadd.f32 %v278, %v366
      %v368 = vpop.f32.mrb[0].mxu0
      %369 = vmatprep.mubr.f32.mxu0 %v188
      %370 = vmatmul.mubr.f32.gmra.mrb[0].mxu0 %v187
      %v371 = vpop.f32.mrb[0].mxu0
      %v372 = vadd.f32 %v278, %v371
      %v373 = vpop.f32.mrb[0].mxu0
      %374 = vmatprep.mubr.f32.mxu0 %v190
      %375 = vmatmul.mubr.f32.gmra.mrb[0].mxu0 %v189
      %v376 = vpop.f32.mrb[0].mxu0
      %v377 = vadd.f32 %v278, %v376
      %v378 = vpop.f32.mrb[0].mxu0
      %379 = vmatprep.mubr.f32.mxu0 %v192
      %380 = vmatmul.mubr.f32.gmra.mrb[0].mxu0 %v191
      %v381 = vpop.f32.mrb[0].mxu0
      %v382 = vadd.f32 %v278, %v381
      %v383 = vpop.f32.mrb[0].mxu0
      %384 = vmatprep.mubr.f32.mxu0 %v194
      %385 = vmatmul.mubr.f32.gmra.mrb[0].mxu0 %v193
      %v386 = vpop.f32.mrb[0].mxu0
      %v387 = vadd.f32 %v278, %v386
      %v388 = vpop.f32.mrb[0].mxu0
      %389 = vmatprep.mubr.f32.mxu0 %v196
      %390 = vmatmul.mubr.f32.gmra.mrb[0].mxu0 %v195
      %v391 = vpop.f32.mrb[0].mxu0
      %v392 = vadd.f32 %v278, %v391
      %v393 = vpop.f32.mrb[0].mxu0
      %394 = vmatprep.mubr.f32.mxu0 %v198
      %395 = vmatmul.mubr.f32.gmra.mrb[0].mxu0 %v197
      %v396 = vpop.f32.mrb[0].mxu0
      %v397 = vadd.f32 %v278, %v396
      %v398 = vpop.f32.mrb[0].mxu0
      %399 = vmatprep.mubr.f32.mxu0 %v200
      %400 = vmatmul.mubr.f32.gmra.mrb[0].mxu0 %v199
      %v401 = vpop.f32.mrb[0].mxu0
      %v402 = vadd.f32 %v278, %v401
      %v403 = vpop.f32.mrb[0].mxu0
      %404 = vmatprep.mubr.f32.mxu0 %v202
      %405 = vmatmul.mubr.f32.gmra.mrb[0].mxu0 %v201
      %v406 = vpop.f32.mrb[0].mxu0
      %v407 = vadd.f32 %v278, %v406
      %v408 = vpop.f32.mrb[0].mxu0
      %409 = vmatprep.mubr.f32.mxu0 %v204
      %410 = vmatmul.mubr.f32.gmra.mrb[0].mxu0 %v203
      %v411 = vpop.f32.mrb[0].mxu0
      %v412 = vadd.f32 %v278, %v411
      %v413 = vpop.f32.mrb[0].mxu0
      %414 = vmatprep.mubr.f32.mxu0 %v206
      %415 = vmatmul.mubr.f32.gmra.mrb[0].mxu0 %v205
      %v416 = vpop.f32.mrb[0].mxu0
      %v417 = vadd.f32 %v278, %v416
      %v418 = vpop.f32.mrb[0].mxu0
      %419 = vmatprep.mubr.f32.mxu0 %v208
      %420 = vmatmul.mubr.f32.gmra.mrb[0].mxu0 %v207
      %v421 = vpop.f32.mrb[0].mxu0
      %v422 = vadd.f32 %v278, %v421
      %v423 = vpop.f32.mrb[0].mxu0
      %424 = vmatprep.mubr.f32.mxu0 %v210
      %425 = vmatmul.mubr.f32.gmra.mrb[0].mxu0 %v209
      %v426 = vpop.f32.mrb[0].mxu0
      %v427 = vadd.f32 %v278, %v426
      %v428 = vpop.f32.mrb[0].mxu0
      %429 = vmatprep.mubr.f32.mxu0 %v212
      %430 = vmatmul.mubr.f32.gmra.mrb[0].mxu0 %v211
      %v431 = vpop.f32.mrb[0].mxu0
      %v432 = vadd.f32 %v278, %v431
      %v433 = vpop.f32.mrb[0].mxu0
      %434 = vmatprep.mubr.f32.mxu0 %v214
      %435 = vmatmul.mubr.f32.gmra.mrb[0].mxu0 %v213
      %v436 = vpop.f32.mrb[0].mxu0
      %v437 = vadd.f32 %v278, %v436
      %v438 = vpop.f32.mrb[0].mxu0
      %439 = vmatprep.mubr.f32.mxu0 %v216
      %440 = vmatmul.mubr.f32.gmra.mrb[0].mxu0 %v215
      %v441 = vpop.f32.mrb[0].mxu0
      %v442 = vadd.f32 %v278, %v441
      %v443 = vpop.f32.mrb[0].mxu0
      %444 = vmatprep.mubr.f32.mxu0 %v218
      %445 = vmatmul.mubr.f32.gmra.mrb[0].mxu0 %v217
      %v446 = vpop.f32.mrb[0].mxu0
      %v447 = vadd.f32 %v278, %v446
      %v448 = vpop.f32.mrb[0].mxu0
      %449 = vmatprep.mubr.f32.mxu0 %v220
      %450 = vmatmul.mubr.f32.gmra.mrb[0].mxu0 %v219
      %v451 = vpop.f32.mrb[0].mxu0
      %v452 = vadd.f32 %v278, %v451
      %v453 = vpop.f32.mrb[0].mxu0
      %454 = vmatprep.mubr.f32.mxu0 %v222
      %455 = vmatmul.mubr.f32.gmra.mrb[0].mxu0 %v221
      %v456 = vpop.f32.mrb[0].mxu0
      %v457 = vadd.f32 %v278, %v456
      %v458 = vpop.f32.mrb[0].mxu0
      %459 = vmatprep.mubr.f32.mxu0 %v224
      %460 = vmatmul.mubr.f32.gmra.mrb[0].mxu0 %v223
      %v461 = vpop.f32.mrb[0].mxu0
      %v462 = vadd.f32 %v278, %v461
      %v463 = vpop.f32.mrb[0].mxu0
      %464 = vmatprep.mubr.f32.mxu0 %v226
      %465 = vmatmul.mubr.f32.gmra.mrb[0].mxu0 %v225
      %v466 = vpop.f32.mrb[0].mxu0
      %v467 = vadd.f32 %v278, %v466
      %v468 = vpop.f32.mrb[0].mxu0
      %469 = vmatprep.mubr.f32.mxu0 %v228
      %470 = vmatmul.mubr.f32.gmra.mrb[0].mxu0 %v227
      %v471 = vpop.f32.mrb[0].mxu0
      %v472 = vadd.f32 %v278, %v471
      %v473 = vpop.f32.mrb[0].mxu0
      %474 = vmatprep.mubr.f32.mxu0 %v230
      %475 = vmatmul.mubr.f32.gmra.mrb[0].mxu0 %v229
      %v476 = vpop.f32.mrb[0].mxu0
      %v477 = vadd.f32 %v278, %v476
      %v478 = vpop.f32.mrb[0].mxu0
      %479 = vmatprep.mubr.f32.mxu0 %v232
      %480 = vmatmul.mubr.f32.gmra.mrb[0].mxu0 %v231
      %v481 = vpop.f32.mrb[0].mxu0
      %v482 = vadd.f32 %v278, %v481
      %v483 = vpop.f32.mrb[0].mxu0
      %484 = vmatprep.mubr.f32.mxu0 %v234
      %485 = vmatmul.mubr.f32.gmra.mrb[0].mxu0 %v233
      %v486 = vpop.f32.mrb[0].mxu0
      %v487 = vadd.f32 %v278, %v486
      %v488 = vpop.f32.mrb[0].mxu0
      %489 = vmatprep.mubr.f32.mxu0 %v236
      %490 = vmatmul.mubr.f32.gmra.mrb[0].mxu0 %v235
      %v491 = vpop.f32.mrb[0].mxu0
      %v492 = vadd.f32 %v278, %v491
      %v493 = vpop.f32.mrb[0].mxu0
      %494 = vmatprep.mubr.f32.mxu0 %v238
      %495 = vmatmul.mubr.f32.gmra.mrb[0].mxu0 %v237
      %v496 = vpop.f32.mrb[0].mxu0
      %v497 = vadd.f32 %v278, %v496
      %v498 = vpop.f32.mrb[0].mxu0
      %499 = vmatprep.mubr.f32.mxu0 %v240
      %500 = vmatmul.mubr.f32.gmra.mrb[0].mxu0 %v239
      %v501 = vpop.f32.mrb[0].mxu0
      %v502 = vadd.f32 %v278, %v501
      %v503 = vpop.f32.mrb[0].mxu0
      %504 = vdwg.mxu0
      %v505 = vmax.f32 %v347, 0.0
      %v506 = vmax.f32 %v352, 0.0
      %v507 = vmax.f32 %v357, 0.0
      %v508 = vmax.f32 %v362, 0.0
      %v509 = vmax.f32 %v367, 0.0
      %v510 = vmax.f32 %v372, 0.0
      %v511 = vmax.f32 %v377, 0.0
      %v512 = vmax.f32 %v382, 0.0
      %v513 = vmax.f32 %v387, 0.0
      %v514 = vmax.f32 %v392, 0.0
      %v515 = vmax.f32 %v397, 0.0
      %v516 = vmax.f32 %v402, 0.0
      %v517 = vmax.f32 %v407, 0.0
      %v518 = vmax.f32 %v412, 0.0
      %v519 = vmax.f32 %v417, 0.0
      %v520 = vmax.f32 %v422, 0.0
      %v521 = vmax.f32 %v427, 0.0
      %v522 = vmax.f32 %v432, 0.0
      %v523 = vmax.f32 %v437, 0.0
      %v524 = vmax.f32 %v442, 0.0
      %v525 = vmax.f32 %v447, 0.0
      %v526 = vmax.f32 %v452, 0.0
      %v527 = vmax.f32 %v457, 0.0
      %v528 = vmax.f32 %v462, 0.0
      %v529 = vmax.f32 %v467, 0.0
      %v530 = vmax.f32 %v472, 0.0
      %v531 = vmax.f32 %v477, 0.0
      %v532 = vmax.f32 %v482, 0.0
      %v533 = vmax.f32 %v487, 0.0
      %v534 = vmax.f32 %v492, 0.0
      %v535 = vmax.f32 %v497, 0.0
      %v536 = vmax.f32 %v502, 0.0
      %vm537 = vcmask 523264
      %538 = vst.msk [vmem:[%s175] sm:$0xff] %vm537, %v505
      %539 = vst.msk [vmem:[%s175 + $0x8] sm:$0xff] %vm537, %v506
      %540 = vst.msk [vmem:[%s175 + $0x10] sm:$0xff] %vm537, %v507
      %541 = vst.msk [vmem:[%s175 + $0x18] sm:$0xff] %vm537, %v508
      %542 = vst.msk [vmem:[%s175 + $0x20] sm:$0xff] %vm537, %v509
      %543 = vst.msk [vmem:[%s175 + $0x28] sm:$0xff] %vm537, %v510
      %544 = vst.msk [vmem:[%s175 + $0x30] sm:$0xff] %vm537, %v511
      %545 = vst.msk [vmem:[%s175 + $0x38] sm:$0xff] %vm537, %v512
      %546 = vst.msk [vmem:[%s175 + $0x40] sm:$0xff] %vm537, %v513
      %547 = vst.msk [vmem:[%s175 + $0x48] sm:$0xff] %vm537, %v514
      %548 = vst.msk [vmem:[%s175 + $0x50] sm:$0xff] %vm537, %v515
      %549 = vst.msk [vmem:[%s175 + $0x58] sm:$0xff] %vm537, %v516
      %550 = vst.msk [vmem:[%s175 + $0x60] sm:$0xff] %vm537, %v517
      %551 = vst.msk [vmem:[%s175 + $0x68] sm:$0xff] %vm537, %v518
      %552 = vst.msk [vmem:[%s175 + $0x70] sm:$0xff] %vm537, %v519
      %553 = vst.msk [vmem:[%s175 + $0x78] sm:$0xff] %vm537, %v520
      %554 = vst.msk [vmem:[%s175 + $0x80] sm:$0xff] %vm537, %v521
      %555 = vst.msk [vmem:[%s175 + $0x88] sm:$0xff] %vm537, %v522
      %556 = vst.msk [vmem:[%s175 + $0x90] sm:$0xff] %vm537, %v523
      %557 = vst.msk [vmem:[%s175 + $0x98] sm:$0xff] %vm537, %v524
      %558 = vst.msk [vmem:[%s175 + $0xa0] sm:$0xff] %vm537, %v525
      %559 = vst.msk [vmem:[%s175 + $0xa8] sm:$0xff] %vm537, %v526
      %560 = vst.msk [vmem:[%s175 + $0xb0] sm:$0xff] %vm537, %v527
      %561 = vst.msk [vmem:[%s175 + $0xb8] sm:$0xff] %vm537, %v528
      %562 = vst.msk [vmem:[%s175 + $0xc0] sm:$0xff] %vm537, %v529
      %563 = vst.msk [vmem:[%s175 + $0xc8] sm:$0xff] %vm537, %v530
      %564 = vst.msk [vmem:[%s175 + $0xd0] sm:$0xff] %vm537, %v531
      %565 = vst.msk [vmem:[%s175 + $0xd8] sm:$0xff] %vm537, %v532
      %566 = vst.msk [vmem:[%s175 + $0xe0] sm:$0xff] %vm537, %v533
      %567 = vst.msk [vmem:[%s175 + $0xe8] sm:$0xff] %vm537, %v534
      %568 = vst.msk [vmem:[%s175 + $0xf0] sm:$0xff] %vm537, %v535
      %569 = vst.msk [vmem:[%s175 + $0xf8] sm:$0xff] %vm537, %v536
      %s570 = smul.u32 32, %s14
      %p571 = scmp.lt.s32.totalorder %s570, 95
      %s572 = scalar_select %p571, %s570, 95
      %s573 = smul.addr %s572, 8
      %s574 = scalar_lea.vmem %s3, %s573
      // Predicated region
      $region33: #{duel_cnn_forward.3} parent=31 // pred_check
        %p575 = pneg %p100
      $region34: #{duel_cnn_forward.3} parent=31 // pred_check_branch
        %577 = sbr.rel (%p575) target = $region36
      $region35: #{duel_cnn_forward.3} parent=31 // pred_region
        %s578 = smul.u32 32, %s14
      $region36: #{duel_cnn_forward.3} parent=31 // pred_fallthru
        _
    $region32: #{duel_cnn_forward.3} parent=5 // pred_fallthru
      _
    %p579 = scmp.le.s32.totalorder 2, %s9
    // Predicated region
    $region37: #{duel_cnn_forward.3} parent=5 // pred_check
      %p580 = pneg %p579
    $region38: #{duel_cnn_forward.3} parent=5 // pred_check_branch
      %582 = sbr.rel (%p580) target = $region40
    $region39: #{duel_cnn_forward.3} parent=5 // pred_region
      %s583 = ssub.s32 %s9, 2
      // Predicated region
      $region41: #{duel_cnn_forward.3} parent=39 // pred_check
        %p584 = pneg %p106
      $region42: #{duel_cnn_forward.3} parent=39 // pred_check_branch
        %586 = sbr.rel (%p584) target = $region44
      $region43: #{duel_cnn_forward.3} parent=39 // pred_region
        %s587 = smul.u32 32, %s15
        %p588 = scmp.lt.s32.totalorder %s587, 95
        %s589 = scalar_select %p588, %s587, 95
        %s590 = smul.addr %s589, 8
        %s591 = scalar_lea.vmem %s3, %s590
      $region44: #{duel_cnn_forward.3} parent=39 // pred_fallthru
        _
    $region40: #{duel_cnn_forward.3} parent=5 // pred_fallthru
      _
  $region6: #{duel_cnn_forward.3} parent=0 // loop_footer
    %s13 = sadd.s32 1, %s9
  $region7: #{duel_cnn_forward.3} parent=0 // loop_footer_branch
    %8 = sbr.rel target = $region3
  $region8: #{duel_cnn_forward.3} parent=0 // loop_exit
    _

// kernel: duel_cnn_forward.4
$region0: #{duel_cnn_forward.4}
  #allocation0 [shape = 'u32[]', space=smem, size = 0x4, offset = 0x4, fixed_abs, tag = 'smem constant byte address 0x4 - core index']
  #allocation1 [shape = 'u32[144,128]{1,0:T(1,128)}', space=vmem, size = 0x12000, scoped, tag = 'internal scratch']
  %s0 = inlined_call_operand.vmem [shape: f32[128,1600], index: 0, kind: input, shape index: {}]
  %s1 = inlined_call_operand.vmem [shape: f32[1600,32], index: 1, kind: input, shape index: {}]
  %s2 = inlined_call_operand.vmem [shape: f32[1,32], index: 2, kind: input, shape index: {}]
  %s3 = inlined_call_operand.vmem [shape: f32[128,32], index: 3, kind: output, shape index: {}]
  %s4 = sld [smem:[#allocation0]]
  $region22: #{duel_cnn_forward.4} parent=0
    _
  %s6 = ssub.s32 1, %s4
  %s7 = scalar_select 0, %s6, %s4
  // Predicated region
  $region2: #{duel_cnn_forward.4} parent=0 // pred_check
    _
  $region3: #{duel_cnn_forward.4} parent=0 // pred_check_branch
    %9 = sbr.rel (0) target = $region5
  $region4: #{duel_cnn_forward.4} parent=0 // pred_region
    _
  $region5: #{duel_cnn_forward.4} parent=0 // pred_fallthru
    _
  // Predicated region
  $region6: #{duel_cnn_forward.4} parent=0 // pred_check
    _
  $region7: #{duel_cnn_forward.4} parent=0 // pred_check_branch
    %11 = sbr.rel (0) target = $region9
  $region8: #{duel_cnn_forward.4} parent=0 // pred_region
    _
  $region9: #{duel_cnn_forward.4} parent=0 // pred_fallthru
    _
  // Predicated region
  $region10: #{duel_cnn_forward.4} parent=0 // pred_check
    _
  $region11: #{duel_cnn_forward.4} parent=0 // pred_check_branch
    %13 = sbr.rel (0) target = $region13
  $region12: #{duel_cnn_forward.4} parent=0 // pred_region
    _
  $region13: #{duel_cnn_forward.4} parent=0 // pred_fallthru
    _
  %v14 = vld [vmem:[%s0] sm:$0xff]
  %v15 = vld [vmem:[%s0 + $0x8] sm:$0xff]
  %v16 = vld [vmem:[%s0 + $0x10] sm:$0xff]
  %v17 = vld [vmem:[%s0 + $0x18] sm:$0xff]
  %v18 = vld [vmem:[%s0 + $0x20] sm:$0xff]
  %v19 = vld [vmem:[%s0 + $0x28] sm:$0xff]
  %v20 = vld [vmem:[%s0 + $0x30] sm:$0xff]
  %v21 = vld [vmem:[%s0 + $0x38] sm:$0xff]
  %v22 = vld [vmem:[%s0 + $0x40] sm:$0xff]
  %v23 = vld [vmem:[%s0 + $0x48] sm:$0xff]
  %v24 = vld [vmem:[%s0 + $0x50] sm:$0xff]
  %v25 = vld [vmem:[%s0 + $0x58] sm:$0xff]
  %v26 = vld [vmem:[%s0 + $0x60] sm:$0xff]
  %v27 = vld [vmem:[%s0 + $0x68] sm:$0xff]
  %v28 = vld [vmem:[%s0 + $0x70] sm:$0xff]
  %v29 = vld [vmem:[%s0 + $0x78] sm:$0xff]
  %v30 = vld [vmem:[%s0 + $0x80] sm:$0xff]
  %v31 = vld [vmem:[%s0 + $0x88] sm:$0xff]
  %v32 = vld [vmem:[%s0 + $0x90] sm:$0xff]
  %v33 = vld [vmem:[%s0 + $0x98] sm:$0xff]
  %v34 = vld [vmem:[%s0 + $0xa0] sm:$0xff]
  %v35 = vld [vmem:[%s0 + $0xa8] sm:$0xff]
  %v36 = vld [vmem:[%s0 + $0xb0] sm:$0xff]
  %v37 = vld [vmem:[%s0 + $0xb8] sm:$0xff]
  %v38 = vld [vmem:[%s0 + $0xc0] sm:$0xff]
  %v39 = vld [vmem:[%s0 + $0xc8] sm:$0xff]
  %v40 = vld [vmem:[%s0 + $0xd0] sm:$0xff]
  %v41 = vld [vmem:[%s0 + $0xd8] sm:$0xff]
  %v42 = vld [vmem:[%s0 + $0xe0] sm:$0xff]
  %v43 = vld [vmem:[%s0 + $0xe8] sm:$0xff]
  %v44 = vld [vmem:[%s0 + $0xf0] sm:$0xff]
  %v45 = vld [vmem:[%s0 + $0xf8] sm:$0xff]
  %v46 = vld [vmem:[%s0 + $0x100] sm:$0xff]
  %v47 = vld [vmem:[%s0 + $0x108] sm:$0xff]
  %v48 = vld [vmem:[%s0 + $0x110] sm:$0xff]
  %v49 = vld [vmem:[%s0 + $0x118] sm:$0xff]
  %v50 = vld [vmem:[%s0 + $0x120] sm:$0xff]
  %v51 = vld [vmem:[%s0 + $0x128] sm:$0xff]
  %v52 = vld [vmem:[%s0 + $0x130] sm:$0xff]
  %v53 = vld [vmem:[%s0 + $0x138] sm:$0xff]
  %v54 = vld [vmem:[%s0 + $0x140] sm:$0xff]
  %v55 = vld [vmem:[%s0 + $0x148] sm:$0xff]
  %v56 = vld [vmem:[%s0 + $0x150] sm:$0xff]
  %v57 = vld [vmem:[%s0 + $0x158] sm:$0xff]
  %v58 = vld [vmem:[%s0 + $0x160] sm:$0xff]
  %v59 = vld [vmem:[%s0 + $0x168] sm:$0xff]
  %v60 = vld [vmem:[%s0 + $0x170] sm:$0xff]
  %v61 = vld [vmem:[%s0 + $0x178] sm:$0xff]
  %v62 = vld [vmem:[%s0 + $0x180] sm:$0xff]
  %v63 = vld [vmem:[%s0 + $0x188] sm:$0xff]
  %v64 = vld [vmem:[%s0 + $0x190] sm:$0xff]
  %v65 = vld [vmem:[%s0 + $0x198] sm:$0xff]
  %v66 = vld [vmem:[%s0 + $0x1a0] sm:$0xff]
  %v67 = vld [vmem:[%s0 + $0x1a8] sm:$0xff]
  %v68 = vld [vmem:[%s0 + $0x1b0] sm:$0xff]
  %v69 = vld [vmem:[%s0 + $0x1b8] sm:$0xff]
  %v70 = vld [vmem:[%s0 + $0x1c0] sm:$0xff]
  %v71 = vld [vmem:[%s0 + $0x1c8] sm:$0xff]
  %v72 = vld [vmem:[%s0 + $0x1d0] sm:$0xff]
  %v73 = vld [vmem:[%s0 + $0x1d8] sm:$0xff]
  %v74 = vld [vmem:[%s0 + $0x1e0] sm:$0xff]
  %v75 = vld [vmem:[%s0 + $0x1e8] sm:$0xff]
  %v76 = vld [vmem:[%s0 + $0x1f0] sm:$0xff]
  %v77 = vld [vmem:[%s0 + $0x1f8] sm:$0xff]
  %v78 = vld [vmem:[%s0 + $0x200] sm:$0xff]
  %v79 = vld [vmem:[%s0 + $0x208] sm:$0xff]
  %v80 = vld [vmem:[%s0 + $0x210] sm:$0xff]
  %v81 = vld [vmem:[%s0 + $0x218] sm:$0xff]
  %v82 = vld [vmem:[%s0 + $0x220] sm:$0xff]
  %v83 = vld [vmem:[%s0 + $0x228] sm:$0xff]
  %v84 = vld [vmem:[%s0 + $0x230] sm:$0xff]
  %v85 = vld [vmem:[%s0 + $0x238] sm:$0xff]
  %v86 = vld [vmem:[%s0 + $0x240] sm:$0xff]
  %v87 = vld [vmem:[%s0 + $0x248] sm:$0xff]
  %v88 = vld [vmem:[%s0 + $0x250] sm:$0xff]
  %v89 = vld [vmem:[%s0 + $0x258] sm:$0xff]
  %v90 = vld [vmem:[%s0 + $0x260] sm:$0xff]
  %v91 = vld [vmem:[%s0 + $0x268] sm:$0xff]
  %v92 = vld [vmem:[%s0 + $0x270] sm:$0xff]
  %v93 = vld [vmem:[%s0 + $0x278] sm:$0xff]
  %v94 = vld [vmem:[%s0 + $0x280] sm:$0xff]
  %v95 = vld [vmem:[%s0 + $0x288] sm:$0xff]
  %v96 = vld [vmem:[%s0 + $0x290] sm:$0xff]
  %v97 = vld [vmem:[%s0 + $0x298] sm:$0xff]
  %v98 = vld [vmem:[%s0 + $0x2a0] sm:$0xff]
  %v99 = vld [vmem:[%s0 + $0x2a8] sm:$0xff]
  %v100 = vld [vmem:[%s0 + $0x2b0] sm:$0xff]
  %v101 = vld [vmem:[%s0 + $0x2b8] sm:$0xff]
  %v102 = vld [vmem:[%s0 + $0x2c0] sm:$0xff]
  %v103 = vld [vmem:[%s0 + $0x2c8] sm:$0xff]
  %v104 = vld [vmem:[%s0 + $0x2d0] sm:$0xff]
  %v105 = vld [vmem:[%s0 + $0x2d8] sm:$0xff]
  %v106 = vld [vmem:[%s0 + $0x2e0] sm:$0xff]
  %v107 = vld [vmem:[%s0 + $0x2e8] sm:$0xff]
  %v108 = vld [vmem:[%s0 + $0x2f0] sm:$0xff]
  %v109 = vld [vmem:[%s0 + $0x2f8] sm:$0xff]
  %v110 = vld [vmem:[%s0 + $0x300] sm:$0xff]
  %v111 = vld [vmem:[%s0 + $0x308] sm:$0xff]
  %v112 = vld [vmem:[%s0 + $0x310] sm:$0xff]
  %v113 = vld [vmem:[%s0 + $0x318] sm:$0xff]
  %v114 = vld [vmem:[%s0 + $0x320] sm:$0xff]
  %v115 = vld [vmem:[%s0 + $0x328] sm:$0xff]
  %v116 = vld [vmem:[%s0 + $0x330] sm:$0xff]
  %v117 = vld [vmem:[%s0 + $0x338] sm:$0xff]
  %v118 = vld [vmem:[%s0 + $0x340] sm:$0xff]
  %v119 = vld [vmem:[%s0 + $0x348] sm:$0xff]
  %v120 = vld [vmem:[%s0 + $0x350] sm:$0xff]
  %v121 = vld [vmem:[%s0 + $0x358] sm:$0xff]
  %v122 = vld [vmem:[%s0 + $0x360] sm:$0xff]
  %v123 = vld [vmem:[%s0 + $0x368] sm:$0xff]
  %v124 = vld [vmem:[%s0 + $0x370] sm:$0xff]
  %v125 = vld [vmem:[%s0 + $0x378] sm:$0xff]
  %v126 = vld [vmem:[%s0 + $0x380] sm:$0xff]
  %v127 = vld [vmem:[%s0 + $0x388] sm:$0xff]
  %v128 = vld [vmem:[%s0 + $0x390] sm:$0xff]
  %v129 = vld [vmem:[%s0 + $0x398] sm:$0xff]
  %v130 = vld [vmem:[%s0 + $0x3a0] sm:$0xff]
  %v131 = vld [vmem:[%s0 + $0x3a8] sm:$0xff]
  %v132 = vld [vmem:[%s0 + $0x3b0] sm:$0xff]
  %v133 = vld [vmem:[%s0 + $0x3b8] sm:$0xff]
  %v134 = vld [vmem:[%s0 + $0x3c0] sm:$0xff]
  %v135 = vld [vmem:[%s0 + $0x3c8] sm:$0xff]
  %v136 = vld [vmem:[%s0 + $0x3d0] sm:$0xff]
  %v137 = vld [vmem:[%s0 + $0x3d8] sm:$0xff]
  %v138 = vld [vmem:[%s0 + $0x3e0] sm:$0xff]
  %v139 = vld [vmem:[%s0 + $0x3e8] sm:$0xff]
  %v140 = vld [vmem:[%s0 + $0x3f0] sm:$0xff]
  %v141 = vld [vmem:[%s0 + $0x3f8] sm:$0xff]
  %v142 = vld [vmem:[%s0 + $0x400] sm:$0xff]
  %v143 = vld [vmem:[%s0 + $0x408] sm:$0xff]
  %v144 = vld [vmem:[%s0 + $0x410] sm:$0xff]
  %v145 = vld [vmem:[%s0 + $0x418] sm:$0xff]
  %v146 = vld [vmem:[%s0 + $0x420] sm:$0xff]
  %v147 = vld [vmem:[%s0 + $0x428] sm:$0xff]
  %v148 = vld [vmem:[%s0 + $0x430] sm:$0xff]
  %v149 = vld [vmem:[%s0 + $0x438] sm:$0xff]
  %v150 = vld [vmem:[%s0 + $0x440] sm:$0xff]
  %v151 = vld [vmem:[%s0 + $0x448] sm:$0xff]
  %v152 = vld [vmem:[%s0 + $0x450] sm:$0xff]
  %v153 = vld [vmem:[%s0 + $0x458] sm:$0xff]
  %v154 = vld [vmem:[%s0 + $0x460] sm:$0xff]
  %v155 = vld [vmem:[%s0 + $0x468] sm:$0xff]
  %v156 = vld [vmem:[%s0 + $0x470] sm:$0xff]
  %v157 = vld [vmem:[%s0 + $0x478] sm:$0xff]
  %v158 = vld [vmem:[%s0 + $0x480] sm:$0xff]
  %v159 = vld [vmem:[%s0 + $0x488] sm:$0xff]
  %v160 = vld [vmem:[%s0 + $0x490] sm:$0xff]
  %v161 = vld [vmem:[%s0 + $0x498] sm:$0xff]
  %v162 = vld [vmem:[%s0 + $0x4a0] sm:$0xff]
  %v163 = vld [vmem:[%s0 + $0x4a8] sm:$0xff]
  %v164 = vld [vmem:[%s0 + $0x4b0] sm:$0xff]
  %v165 = vld [vmem:[%s0 + $0x4b8] sm:$0xff]
  %v166 = vld [vmem:[%s0 + $0x4c0] sm:$0xff]
  %v167 = vld [vmem:[%s0 + $0x4c8] sm:$0xff]
  %v168 = vld [vmem:[%s0 + $0x4d0] sm:$0xff]
  %v169 = vld [vmem:[%s0 + $0x4d8] sm:$0xff]
  %v170 = vld [vmem:[%s0 + $0x4e0] sm:$0xff]
  %v171 = vld [vmem:[%s0 + $0x4e8] sm:$0xff]
  %v172 = vld [vmem:[%s0 + $0x4f0] sm:$0xff]
  %v173 = vld [vmem:[%s0 + $0x4f8] sm:$0xff]
  %v174 = vld [vmem:[%s0 + $0x500] sm:$0xff]
  %v175 = vld [vmem:[%s0 + $0x508] sm:$0xff]
  %v176 = vld [vmem:[%s0 + $0x510] sm:$0xff]
  %v177 = vld [vmem:[%s0 + $0x518] sm:$0xff]
  %v178 = vld [vmem:[%s0 + $0x520] sm:$0xff]
  %v179 = vld [vmem:[%s0 + $0x528] sm:$0xff]
  %v180 = vld [vmem:[%s0 + $0x530] sm:$0xff]
  %v181 = vld [vmem:[%s0 + $0x538] sm:$0xff]
  %v182 = vld [vmem:[%s0 + $0x540] sm:$0xff]
  %v183 = vld [vmem:[%s0 + $0x548] sm:$0xff]
  %v184 = vld [vmem:[%s0 + $0x550] sm:$0xff]
  %v185 = vld [vmem:[%s0 + $0x558] sm:$0xff]
  %v186 = vld [vmem:[%s0 + $0x560] sm:$0xff]
  %v187 = vld [vmem:[%s0 + $0x568] sm:$0xff]
  %v188 = vld [vmem:[%s0 + $0x570] sm:$0xff]
  %v189 = vld [vmem:[%s0 + $0x578] sm:$0xff]
  %v190 = vld [vmem:[%s0 + $0x580] sm:$0xff]
  %v191 = vld [vmem:[%s0 + $0x588] sm:$0xff]
  %v192 = vld [vmem:[%s0 + $0x590] sm:$0xff]
  %v193 = vld [vmem:[%s0 + $0x598] sm:$0xff]
  %v194 = vld [vmem:[%s0 + $0x5a0] sm:$0xff]
  %v195 = vld [vmem:[%s0 + $0x5a8] sm:$0xff]
  %v196 = vld [vmem:[%s0 + $0x5b0] sm:$0xff]
  %v197 = vld [vmem:[%s0 + $0x5b8] sm:$0xff]
  %v198 = vld [vmem:[%s0 + $0x5c0] sm:$0xff]
  %v199 = vld [vmem:[%s0 + $0x5c8] sm:$0xff]
  %v200 = vld [vmem:[%s0 + $0x5d0] sm:$0xff]
  %v201 = vld [vmem:[%s0 + $0x5d8] sm:$0xff]
  %v202 = vld [vmem:[%s0 + $0x5e0] sm:$0xff]
  %v203 = vld [vmem:[%s0 + $0x5e8] sm:$0xff]
  %v204 = vld [vmem:[%s0 + $0x5f0] sm:$0xff]
  %v205 = vld [vmem:[%s0 + $0x5f8] sm:$0xff]
  %v206 = vld [vmem:[%s0 + $0x600] sm:$0xff]
  %v207 = vld [vmem:[%s0 + $0x608] sm:$0xff]
  %v208 = vld [vmem:[%s0 + $0x610] sm:$0xff]
  %v209 = vld [vmem:[%s0 + $0x618] sm:$0xff]
  %v210 = vld [vmem:[%s0 + $0x620] sm:$0xff]
  %v211 = vld [vmem:[%s0 + $0x628] sm:$0xff]
  %v212 = vld [vmem:[%s0 + $0x630] sm:$0xff]
  %v213 = vld [vmem:[%s0 + $0x638] sm:$0xff]
  %v214 = vld [vmem:[%s0 + $0x640] sm:$0xff]
  %v215 = vld [vmem:[%s0 + $0x648] sm:$0xff]
  %v216 = vld [vmem:[%s0 + $0x650] sm:$0xff]
  %v217 = vld [vmem:[%s0 + $0x658] sm:$0xff]
  %v218 = vld [vmem:[%s0 + $0x660] sm:$0xff]
  %v219 = vld [vmem:[%s0 + $0x668] sm:$0xff]
  %v220 = vld [vmem:[%s0 + $0x670] sm:$0xff]
  %v221 = vld [vmem:[%s0 + $0x678] sm:$0xff]
  %v222 = vld [vmem:[%s1] sm:$0xff]
  %v223 = vld [vmem:[%s1 + $0x8] sm:$0xff]
  %v224 = vld [vmem:[%s1 + $0x10] sm:$0xff]
  %v225 = vld [vmem:[%s1 + $0x18] sm:$0xff]
  %v226 = vld [vmem:[%s1 + $0x20] sm:$0xff]
  %v227 = vld [vmem:[%s1 + $0x28] sm:$0xff]
  %v228 = vld [vmem:[%s1 + $0x30] sm:$0xff]
  %v229 = vld [vmem:[%s1 + $0x38] sm:$0xff]
  %v230 = vld [vmem:[%s1 + $0x40] sm:$0xff]
  %v231 = vld [vmem:[%s1 + $0x48] sm:$0xff]
  %v232 = vld [vmem:[%s1 + $0x50] sm:$0xff]
  %v233 = vld [vmem:[%s1 + $0x58] sm:$0xff]
  %v234 = vld [vmem:[%s1 + $0x60] sm:$0xff]
  %v235 = vld [vmem:[%s1 + $0x68] sm:$0xff]
  %v236 = vld [vmem:[%s1 + $0x70] sm:$0xff]
  %v237 = vld [vmem:[%s1 + $0x78] sm:$0xff]
  %v238 = vld [vmem:[%s1 + $0x80] sm:$0xff]
  %v239 = vld [vmem:[%s1 + $0x88] sm:$0xff]
  %v240 = vld [vmem:[%s1 + $0x90] sm:$0xff]
  %v241 = vld [vmem:[%s1 + $0x98] sm:$0xff]
  %v242 = vld [vmem:[%s1 + $0xa0] sm:$0xff]
  %v243 = vld [vmem:[%s1 + $0xa8] sm:$0xff]
  %v244 = vld [vmem:[%s1 + $0xb0] sm:$0xff]
  %v245 = vld [vmem:[%s1 + $0xb8] sm:$0xff]
  %v246 = vld [vmem:[%s1 + $0xc0] sm:$0xff]
  %v247 = vld [vmem:[%s1 + $0xc8] sm:$0xff]
  %v248 = vld [vmem:[%s1 + $0xd0] sm:$0xff]
  %v249 = vld [vmem:[%s1 + $0xd8] sm:$0xff]
  %v250 = vld [vmem:[%s1 + $0xe0] sm:$0xff]
  %v251 = vld [vmem:[%s1 + $0xe8] sm:$0xff]
  %v252 = vld [vmem:[%s1 + $0xf0] sm:$0xff]
  %v253 = vld [vmem:[%s1 + $0xf8] sm:$0xff]
  %v254 = vld [vmem:[%s1 + $0x100] sm:$0xff]
  %v255 = vld [vmem:[%s1 + $0x108] sm:$0xff]
  %v256 = vld [vmem:[%s1 + $0x110] sm:$0xff]
  %v257 = vld [vmem:[%s1 + $0x118] sm:$0xff]
  %v258 = vld [vmem:[%s1 + $0x120] sm:$0xff]
  %v259 = vld [vmem:[%s1 + $0x128] sm:$0xff]
  %v260 = vld [vmem:[%s1 + $0x130] sm:$0xff]
  %v261 = vld [vmem:[%s1 + $0x138] sm:$0xff]
  %v262 = vld [vmem:[%s1 + $0x140] sm:$0xff]
  %v263 = vld [vmem:[%s1 + $0x148] sm:$0xff]
  %v264 = vld [vmem:[%s1 + $0x150] sm:$0xff]
  %v265 = vld [vmem:[%s1 + $0x158] sm:$0xff]
  %v266 = vld [vmem:[%s1 + $0x160] sm:$0xff]
  %v267 = vld [vmem:[%s1 + $0x168] sm:$0xff]
  %v268 = vld [vmem:[%s1 + $0x170] sm:$0xff]
  %v269 = vld [vmem:[%s1 + $0x178] sm:$0xff]
  %v270 = vld [vmem:[%s1 + $0x180] sm:$0xff]
  %v271 = vld [vmem:[%s1 + $0x188] sm:$0xff]
  %v272 = vld [vmem:[%s1 + $0x190] sm:$0xff]
  %v273 = vld [vmem:[%s1 + $0x198] sm:$0xff]
  %v274 = vld [vmem:[%s1 + $0x1a0] sm:$0xff]
  %v275 = vld [vmem:[%s1 + $0x1a8] sm:$0xff]
  %v276 = vld [vmem:[%s1 + $0x1b0] sm:$0xff]
  %v277 = vld [vmem:[%s1 + $0x1b8] sm:$0xff]
  %v278 = vld [vmem:[%s1 + $0x1c0] sm:$0xff]
  %v279 = vld [vmem:[%s1 + $0x1c8] sm:$0xff]
  %v280 = vld [vmem:[%s1 + $0x1d0] sm:$0xff]
  %v281 = vld [vmem:[%s1 + $0x1d8] sm:$0xff]
  %v282 = vld [vmem:[%s1 + $0x1e0] sm:$0xff]
  %v283 = vld [vmem:[%s1 + $0x1e8] sm:$0xff]
  %v284 = vld [vmem:[%s1 + $0x1f0] sm:$0xff]
  %v285 = vld [vmem:[%s1 + $0x1f8] sm:$0xff]
  %v286 = vld [vmem:[%s1 + $0x200] sm:$0xff]
  %v287 = vld [vmem:[%s1 + $0x208] sm:$0xff]
  %v288 = vld [vmem:[%s1 + $0x210] sm:$0xff]
  %v289 = vld [vmem:[%s1 + $0x218] sm:$0xff]
  %v290 = vld [vmem:[%s1 + $0x220] sm:$0xff]
  %v291 = vld [vmem:[%s1 + $0x228] sm:$0xff]
  %v292 = vld [vmem:[%s1 + $0x230] sm:$0xff]
  %v293 = vld [vmem:[%s1 + $0x238] sm:$0xff]
  %v294 = vld [vmem:[%s1 + $0x240] sm:$0xff]
  %v295 = vld [vmem:[%s1 + $0x248] sm:$0xff]
  %v296 = vld [vmem:[%s1 + $0x250] sm:$0xff]
  %v297 = vld [vmem:[%s1 + $0x258] sm:$0xff]
  %v298 = vld [vmem:[%s1 + $0x260] sm:$0xff]
  %v299 = vld [vmem:[%s1 + $0x268] sm:$0xff]
  %v300 = vld [vmem:[%s1 + $0x270] sm:$0xff]
  %v301 = vld [vmem:[%s1 + $0x278] sm:$0xff]
  %v302 = vld [vmem:[%s1 + $0x280] sm:$0xff]
  %v303 = vld [vmem:[%s1 + $0x288] sm:$0xff]
  %v304 = vld [vmem:[%s1 + $0x290] sm:$0xff]
  %v305 = vld [vmem:[%s1 + $0x298] sm:$0xff]
  %v306 = vld [vmem:[%s1 + $0x2a0] sm:$0xff]
  %v307 = vld [vmem:[%s1 + $0x2a8] sm:$0xff]
  %v308 = vld [vmem:[%s1 + $0x2b0] sm:$0xff]
  %v309 = vld [vmem:[%s1 + $0x2b8] sm:$0xff]
  %v310 = vld [vmem:[%s1 + $0x2c0] sm:$0xff]
  %v311 = vld [vmem:[%s1 + $0x2c8] sm:$0xff]
  %v312 = vld [vmem:[%s1 + $0x2d0] sm:$0xff]
  %v313 = vld [vmem:[%s1 + $0x2d8] sm:$0xff]
  %v314 = vld [vmem:[%s1 + $0x2e0] sm:$0xff]
  %v315 = vld [vmem:[%s1 + $0x2e8] sm:$0xff]
  %v316 = vld [vmem:[%s1 + $0x2f0] sm:$0xff]
  %v317 = vld [vmem:[%s1 + $0x2f8] sm:$0xff]
  %v318 = vld [vmem:[%s1 + $0x300] sm:$0xff]
  %v319 = vld [vmem:[%s1 + $0x308] sm:$0xff]
  %v320 = vld [vmem:[%s1 + $0x310] sm:$0xff]
  %v321 = vld [vmem:[%s1 + $0x318] sm:$0xff]
  %v322 = vld [vmem:[%s1 + $0x320] sm:$0xff]
  %v323 = vld [vmem:[%s1 + $0x328] sm:$0xff]
  %v324 = vld [vmem:[%s1 + $0x330] sm:$0xff]
  %v325 = vld [vmem:[%s1 + $0x338] sm:$0xff]
  %v326 = vld [vmem:[%s1 + $0x340] sm:$0xff]
  %v327 = vld [vmem:[%s1 + $0x348] sm:$0xff]
  %v328 = vld [vmem:[%s1 + $0x350] sm:$0xff]
  %v329 = vld [vmem:[%s1 + $0x358] sm:$0xff]
  %v330 = vld [vmem:[%s1 + $0x360] sm:$0xff]
  %v331 = vld [vmem:[%s1 + $0x368] sm:$0xff]
  %v332 = vld [vmem:[%s1 + $0x370] sm:$0xff]
  %v333 = vld [vmem:[%s1 + $0x378] sm:$0xff]
  %v334 = vld [vmem:[%s1 + $0x380] sm:$0xff]
  %v335 = vld [vmem:[%s1 + $0x388] sm:$0xff]
  %v336 = vld [vmem:[%s1 + $0x390] sm:$0xff]
  %v337 = vld [vmem:[%s1 + $0x398] sm:$0xff]
  %v338 = vld [vmem:[%s1 + $0x3a0] sm:$0xff]
  %v339 = vld [vmem:[%s1 + $0x3a8] sm:$0xff]
  %v340 = vld [vmem:[%s1 + $0x3b0] sm:$0xff]
  %v341 = vld [vmem:[%s1 + $0x3b8] sm:$0xff]
  %v342 = vld [vmem:[%s1 + $0x3c0] sm:$0xff]
  %v343 = vld [vmem:[%s1 + $0x3c8] sm:$0xff]
  %v344 = vld [vmem:[%s1 + $0x3d0] sm:$0xff]
  %v345 = vld [vmem:[%s1 + $0x3d8] sm:$0xff]
  %v346 = vld [vmem:[%s1 + $0x3e0] sm:$0xff]
  %v347 = vld [vmem:[%s1 + $0x3e8] sm:$0xff]
  %v348 = vld [vmem:[%s1 + $0x3f0] sm:$0xff]
  %v349 = vld [vmem:[%s1 + $0x3f8] sm:$0xff]
  %v350 = vld [vmem:[%s1 + $0x400] sm:$0xff]
  %v351 = vld [vmem:[%s1 + $0x408] sm:$0xff]
  %v352 = vld [vmem:[%s1 + $0x410] sm:$0xff]
  %v353 = vld [vmem:[%s1 + $0x418] sm:$0xff]
  %v354 = vld [vmem:[%s1 + $0x420] sm:$0xff]
  %v355 = vld [vmem:[%s1 + $0x428] sm:$0xff]
  %v356 = vld [vmem:[%s1 + $0x430] sm:$0xff]
  %v357 = vld [vmem:[%s1 + $0x438] sm:$0xff]
  %v358 = vld [vmem:[%s1 + $0x440] sm:$0xff]
  %v359 = vld [vmem:[%s1 + $0x448] sm:$0xff]
  %v360 = vld [vmem:[%s1 + $0x450] sm:$0xff]
  %v361 = vld [vmem:[%s1 + $0x458] sm:$0xff]
  %v362 = vld [vmem:[%s1 + $0x460] sm:$0xff]
  %v363 = vld [vmem:[%s1 + $0x468] sm:$0xff]
  %v364 = vld [vmem:[%s1 + $0x470] sm:$0xff]
  %v365 = vld [vmem:[%s1 + $0x478] sm:$0xff]
  %v366 = vld [vmem:[%s1 + $0x480] sm:$0xff]
  %v367 = vld [vmem:[%s1 + $0x488] sm:$0xff]
  %v368 = vld [vmem:[%s1 + $0x490] sm:$0xff]
  %v369 = vld [vmem:[%s1 + $0x498] sm:$0xff]
  %v370 = vld [vmem:[%s1 + $0x4a0] sm:$0xff]
  %v371 = vld [vmem:[%s1 + $0x4a8] sm:$0xff]
  %v372 = vld [vmem:[%s1 + $0x4b0] sm:$0xff]
  %v373 = vld [vmem:[%s1 + $0x4b8] sm:$0xff]
  %v374 = vld [vmem:[%s1 + $0x4c0] sm:$0xff]
  %v375 = vld [vmem:[%s1 + $0x4c8] sm:$0xff]
  %v376 = vld [vmem:[%s1 + $0x4d0] sm:$0xff]
  %v377 = vld [vmem:[%s1 + $0x4d8] sm:$0xff]
  %v378 = vld [vmem:[%s1 + $0x4e0] sm:$0xff]
  %v379 = vld [vmem:[%s1 + $0x4e8] sm:$0xff]
  %v380 = vld [vmem:[%s1 + $0x4f0] sm:$0xff]
  %v381 = vld [vmem:[%s1 + $0x4f8] sm:$0xff]
  %v382 = vld [vmem:[%s1 + $0x500] sm:$0xff]
  %v383 = vld [vmem:[%s1 + $0x508] sm:$0xff]
  %v384 = vld [vmem:[%s1 + $0x510] sm:$0xff]
  %v385 = vld [vmem:[%s1 + $0x518] sm:$0xff]
  %v386 = vld [vmem:[%s1 + $0x520] sm:$0xff]
  %v387 = vld [vmem:[%s1 + $0x528] sm:$0xff]
  %v388 = vld [vmem:[%s1 + $0x530] sm:$0xff]
  %v389 = vld [vmem:[%s1 + $0x538] sm:$0xff]
  %v390 = vld [vmem:[%s1 + $0x540] sm:$0xff]
  %v391 = vld [vmem:[%s1 + $0x548] sm:$0xff]
  %v392 = vld [vmem:[%s1 + $0x550] sm:$0xff]
  %v393 = vld [vmem:[%s1 + $0x558] sm:$0xff]
  %v394 = vld [vmem:[%s1 + $0x560] sm:$0xff]
  %v395 = vld [vmem:[%s1 + $0x568] sm:$0xff]
  %v396 = vld [vmem:[%s1 + $0x570] sm:$0xff]
  %v397 = vld [vmem:[%s1 + $0x578] sm:$0xff]
  %v398 = vld [vmem:[%s1 + $0x580] sm:$0xff]
  %v399 = vld [vmem:[%s1 + $0x588] sm:$0xff]
  %v400 = vld [vmem:[%s1 + $0x590] sm:$0xff]
  %v401 = vld [vmem:[%s1 + $0x598] sm:$0xff]
  %v402 = vld [vmem:[%s1 + $0x5a0] sm:$0xff]
  %v403 = vld [vmem:[%s1 + $0x5a8] sm:$0xff]
  %v404 = vld [vmem:[%s1 + $0x5b0] sm:$0xff]
  %v405 = vld [vmem:[%s1 + $0x5b8] sm:$0xff]
  %v406 = vld [vmem:[%s1 + $0x5c0] sm:$0xff]
  %v407 = vld [vmem:[%s1 + $0x5c8] sm:$0xff]
  %v408 = vld [vmem:[%s1 + $0x5d0] sm:$0xff]
  %v409 = vld [vmem:[%s1 + $0x5d8] sm:$0xff]
  %v410 = vld [vmem:[%s1 + $0x5e0] sm:$0xff]
  %v411 = vld [vmem:[%s1 + $0x5e8] sm:$0xff]
  %v412 = vld [vmem:[%s1 + $0x5f0] sm:$0xff]
  %v413 = vld [vmem:[%s1 + $0x5f8] sm:$0xff]
  %v414 = vld [vmem:[%s1 + $0x600] sm:$0xff]
  %v415 = vld [vmem:[%s1 + $0x608] sm:$0xff]
  %v416 = vld [vmem:[%s1 + $0x610] sm:$0xff]
  %v417 = vld [vmem:[%s1 + $0x618] sm:$0xff]
  %v418 = vld [vmem:[%s1 + $0x620] sm:$0xff]
  %v419 = vld [vmem:[%s1 + $0x628] sm:$0xff]
  %v420 = vld [vmem:[%s1 + $0x630] sm:$0xff]
  %v421 = vld [vmem:[%s1 + $0x638] sm:$0xff]
  %v422 = vld [vmem:[%s2] sm:$0x1]
  %v424 = vlaneseq
  %v425 = vshrl.u32 %v424, 7
  %v426 = vsub.s32 0, %v425
  %v427 = vrot.slane %v422, %v426
  %vm429 = vcmask 523264
  %v431 = vsel %vm429, %v26, 0
  %v434 = vsel %vm429, %v39, 0
  %v437 = vsel %vm429, %v52, 0
  %v440 = vsel %vm429, %v65, 0
  %v443 = vsel %vm429, %v78, 0
  %v446 = vsel %vm429, %v91, 0
  %v449 = vsel %vm429, %v104, 0
  %v452 = vsel %vm429, %v117, 0
  %v455 = vsel %vm429, %v130, 0
  %v458 = vsel %vm429, %v143, 0
  %v461 = vsel %vm429, %v156, 0
  %v464 = vsel %vm429, %v169, 0
  %v467 = vsel %vm429, %v182, 0
  %v470 = vsel %vm429, %v195, 0
  %v473 = vsel %vm429, %v208, 0
  %v476 = vsel %vm429, %v221, 0
  %478 = vmatprep.subr.mxu0 0.0
  %479 = vmatpush1.msra.mxu0 %v222
  %480 = vmatprep.subr.mxu0 0.0
  %481 = vmatpush1.msra.mxu0 %v223
  %482 = vmatprep.subr.mxu0 0.0
  %483 = vmatpush1.msra.mxu0 %v224
  %484 = vmatprep.subr.mxu0 0.0
  %485 = vmatpush1.msra.mxu0 %v225
  %486 = vmatprep.subr.mxu0 0.0
  %487 = vmatpush1.msra.mxu0 %v226
  %488 = vmatprep.subr.mxu0 0.0
  %489 = vmatpush1.msra.mxu0 %v227
  %490 = vmatprep.subr.mxu0 0.0
  %491 = vmatpush1.msra.mxu0 %v228
  %492 = vmatprep.subr.mxu0 0.0
  %493 = vmatpush1.msra.mxu0 %v229
  %494 = vmatprep.subr.mxu0 0.0
  %495 = vmatpush1.msra.mxu0 %v230
  %496 = vmatprep.subr.mxu0 0.0
  %497 = vmatpush1.msra.mxu0 %v231
  %498 = vmatprep.subr.mxu0 0.0
  %499 = vmatpush1.msra.mxu0 %v232
  %500 = vmatprep.subr.mxu0 0.0
  %501 = vmatpush1.msra.mxu0 %v233
  %502 = vmatprep.subr.mxu0 0.0
  %503 = vmatpush1.msra.mxu0 %v234
  %504 = vmatprep.subr.mxu0 0.0
  %505 = vmatpush1.msra.mxu0 %v235
  %506 = vmatprep.subr.mxu0 0.0
  %507 = vmatpush1.msra.mxu0 %v236
  %508 = vmatprep.subr.mxu0 0.0
  %509 = vmatpush1.msra.mxu0 %v237
  %510 = vmatprep.subr.mxu0 0.0
  %511 = vmatpush1.msra.mxu0 %v238
  %512 = vmatprep.subr.mxu0 0.0
  %513 = vmatpush1.msra.mxu0 %v239
  %514 = vmatprep.subr.mxu0 0.0
  %515 = vmatpush1.msra.mxu0 %v240
  %516 = vmatprep.subr.mxu0 0.0
  %517 = vmatpush1.msra.mxu0 %v241
  %518 = vmatprep.subr.mxu0 0.0
  %519 = vmatpush1.msra.mxu0 %v242
  %520 = vmatprep.subr.mxu0 0.0
  %521 = vmatpush1.msra.mxu0 %v243
  %522 = vmatprep.subr.mxu0 0.0
  %523 = vmatpush1.msra.mxu0 %v244
  %524 = vmatprep.subr.mxu0 0.0
  %525 = vmatpush1.msra.mxu0 %v245
  %526 = vmatprep.subr.mxu0 0.0
  %527 = vmatpush1.msra.mxu0 %v246
  %528 = vmatprep.subr.mxu0 0.0
  %529 = vmatpush1.msra.mxu0 %v247
  %530 = vmatprep.subr.mxu0 0.0
  %531 = vmatpush1.msra.mxu0 %v248
  %532 = vmatprep.subr.mxu0 0.0
  %533 = vmatpush1.msra.mxu0 %v249
  %534 = vmatprep.subr.mxu0 0.0
  %535 = vmatpush1.msra.mxu0 %v250
  %536 = vmatprep.subr.mxu0 0.0
  %537 = vmatpush1.msra.mxu0 %v251
  %538 = vmatprep.subr.mxu0 0.0
  %539 = vmatpush1.msra.mxu0 %v252
  %540 = vmatprep.subr.mxu0 0.0
  %541 = vmatpush1.msra.mxu0 %v253
  %542 = vmatprep.mubr.f32.mxu0 %v15
  %543 = vmatmul.mubr.f32.gmra.mrb[0].mxu0 %v14
  %v544 = vpop.f32.mrb[0].mxu0
  %v545 = vadd.f32 %v427, %v544
  %v546 = vpop.f32.mrb[0].mxu0
  %547 = vmatprep.mubr.f32.mxu0 %v28
  %548 = vmatmul.mubr.f32.gmra.mrb[0].mxu0 %v27
  %v549 = vpop.f32.mrb[0].mxu0
  %v550 = vadd.f32 %v427, %v549
  %v551 = vpop.f32.mrb[0].mxu0
  %552 = vmatprep.mubr.f32.mxu0 %v41
  %553 = vmatmul.mubr.f32.gmra.mrb[0].mxu0 %v40
  %v554 = vpop.f32.mrb[0].mxu0
  %v555 = vadd.f32 %v427, %v554
  %v556 = vpop.f32.mrb[0].mxu0
  %557 = vmatprep.mubr.f32.mxu0 %v54
  %558 = vmatmul.mubr.f32.gmra.mrb[0].mxu0 %v53
  %v559 = vpop.f32.mrb[0].mxu0
  %v560 = vadd.f32 %v427, %v559
  %v561 = vpop.f32.mrb[0].mxu0
  %562 = vmatprep.mubr.f32.mxu0 %v67
  %563 = vmatmul.mubr.f32.gmra.mrb[0].mxu0 %v66
  %v564 = vpop.f32.mrb[0].mxu0
  %v565 = vadd.f32 %v427, %v564
  %v566 = vpop.f32.mrb[0].mxu0
  %567 = vmatprep.mubr.f32.mxu0 %v80
  %568 = vmatmul.mubr.f32.gmra.mrb[0].mxu0 %v79
  %v569 = vpop.f32.mrb[0].mxu0
  %v570 = vadd.f32 %v427, %v569
  %v571 = vpop.f32.mrb[0].mxu0
  %572 = vmatprep.mubr.f32.mxu0 %v93
  %573 = vmatmul.mubr.f32.gmra.mrb[0].mxu0 %v92
  %v574 = vpop.f32.mrb[0].mxu0
  %v575 = vadd.f32 %v427, %v574
  %v576 = vpop.f32.mrb[0].mxu0
  %577 = vmatprep.mubr.f32.mxu0 %v106
  %578 = vmatmul.mubr.f32.gmra.mrb[0].mxu0 %v105
  %v579 = vpop.f32.mrb[0].mxu0
  %v580 = vadd.f32 %v427, %v579
  %v581 = vpop.f32.mrb[0].mxu0
  %582 = vmatprep.mubr.f32.mxu0 %v119
  %583 = vmatmul.mubr.f32.gmra.mrb[0].mxu0 %v118
  %v584 = vpop.f32.mrb[0].mxu0
  %v585 = vadd.f32 %v427, %v584
  %v586 = vpop.f32.mrb[0].mxu0
  %587 = vmatprep.mubr.f32.mxu0 %v132
  %588 = vmatmul.mubr.f32.gmra.mrb[0].mxu0 %v131
  %v589 = vpop.f32.mrb[0].mxu0
  %v590 = vadd.f32 %v427, %v589
  %v591 = vpop.f32.mrb[0].mxu0
  %592 = vmatprep.mubr.f32.mxu0 %v145
  %593 = vmatmul.mubr.f32.gmra.mrb[0].mxu0 %v144
  %v594 = vpop.f32.mrb[0].mxu0
  %v595 = vadd.f32 %v427, %v594
  %v596 = vpop.f32.mrb[0].mxu0
  %597 = vmatprep.mubr.f32.mxu0 %v158
  %598 = vmatmul.mubr.f32.gmra.mrb[0].mxu0 %v157
  %v599 = vpop.f32.mrb[0].mxu0
  %v600 = vadd.f32 %v427, %v599
  %v601 = vpop.f32.mrb[0].mxu0
  %602 = vmatprep.mubr.f32.mxu0 %v171
  %603 = vmatmul.mubr.f32.gmra.mrb[0].mxu0 %v170
  %v604 = vpop.f32.mrb[0].mxu0
  %v605 = vadd.f32 %v427, %v604
  %v606 = vpop.f32.mrb[0].mxu0
  %607 = vmatprep.mubr.f32.mxu0 %v184
  %608 = vmatmul.mubr.f32.gmra.mrb[0].mxu0 %v183
  %v609 = vpop.f32.mrb[0].mxu0
  %v610 = vadd.f32 %v427, %v609
  %v611 = vpop.f32.mrb[0].mxu0
  %612 = vmatprep.mubr.f32.mxu0 %v197
  %613 = vmatmul.mubr.f32.gmra.mrb[0].mxu0 %v196
  %v614 = vpop.f32.mrb[0].mxu0
  %v615 = vadd.f32 %v427, %v614
  %v616 = vpop.f32.mrb[0].mxu0
  %617 = vmatprep.mubr.f32.mxu0 %v210
  %618 = vmatmul.mubr.f32.gmra.mrb[0].mxu0 %v209
  %v619 = vpop.f32.mrb[0].mxu0
  %v620 = vadd.f32 %v427, %v619
  %v621 = vpop.f32.mrb[0].mxu0
  %622 = vdwg.mxu0
  %623 = vmatprep.subr.mxu0 0.0
  %624 = vmatpush1.msra.mxu0 %v254
  %625 = vmatprep.subr.mxu0 0.0
  %626 = vmatpush1.msra.mxu0 %v255
  %627 = vmatprep.subr.mxu0 0.0
  %628 = vmatpush1.msra.mxu0 %v256
  %629 = vmatprep.subr.mxu0 0.0
  %630 = vmatpush1.msra.mxu0 %v257
  %631 = vmatprep.subr.mxu0 0.0
  %632 = vmatpush1.msra.mxu0 %v258
  %633 = vmatprep.subr.mxu0 0.0
  %634 = vmatpush1.msra.mxu0 %v259
  %635 = vmatprep.subr.mxu0 0.0
  %636 = vmatpush1.msra.mxu0 %v260
  %637 = vmatprep.subr.mxu0 0.0
  %638 = vmatpush1.msra.mxu0 %v261
  %639 = vmatprep.subr.mxu0 0.0
  %640 = vmatpush1.msra.mxu0 %v262
  %641 = vmatprep.subr.mxu0 0.0
  %642 = vmatpush1.msra.mxu0 %v263
  %643 = vmatprep.subr.mxu0 0.0
  %644 = vmatpush1.msra.mxu0 %v264
  %645 = vmatprep.subr.mxu0 0.0
  %646 = vmatpush1.msra.mxu0 %v265
  %647 = vmatprep.subr.mxu0 0.0
  %648 = vmatpush1.msra.mxu0 %v266
  %649 = vmatprep.subr.mxu0 0.0
  %650 = vmatpush1.msra.mxu0 %v267
  %651 = vmatprep.subr.mxu0 0.0
  %652 = vmatpush1.msra.mxu0 %v268
  %653 = vmatprep.subr.mxu0 0.0
  %654 = vmatpush1.msra.mxu0 %v269
  %655 = vmatprep.subr.mxu0 0.0
  %656 = vmatpush1.msra.mxu0 %v270
  %657 = vmatprep.subr.mxu0 0.0
  %658 = vmatpush1.msra.mxu0 %v271
  %659 = vmatprep.subr.mxu0 0.0
  %660 = vmatpush1.msra.mxu0 %v272
  %661 = vmatprep.subr.mxu0 0.0
  %662 = vmatpush1.msra.mxu0 %v273
  %663 = vmatprep.subr.mxu0 0.0
  %664 = vmatpush1.msra.mxu0 %v274
  %665 = vmatprep.subr.mxu0 0.0
  %666 = vmatpush1.msra.mxu0 %v275
  %667 = vmatprep.subr.mxu0 0.0
  %668 = vmatpush1.msra.mxu0 %v276
  %669 = vmatprep.subr.mxu0 0.0
  %670 = vmatpush1.msra.mxu0 %v277
  %671 = vmatprep.subr.mxu0 0.0
  %672 = vmatpush1.msra.mxu0 %v278
  %673 = vmatprep.subr.mxu0 0.0
  %674 = vmatpush1.msra.mxu0 %v279
  %675 = vmatprep.subr.mxu0 0.0
  %676 = vmatpush1.msra.mxu0 %v280
  %677 = vmatprep.subr.mxu0 0.0
  %678 = vmatpush1.msra.mxu0 %v281
  %679 = vmatprep.subr.mxu0 0.0
  %680 = vmatpush1.msra.mxu0 %v282
  %681 = vmatprep.subr.mxu0 0.0
  %682 = vmatpush1.msra.mxu0 %v283
  %683 = vmatprep.subr.mxu0 0.0
  %684 = vmatpush1.msra.mxu0 %v284
  %685 = vmatprep.subr.mxu0 0.0
  %686 = vmatpush1.msra.mxu0 %v285
  %687 = vmatprep.mubr.f32.mxu0 %v17
  %688 = vmatmul.mubr.f32.gmra.mrb[0].mxu0 %v16
  %v689 = vpop.f32.mrb[0].mxu0
  %v690 = vadd.f32 %v545, %v689
  %v691 = vpop.f32.mrb[0].mxu0
  %692 = vmatprep.mubr.f32.mxu0 %v30
  %693 = vmatmul.mubr.f32.gmra.mrb[0].mxu0 %v29
  %v694 = vpop.f32.mrb[0].mxu0
  %v695 = vadd.f32 %v550, %v694
  %v696 = vpop.f32.mrb[0].mxu0
  %697 = vmatprep.mubr.f32.mxu0 %v43
  %698 = vmatmul.mubr.f32.gmra.mrb[0].mxu0 %v42
  %v699 = vpop.f32.mrb[0].mxu0
  %v700 = vadd.f32 %v555, %v699
  %v701 = vpop.f32.mrb[0].mxu0
  %702 = vmatprep.mubr.f32.mxu0 %v56
  %703 = vmatmul.mubr.f32.gmra.mrb[0].mxu0 %v55
  %v704 = vpop.f32.mrb[0].mxu0
  %v705 = vadd.f32 %v560, %v704
  %v706 = vpop.f32.mrb[0].mxu0
  %707 = vmatprep.mubr.f32.mxu0 %v69
  %708 = vmatmul.mubr.f32.gmra.mrb[0].mxu0 %v68
  %v709 = vpop.f32.mrb[0].mxu0
  %v710 = vadd.f32 %v565, %v709
  %v711 = vpop.f32.mrb[0].mxu0
  %712 = vmatprep.mubr.f32.mxu0 %v82
  %713 = vmatmul.mubr.f32.gmra.mrb[0].mxu0 %v81
  %v714 = vpop.f32.mrb[0].mxu0
  %v715 = vadd.f32 %v570, %v714
  %v716 = vpop.f32.mrb[0].mxu0
  %717 = vmatprep.mubr.f32.mxu0 %v95
  %718 = vmatmul.mubr.f32.gmra.mrb[0].mxu0 %v94
  %v719 = vpop.f32.mrb[0].mxu0
  %v720 = vadd.f32 %v575, %v719
  %v721 = vpop.f32.mrb[0].mxu0
  %722 = vmatprep.mubr.f32.mxu0 %v108
  %723 = vmatmul.mubr.f32.gmra.mrb[0].mxu0 %v107
  %v724 = vpop.f32.mrb[0].mxu0
  %v725 = vadd.f32 %v580, %v724
  %v726 = vpop.f32.mrb[0].mxu0
  %727 = vmatprep.mubr.f32.mxu0 %v121
  %728 = vmatmul.mubr.f32.gmra.mrb[0].mxu0 %v120
  %v729 = vpop.f32.mrb[0].mxu0
  %v730 = vadd.f32 %v585, %v729
  %v731 = vpop.f32.mrb[0].mxu0
  %732 = vmatprep.mubr.f32.mxu0 %v134
  %733 = vmatmul.mubr.f32.gmra.mrb[0].mxu0 %v133
  %v734 = vpop.f32.mrb[0].mxu0
  %v735 = vadd.f32 %v590, %v734
  %v736 = vpop.f32.mrb[0].mxu0
  %737 = vmatprep.mubr.f32.mxu0 %v147
  %738 = vmatmul.mubr.f32.gmra.mrb[0].mxu0 %v146
  %v739 = vpop.f32.mrb[0].mxu0
  %v740 = vadd.f32 %v595, %v739
  %v741 = vpop.f32.mrb[0].mxu0
  %742 = vmatprep.mubr.f32.mxu0 %v160
  %743 = vmatmul.mubr.f32.gmra.mrb[0].mxu0 %v159
  %v744 = vpop.f32.mrb[0].mxu0
  %v745 = vadd.f32 %v600, %v744
  %v746 = vpop.f32.mrb[0].mxu0
  %747 = vmatprep.mubr.f32.mxu0 %v173
  %748 = vmatmul.mubr.f32.gmra.mrb[0].mxu0 %v172
  %v749 = vpop.f32.mrb[0].mxu0
  %v750 = vadd.f32 %v605, %v749
  %v751 = vpop.f32.mrb[0].mxu0
  %752 = vmatprep.mubr.f32.mxu0 %v186
  %753 = vmatmul.mubr.f32.gmra.mrb[0].mxu0 %v185
  %v754 = vpop.f32.mrb[0].mxu0
  %v755 = vadd.f32 %v610, %v754
  %v756 = vpop.f32.mrb[0].mxu0
  %757 = vmatprep.mubr.f32.mxu0 %v199
  %758 = vmatmul.mubr.f32.gmra.mrb[0].mxu0 %v198
  %v759 = vpop.f32.mrb[0].mxu0
  %v760 = vadd.f32 %v615, %v759
  %v761 = vpop.f32.mrb[0].mxu0
  %762 = vmatprep.mubr.f32.mxu0 %v212
  %763 = vmatmul.mubr.f32.gmra.mrb[0].mxu0 %v211
  %v764 = vpop.f32.mrb[0].mxu0
  %v765 = vadd.f32 %v620, %v764
  %v766 = vpop.f32.mrb[0].mxu0
  %767 = vdwg.mxu0
  %768 = vmatprep.subr.mxu0 0.0
  %769 = vmatpush1.msra.mxu0 %v286
  %770 = vmatprep.subr.mxu0 0.0
  %771 = vmatpush1.msra.mxu0 %v287
  %772 = vmatprep.subr.mxu0 0.0
  %773 = vmatpush1.msra.mxu0 %v288
  %774 = vmatprep.subr.mxu0 0.0
  %775 = vmatpush1.msra.mxu0 %v289
  %776 = vmatprep.subr.mxu0 0.0
  %777 = vmatpush1.msra.mxu0 %v290
  %778 = vmatprep.subr.mxu0 0.0
  %779 = vmatpush1.msra.mxu0 %v291
  %780 = vmatprep.subr.mxu0 0.0
  %781 = vmatpush1.msra.mxu0 %v292
  %782 = vmatprep.subr.mxu0 0.0
  %783 = vmatpush1.msra.mxu0 %v293
  %784 = vmatprep.subr.mxu0 0.0
  %785 = vmatpush1.msra.mxu0 %v294
  %786 = vmatprep.subr.mxu0 0.0
  %787 = vmatpush1.msra.mxu0 %v295
  %788 = vmatprep.subr.mxu0 0.0
  %789 = vmatpush1.msra.mxu0 %v296
  %790 = vmatprep.subr.mxu0 0.0
  %791 = vmatpush1.msra.mxu0 %v297
  %792 = vmatprep.subr.mxu0 0.0
  %793 = vmatpush1.msra.mxu0 %v298
  %794 = vmatprep.subr.mxu0 0.0
  %795 = vmatpush1.msra.mxu0 %v299
  %796 = vmatprep.subr.mxu0 0.0
  %797 = vmatpush1.msra.mxu0 %v300
  %798 = vmatprep.subr.mxu0 0.0
  %799 = vmatpush1.msra.mxu0 %v301
  %800 = vmatprep.subr.mxu0 0.0
  %801 = vmatpush1.msra.mxu0 %v302
  %802 = vmatprep.subr.mxu0 0.0
  %803 = vmatpush1.msra.mxu0 %v303
  %804 = vmatprep.subr.mxu0 0.0
  %805 = vmatpush1.msra.mxu0 %v304
  %806 = vmatprep.subr.mxu0 0.0
  %807 = vmatpush1.msra.mxu0 %v305
  %808 = vmatprep.subr.mxu0 0.0
  %809 = vmatpush1.msra.mxu0 %v306
  %810 = vmatprep.subr.mxu0 0.0
  %811 = vmatpush1.msra.mxu0 %v307
  %812 = vmatprep.subr.mxu0 0.0
  %813 = vmatpush1.msra.mxu0 %v308
  %814 = vmatprep.subr.mxu0 0.0
  %815 = vmatpush1.msra.mxu0 %v309
  %816 = vmatprep.subr.mxu0 0.0
  %817 = vmatpush1.msra.mxu0 %v310
  %818 = vmatprep.subr.mxu0 0.0
  %819 = vmatpush1.msra.mxu0 %v311
  %820 = vmatprep.subr.mxu0 0.0
  %821 = vmatpush1.msra.mxu0 %v312
  %822 = vmatprep.subr.mxu0 0.0
  %823 = vmatpush1.msra.mxu0 %v313
  %824 = vmatprep.subr.mxu0 0.0
  %825 = vmatpush1.msra.mxu0 %v314
  %826 = vmatprep.subr.mxu0 0.0
  %827 = vmatpush1.msra.mxu0 %v315
  %828 = vmatprep.subr.mxu0 0.0
  %829 = vmatpush1.msra.mxu0 %v316
  %830 = vmatprep.subr.mxu0 0.0
  %831 = vmatpush1.msra.mxu0 %v317
  %832 = vmatprep.mubr.f32.mxu0 %v19
  %833 = vmatmul.mubr.f32.gmra.mrb[0].mxu0 %v18
  %v834 = vpop.f32.mrb[0].mxu0
  %v835 = vadd.f32 %v690, %v834
  %v836 = vpop.f32.mrb[0].mxu0
  %837 = vmatprep.mubr.f32.mxu0 %v32
  %838 = vmatmul.mubr.f32.gmra.mrb[0].mxu0 %v31
  %v839 = vpop.f32.mrb[0].mxu0
  %v840 = vadd.f32 %v695, %v839
  %v841 = vpop.f32.mrb[0].mxu0
  %842 = vmatprep.mubr.f32.mxu0 %v45
  %843 = vmatmul.mubr.f32.gmra.mrb[0].mxu0 %v44
  %v844 = vpop.f32.mrb[0].mxu0
  %v845 = vadd.f32 %v700, %v844
  %v846 = vpop.f32.mrb[0].mxu0
  %847 = vmatprep.mubr.f32.mxu0 %v58
  %848 = vmatmul.mubr.f32.gmra.mrb[0].mxu0 %v57
  %v849 = vpop.f32.mrb[0].mxu0
  %v850 = vadd.f32 %v705, %v849
  %v851 = vpop.f32.mrb[0].mxu0
  %852 = vmatprep.mubr.f32.mxu0 %v71
  %853 = vmatmul.mubr.f32.gmra.mrb[0].mxu0 %v70
  %v854 = vpop.f32.mrb[0].mxu0
  %v855 = vadd.f32 %v710, %v854
  %v856 = vpop.f32.mrb[0].mxu0
  %857 = vmatprep.mubr.f32.mxu0 %v84
  %858 = vmatmul.mubr.f32.gmra.mrb[0].mxu0 %v83
  %v859 = vpop.f32.mrb[0].mxu0
  %v860 = vadd.f32 %v715, %v859
  %v861 = vpop.f32.mrb[0].mxu0
  %862 = vmatprep.mubr.f32.mxu0 %v97
  %863 = vmatmul.mubr.f32.gmra.mrb[0].mxu0 %v96
  %v864 = vpop.f32.mrb[0].mxu0
  %v865 = vadd.f32 %v720, %v864
  %v866 = vpop.f32.mrb[0].mxu0
  %867 = vmatprep.mubr.f32.mxu0 %v110
  %868 = vmatmul.mubr.f32.gmra.mrb[0].mxu0 %v109
  %v869 = vpop.f32.mrb[0].mxu0
  %v870 = vadd.f32 %v725, %v869
  %v871 = vpop.f32.mrb[0].mxu0
  %872 = vmatprep.mubr.f32.mxu0 %v123
  %873 = vmatmul.mubr.f32.gmra.mrb[0].mxu0 %v122
  %v874 = vpop.f32.mrb[0].mxu0
  %v875 = vadd.f32 %v730, %v874
  %v876 = vpop.f32.mrb[0].mxu0
  %877 = vmatprep.mubr.f32.mxu0 %v136
  %878 = vmatmul.mubr.f32.gmra.mrb[0].mxu0 %v135
  %v879 = vpop.f32.mrb[0].mxu0
  %v880 = vadd.f32 %v735, %v879
  %v881 = vpop.f32.mrb[0].mxu0
  %882 = vmatprep.mubr.f32.mxu0 %v149
  %883 = vmatmul.mubr.f32.gmra.mrb[0].mxu0 %v148
  %v884 = vpop.f32.mrb[0].mxu0
  %v885 = vadd.f32 %v740, %v884
  %v886 = vpop.f32.mrb[0].mxu0
  %887 = vmatprep.mubr.f32.mxu0 %v162
  %888 = vmatmul.mubr.f32.gmra.mrb[0].mxu0 %v161
  %v889 = vpop.f32.mrb[0].mxu0
  %v890 = vadd.f32 %v745, %v889
  %v891 = vpop.f32.mrb[0].mxu0
  %892 = vmatprep.mubr.f32.mxu0 %v175
  %893 = vmatmul.mubr.f32.gmra.mrb[0].mxu0 %v174
  %v894 = vpop.f32.mrb[0].mxu0
  %v895 = vadd.f32 %v750, %v894
  %v896 = vpop.f32.mrb[0].mxu0
  %897 = vmatprep.mubr.f32.mxu0 %v188
  %898 = vmatmul.mubr.f32.gmra.mrb[0].mxu0 %v187
  %v899 = vpop.f32.mrb[0].mxu0
  %v900 = vadd.f32 %v755, %v899
  %v901 = vpop.f32.mrb[0].mxu0
  %902 = vmatprep.mubr.f32.mxu0 %v201
  %903 = vmatmul.mubr.f32.gmra.mrb[0].mxu0 %v200
  %v904 = vpop.f32.mrb[0].mxu0
  %v905 = vadd.f32 %v760, %v904
  %v906 = vpop.f32.mrb[0].mxu0
  %907 = vmatprep.mubr.f32.mxu0 %v214
  %908 = vmatmul.mubr.f32.gmra.mrb[0].mxu0 %v213
  %v909 = vpop.f32.mrb[0].mxu0
  %v910 = vadd.f32 %v765, %v909
  %v911 = vpop.f32.mrb[0].mxu0
  %912 = vdwg.mxu0
  %913 = vmatprep.subr.mxu0 0.0
  %914 = vmatpush1.msra.mxu0 %v318
  %915 = vmatprep.subr.mxu0 0.0
  %916 = vmatpush1.msra.mxu0 %v319
  %917 = vmatprep.subr.mxu0 0.0
  %918 = vmatpush1.msra.mxu0 %v320
  %919 = vmatprep.subr.mxu0 0.0
  %920 = vmatpush1.msra.mxu0 %v321
  %921 = vmatprep.subr.mxu0 0.0
  %922 = vmatpush1.msra.mxu0 %v322
  %923 = vmatprep.subr.mxu0 0.0
  %924 = vmatpush1.msra.mxu0 %v323
  %925 = vmatprep.subr.mxu0 0.0
  %926 = vmatpush1.msra.mxu0 %v324
  %927 = vmatprep.subr.mxu0 0.0
  %928 = vmatpush1.msra.mxu0 %v325
  %929 = vmatprep.subr.mxu0 0.0
  %930 = vmatpush1.msra.mxu0 %v326
  %931 = vmatprep.subr.mxu0 0.0
  %932 = vmatpush1.msra.mxu0 %v327
  %933 = vmatprep.subr.mxu0 0.0
  %934 = vmatpush1.msra.mxu0 %v328
  %935 = vmatprep.subr.mxu0 0.0
  %936 = vmatpush1.msra.mxu0 %v329
  %937 = vmatprep.subr.mxu0 0.0
  %938 = vmatpush1.msra.mxu0 %v330
  %939 = vmatprep.subr.mxu0 0.0
  %940 = vmatpush1.msra.mxu0 %v331
  %941 = vmatprep.subr.mxu0 0.0
  %942 = vmatpush1.msra.mxu0 %v332
  %943 = vmatprep.subr.mxu0 0.0
  %944 = vmatpush1.msra.mxu0 %v333
  %945 = vmatprep.subr.mxu0 0.0
  %946 = vmatpush1.msra.mxu0 %v334
  %947 = vmatprep.subr.mxu0 0.0
  %948 = vmatpush1.msra.mxu0 %v335
  %949 = vmatprep.subr.mxu0 0.0
  %950 = vmatpush1.msra.mxu0 %v336
  %951 = vmatprep.subr.mxu0 0.0
  %952 = vmatpush1.msra.mxu0 %v337
  %953 = vmatprep.subr.mxu0 0.0
  %954 = vmatpush1.msra.mxu0 %v338
  %955 = vmatprep.subr.mxu0 0.0
  %956 = vmatpush1.msra.mxu0 %v339
  %957 = vmatprep.subr.mxu0 0.0
  %958 = vmatpush1.msra.mxu0 %v340
  %959 = vmatprep.subr.mxu0 0.0
  %960 = vmatpush1.msra.mxu0 %v341
  %961 = vmatprep.subr.mxu0 0.0
  %962 = vmatpush1.msra.mxu0 %v342
  %963 = vmatprep.subr.mxu0 0.0
  %964 = vmatpush1.msra.mxu0 %v343
  %965 = vmatprep.subr.mxu0 0.0
  %966 = vmatpush1.msra.mxu0 %v344
  %967 = vmatprep.subr.mxu0 0.0
  %968 = vmatpush1.msra.mxu0 %v345
  %969 = vmatprep.subr.mxu0 0.0
  %970 = vmatpush1.msra.mxu0 %v346
  %971 = vmatprep.subr.mxu0 0.0
  %972 = vmatpush1.msra.mxu0 %v347
  %973 = vmatprep.subr.mxu0 0.0
  %974 = vmatpush1.msra.mxu0 %v348
  %975 = vmatprep.subr.mxu0 0.0
  %976 = vmatpush1.msra.mxu0 %v349
  %977 = vmatprep.mubr.f32.mxu0 %v21
  %978 = vmatmul.mubr.f32.gmra.mrb[0].mxu0 %v20
  %v979 = vpop.f32.mrb[0].mxu0
  %v980 = vadd.f32 %v835, %v979
  %v981 = vpop.f32.mrb[0].mxu0
  %982 = vmatprep.mubr.f32.mxu0 %v34
  %983 = vmatmul.mubr.f32.gmra.mrb[0].mxu0 %v33
  %v984 = vpop.f32.mrb[0].mxu0
  %v985 = vadd.f32 %v840, %v984
  %v986 = vpop.f32.mrb[0].mxu0
  %987 = vmatprep.mubr.f32.mxu0 %v47
  %988 = vmatmul.mubr.f32.gmra.mrb[0].mxu0 %v46
  %v989 = vpop.f32.mrb[0].mxu0
  %v990 = vadd.f32 %v845, %v989
  %v991 = vpop.f32.mrb[0].mxu0
  %992 = vmatprep.mubr.f32.mxu0 %v60
  %993 = vmatmul.mubr.f32.gmra.mrb[0].mxu0 %v59
  %v994 = vpop.f32.mrb[0].mxu0
  %v995 = vadd.f32 %v850, %v994
  %v996 = vpop.f32.mrb[0].mxu0
  %997 = vmatprep.mubr.f32.mxu0 %v73
  %998 = vmatmul.mubr.f32.gmra.mrb[0].mxu0 %v72
  %v999 = vpop.f32.mrb[0].mxu0
  %v1000 = vadd.f32 %v855, %v999
  %v1001 = vpop.f32.mrb[0].mxu0
  %1002 = vmatprep.mubr.f32.mxu0 %v86
  %1003 = vmatmul.mubr.f32.gmra.mrb[0].mxu0 %v85
  %v1004 = vpop.f32.mrb[0].mxu0
  %v1005 = vadd.f32 %v860, %v1004
  %v1006 = vpop.f32.mrb[0].mxu0
  %1007 = vmatprep.mubr.f32.mxu0 %v99
  %1008 = vmatmul.mubr.f32.gmra.mrb[0].mxu0 %v98
  %v1009 = vpop.f32.mrb[0].mxu0
  %v1010 = vadd.f32 %v865, %v1009
  %v1011 = vpop.f32.mrb[0].mxu0
  %1012 = vmatprep.mubr.f32.mxu0 %v112
  %1013 = vmatmul.mubr.f32.gmra.mrb[0].mxu0 %v111
  %v1014 = vpop.f32.mrb[0].mxu0
  %v1015 = vadd.f32 %v870, %v1014
  %v1016 = vpop.f32.mrb[0].mxu0
  %1017 = vmatprep.mubr.f32.mxu0 %v125
  %1018 = vmatmul.mubr.f32.gmra.mrb[0].mxu0 %v124
  %v1019 = vpop.f32.mrb[0].mxu0
  %v1020 = vadd.f32 %v875, %v1019
  %v1021 = vpop.f32.mrb[0].mxu0
  %1022 = vmatprep.mubr.f32.mxu0 %v138
  %1023 = vmatmul.mubr.f32.gmra.mrb[0].mxu0 %v137
  %v1024 = vpop.f32.mrb[0].mxu0
  %v1025 = vadd.f32 %v880, %v1024
  %v1026 = vpop.f32.mrb[0].mxu0
  %1027 = vmatprep.mubr.f32.mxu0 %v151
  %1028 = vmatmul.mubr.f32.gmra.mrb[0].mxu0 %v150
  %v1029 = vpop.f32.mrb[0].mxu0
  %v1030 = vadd.f32 %v885, %v1029
  %v1031 = vpop.f32.mrb[0].mxu0
  %1032 = vmatprep.mubr.f32.mxu0 %v164
  %1033 = vmatmul.mubr.f32.gmra.mrb[0].mxu0 %v163
  %v1034 = vpop.f32.mrb[0].mxu0
  %v1035 = vadd.f32 %v890, %v1034
  %v1036 = vpop.f32.mrb[0].mxu0
  %1037 = vmatprep.mubr.f32.mxu0 %v177
  %1038 = vmatmul.mubr.f32.gmra.mrb[0].mxu0 %v176
  %v1039 = vpop.f32.mrb[0].mxu0
  %v1040 = vadd.f32 %v895, %v1039
  %v1041 = vpop.f32.mrb[0].mxu0
  %1042 = vmatprep.mubr.f32.mxu0 %v190
  %1043 = vmatmul.mubr.f32.gmra.mrb[0].mxu0 %v189
  %v1044 = vpop.f32.mrb[0].mxu0
  %v1045 = vadd.f32 %v900, %v1044
  %v1046 = vpop.f32.mrb[0].mxu0
  %1047 = vmatprep.mubr.f32.mxu0 %v203
  %1048 = vmatmul.mubr.f32.gmra.mrb[0].mxu0 %v202
  %v1049 = vpop.f32.mrb[0].mxu0
  %v1050 = vadd.f32 %v905, %v1049
  %v1051 = vpop.f32.mrb[0].mxu0
  %1052 = vmatprep.mubr.f32.mxu0 %v216
  %1053 = vmatmul.mubr.f32.gmra.mrb[0].mxu0 %v215
  %v1054 = vpop.f32.mrb[0].mxu0
  %v1055 = vadd.f32 %v910, %v1054
  %v1056 = vpop.f32.mrb[0].mxu0
  %1057 = vdwg.mxu0
  %1058 = vmatprep.subr.mxu0 0.0
  %1059 = vmatpush1.msra.mxu0 %v350
  %1060 = vmatprep.subr.mxu0 0.0
  %1061 = vmatpush1.msra.mxu0 %v351
  %1062 = vmatprep.subr.mxu0 0.0
  %1063 = vmatpush1.msra.mxu0 %v352
  %1064 = vmatprep.subr.mxu0 0.0
  %1065 = vmatpush1.msra.mxu0 %v353
  %1066 = vmatprep.subr.mxu0 0.0
  %1067 = vmatpush1.msra.mxu0 %v354
  %1068 = vmatprep.subr.mxu0 0.0
  %1069 = vmatpush1.msra.mxu0 %v355
  %1070 = vmatprep.subr.mxu0 0.0
  %1071 = vmatpush1.msra.mxu0 %v356
  %1072 = vmatprep.subr.mxu0 0.0
  %1073 = vmatpush1.msra.mxu0 %v357
  %1074 = vmatprep.subr.mxu0 0.0
  %1075 = vmatpush1.msra.mxu0 %v358
  %1076 = vmatprep.subr.mxu0 0.0
  %1077 = vmatpush1.msra.mxu0 %v359
  %1078 = vmatprep.subr.mxu0 0.0
  %1079 = vmatpush1.msra.mxu0 %v360
  %1080 = vmatprep.subr.mxu0 0.0
  %1081 = vmatpush1.msra.mxu0 %v361
  %1082 = vmatprep.subr.mxu0 0.0
  %1083 = vmatpush1.msra.mxu0 %v362
  %1084 = vmatprep.subr.mxu0 0.0
  %1085 = vmatpush1.msra.mxu0 %v363
  %1086 = vmatprep.subr.mxu0 0.0
  %1087 = vmatpush1.msra.mxu0 %v364
  %1088 = vmatprep.subr.mxu0 0.0
  %1089 = vmatpush1.msra.mxu0 %v365
  %1090 = vmatprep.subr.mxu0 0.0
  %1091 = vmatpush1.msra.mxu0 %v366
  %1092 = vmatprep.subr.mxu0 0.0
  %1093 = vmatpush1.msra.mxu0 %v367
  %1094 = vmatprep.subr.mxu0 0.0
  %1095 = vmatpush1.msra.mxu0 %v368
  %1096 = vmatprep.subr.mxu0 0.0
  %1097 = vmatpush1.msra.mxu0 %v369
  %1098 = vmatprep.subr.mxu0 0.0
  %1099 = vmatpush1.msra.mxu0 %v370
  %1100 = vmatprep.subr.mxu0 0.0
  %1101 = vmatpush1.msra.mxu0 %v371
  %1102 = vmatprep.subr.mxu0 0.0
  %1103 = vmatpush1.msra.mxu0 %v372
  %1104 = vmatprep.subr.mxu0 0.0
  %1105 = vmatpush1.msra.mxu0 %v373
  %1106 = vmatprep.subr.mxu0 0.0
  %1107 = vmatpush1.msra.mxu0 %v374
  %1108 = vmatprep.subr.mxu0 0.0
  %1109 = vmatpush1.msra.mxu0 %v375
  %1110 = vmatprep.subr.mxu0 0.0
  %1111 = vmatpush1.msra.mxu0 %v376
  %1112 = vmatprep.subr.mxu0 0.0
  %1113 = vmatpush1.msra.mxu0 %v377
  %1114 = vmatprep.subr.mxu0 0.0
  %1115 = vmatpush1.msra.mxu0 %v378
  %1116 = vmatprep.subr.mxu0 0.0
  %1117 = vmatpush1.msra.mxu0 %v379
  %1118 = vmatprep.subr.mxu0 0.0
  %1119 = vmatpush1.msra.mxu0 %v380
  %1120 = vmatprep.subr.mxu0 0.0
  %1121 = vmatpush1.msra.mxu0 %v381
  %1122 = vmatprep.mubr.f32.mxu0 %v23
  %1123 = vmatmul.mubr.f32.gmra.mrb[0].mxu0 %v22
  %v1124 = vpop.f32.mrb[0].mxu0
  %v1125 = vadd.f32 %v980, %v1124
  %v1126 = vpop.f32.mrb[0].mxu0
  %1127 = vmatprep.mubr.f32.mxu0 %v36
  %1128 = vmatmul.mubr.f32.gmra.mrb[0].mxu0 %v35
  %v1129 = vpop.f32.mrb[0].mxu0
  %v1130 = vadd.f32 %v985, %v1129
  %v1131 = vpop.f32.mrb[0].mxu0
  %1132 = vmatprep.mubr.f32.mxu0 %v49
  %1133 = vmatmul.mubr.f32.gmra.mrb[0].mxu0 %v48
  %v1134 = vpop.f32.mrb[0].mxu0
  %v1135 = vadd.f32 %v990, %v1134
  %v1136 = vpop.f32.mrb[0].mxu0
  %1137 = vmatprep.mubr.f32.mxu0 %v62
  %1138 = vmatmul.mubr.f32.gmra.mrb[0].mxu0 %v61
  %v1139 = vpop.f32.mrb[0].mxu0
  %v1140 = vadd.f32 %v995, %v1139
  %v1141 = vpop.f32.mrb[0].mxu0
  %1142 = vmatprep.mubr.f32.mxu0 %v75
  %1143 = vmatmul.mubr.f32.gmra.mrb[0].mxu0 %v74
  %v1144 = vpop.f32.mrb[0].mxu0
  %v1145 = vadd.f32 %v1000, %v1144
  %v1146 = vpop.f32.mrb[0].mxu0
  %1147 = vmatprep.mubr.f32.mxu0 %v88
  %1148 = vmatmul.mubr.f32.gmra.mrb[0].mxu0 %v87
  %v1149 = vpop.f32.mrb[0].mxu0
  %v1150 = vadd.f32 %v1005, %v1149
  %v1151 = vpop.f32.mrb[0].mxu0
  %1152 = vmatprep.mubr.f32.mxu0 %v101
  %1153 = vmatmul.mubr.f32.gmra.mrb[0].mxu0 %v100
  %v1154 = vpop.f32.mrb[0].mxu0
  %v1155 = vadd.f32 %v1010, %v1154
  %v1156 = vpop.f32.mrb[0].mxu0
  %1157 = vmatprep.mubr.f32.mxu0 %v114
  %1158 = vmatmul.mubr.f32.gmra.mrb[0].mxu0 %v113
  %v1159 = vpop.f32.mrb[0].mxu0
  %v1160 = vadd.f32 %v1015, %v1159
  %v1161 = vpop.f32.mrb[0].mxu0
  %1162 = vmatprep.mubr.f32.mxu0 %v127
  %1163 = vmatmul.mubr.f32.gmra.mrb[0].mxu0 %v126
  %v1164 = vpop.f32.mrb[0].mxu0
  %v1165 = vadd.f32 %v1020, %v1164
  %v1166 = vpop.f32.mrb[0].mxu0
  %1167 = vmatprep.mubr.f32.mxu0 %v140
  %1168 = vmatmul.mubr.f32.gmra.mrb[0].mxu0 %v139
  %v1169 = vpop.f32.mrb[0].mxu0
  %v1170 = vadd.f32 %v1025, %v1169
  %v1171 = vpop.f32.mrb[0].mxu0
  %1172 = vmatprep.mubr.f32.mxu0 %v153
  %1173 = vmatmul.mubr.f32.gmra.mrb[0].mxu0 %v152
  %v1174 = vpop.f32.mrb[0].mxu0
  %v1175 = vadd.f32 %v1030, %v1174
  %v1176 = vpop.f32.mrb[0].mxu0
  %1177 = vmatprep.mubr.f32.mxu0 %v166
  %1178 = vmatmul.mubr.f32.gmra.mrb[0].mxu0 %v165
  %v1179 = vpop.f32.mrb[0].mxu0
  %v1180 = vadd.f32 %v1035, %v1179
  %v1181 = vpop.f32.mrb[0].mxu0
  %1182 = vmatprep.mubr.f32.mxu0 %v179
  %1183 = vmatmul.mubr.f32.gmra.mrb[0].mxu0 %v178
  %v1184 = vpop.f32.mrb[0].mxu0
  %v1185 = vadd.f32 %v1040, %v1184
  %v1186 = vpop.f32.mrb[0].mxu0
  %1187 = vmatprep.mubr.f32.mxu0 %v192
  %1188 = vmatmul.mubr.f32.gmra.mrb[0].mxu0 %v191
  %v1189 = vpop.f32.mrb[0].mxu0
  %v1190 = vadd.f32 %v1045, %v1189
  %v1191 = vpop.f32.mrb[0].mxu0
  %1192 = vmatprep.mubr.f32.mxu0 %v205
  %1193 = vmatmul.mubr.f32.gmra.mrb[0].mxu0 %v204
  %v1194 = vpop.f32.mrb[0].mxu0
  %v1195 = vadd.f32 %v1050, %v1194
  %v1196 = vpop.f32.mrb[0].mxu0
  %1197 = vmatprep.mubr.f32.mxu0 %v218
  %1198 = vmatmul.mubr.f32.gmra.mrb[0].mxu0 %v217
  %v1199 = vpop.f32.mrb[0].mxu0
  %v1200 = vadd.f32 %v1055, %v1199
  %v1201 = vpop.f32.mrb[0].mxu0
  %1202 = vdwg.mxu0
  %1203 = vmatprep.subr.mxu0 0.0
  %1204 = vmatpush1.msra.mxu0 %v382
  %1205 = vmatprep.subr.mxu0 0.0
  %1206 = vmatpush1.msra.mxu0 %v383
  %1207 = vmatprep.subr.mxu0 0.0
  %1208 = vmatpush1.msra.mxu0 %v384
  %1209 = vmatprep.subr.mxu0 0.0
  %1210 = vmatpush1.msra.mxu0 %v385
  %1211 = vmatprep.subr.mxu0 0.0
  %1212 = vmatpush1.msra.mxu0 %v386
  %1213 = vmatprep.subr.mxu0 0.0
  %1214 = vmatpush1.msra.mxu0 %v387
  %1215 = vmatprep.subr.mxu0 0.0
  %1216 = vmatpush1.msra.mxu0 %v388
  %1217 = vmatprep.subr.mxu0 0.0
  %1218 = vmatpush1.msra.mxu0 %v389
  %1219 = vmatprep.subr.mxu0 0.0
  %1220 = vmatpush1.msra.mxu0 %v390
  %1221 = vmatprep.subr.mxu0 0.0
  %1222 = vmatpush1.msra.mxu0 %v391
  %1223 = vmatprep.subr.mxu0 0.0
  %1224 = vmatpush1.msra.mxu0 %v392
  %1225 = vmatprep.subr.mxu0 0.0
  %1226 = vmatpush1.msra.mxu0 %v393
  %1227 = vmatprep.subr.mxu0 0.0
  %1228 = vmatpush1.msra.mxu0 %v394
  %1229 = vmatprep.subr.mxu0 0.0
  %1230 = vmatpush1.msra.mxu0 %v395
  %1231 = vmatprep.subr.mxu0 0.0
  %1232 = vmatpush1.msra.mxu0 %v396
  %1233 = vmatprep.subr.mxu0 0.0
  %1234 = vmatpush1.msra.mxu0 %v397
  %1235 = vmatprep.subr.mxu0 0.0
  %1236 = vmatpush1.msra.mxu0 %v398
  %1237 = vmatprep.subr.mxu0 0.0
  %1238 = vmatpush1.msra.mxu0 %v399
  %1239 = vmatprep.subr.mxu0 0.0
  %1240 = vmatpush1.msra.mxu0 %v400
  %1241 = vmatprep.subr.mxu0 0.0
  %1242 = vmatpush1.msra.mxu0 %v401
  %1243 = vmatprep.subr.mxu0 0.0
  %1244 = vmatpush1.msra.mxu0 %v402
  %1245 = vmatprep.subr.mxu0 0.0
  %1246 = vmatpush1.msra.mxu0 %v403
  %1247 = vmatprep.subr.mxu0 0.0
  %1248 = vmatpush1.msra.mxu0 %v404
  %1249 = vmatprep.subr.mxu0 0.0
  %1250 = vmatpush1.msra.mxu0 %v405
  %1251 = vmatprep.subr.mxu0 0.0
  %1252 = vmatpush1.msra.mxu0 %v406
  %1253 = vmatprep.subr.mxu0 0.0
  %1254 = vmatpush1.msra.mxu0 %v407
  %1255 = vmatprep.subr.mxu0 0.0
  %1256 = vmatpush1.msra.mxu0 %v408
  %1257 = vmatprep.subr.mxu0 0.0
  %1258 = vmatpush1.msra.mxu0 %v409
  %1259 = vmatprep.subr.mxu0 0.0
  %1260 = vmatpush1.msra.mxu0 %v410
  %1261 = vmatprep.subr.mxu0 0.0
  %1262 = vmatpush1.msra.mxu0 %v411
  %1263 = vmatprep.subr.mxu0 0.0
  %1264 = vmatpush1.msra.mxu0 %v412
  %1265 = vmatprep.subr.mxu0 0.0
  %1266 = vmatpush1.msra.mxu0 %v413
  %1267 = vmatprep.mubr.f32.mxu0 %v25
  %1268 = vmatmul.mubr.f32.gmra.mrb[0].mxu0 %v24
  %v1269 = vpop.f32.mrb[0].mxu0
  %v1270 = vadd.f32 %v1125, %v1269
  %v1271 = vpop.f32.mrb[0].mxu0
  %1272 = vmatprep.mubr.f32.mxu0 %v38
  %1273 = vmatmul.mubr.f32.gmra.mrb[0].mxu0 %v37
  %v1274 = vpop.f32.mrb[0].mxu0
  %v1275 = vadd.f32 %v1130, %v1274
  %v1276 = vpop.f32.mrb[0].mxu0
  %1277 = vmatprep.mubr.f32.mxu0 %v51
  %1278 = vmatmul.mubr.f32.gmra.mrb[0].mxu0 %v50
  %v1279 = vpop.f32.mrb[0].mxu0
  %v1280 = vadd.f32 %v1135, %v1279
  %v1281 = vpop.f32.mrb[0].mxu0
  %1282 = vmatprep.mubr.f32.mxu0 %v64
  %1283 = vmatmul.mubr.f32.gmra.mrb[0].mxu0 %v63
  %v1284 = vpop.f32.mrb[0].mxu0
  %v1285 = vadd.f32 %v1140, %v1284
  %v1286 = vpop.f32.mrb[0].mxu0
  %1287 = vmatprep.mubr.f32.mxu0 %v77
  %1288 = vmatmul.mubr.f32.gmra.mrb[0].mxu0 %v76
  %v1289 = vpop.f32.mrb[0].mxu0
  %v1290 = vadd.f32 %v1145, %v1289
  %v1291 = vpop.f32.mrb[0].mxu0
  %1292 = vmatprep.mubr.f32.mxu0 %v90
  %1293 = vmatmul.mubr.f32.gmra.mrb[0].mxu0 %v89
  %v1294 = vpop.f32.mrb[0].mxu0
  %v1295 = vadd.f32 %v1150, %v1294
  %v1296 = vpop.f32.mrb[0].mxu0
  %1297 = vmatprep.mubr.f32.mxu0 %v103
  %1298 = vmatmul.mubr.f32.gmra.mrb[0].mxu0 %v102
  %v1299 = vpop.f32.mrb[0].mxu0
  %v1300 = vadd.f32 %v1155, %v1299
  %v1301 = vpop.f32.mrb[0].mxu0
  %1302 = vmatprep.mubr.f32.mxu0 %v116
  %1303 = vmatmul.mubr.f32.gmra.mrb[0].mxu0 %v115
  %v1304 = vpop.f32.mrb[0].mxu0
  %v1305 = vadd.f32 %v1160, %v1304
  %v1306 = vpop.f32.mrb[0].mxu0
  %1307 = vmatprep.mubr.f32.mxu0 %v129
  %1308 = vmatmul.mubr.f32.gmra.mrb[0].mxu0 %v128
  %v1309 = vpop.f32.mrb[0].mxu0
  %v1310 = vadd.f32 %v1165, %v1309
  %v1311 = vpop.f32.mrb[0].mxu0
  %1312 = vmatprep.mubr.f32.mxu0 %v142
  %1313 = vmatmul.mubr.f32.gmra.mrb[0].mxu0 %v141
  %v1314 = vpop.f32.mrb[0].mxu0
  %v1315 = vadd.f32 %v1170, %v1314
  %v1316 = vpop.f32.mrb[0].mxu0
  %1317 = vmatprep.mubr.f32.mxu0 %v155
  %1318 = vmatmul.mubr.f32.gmra.mrb[0].mxu0 %v154
  %v1319 = vpop.f32.mrb[0].mxu0
  %v1320 = vadd.f32 %v1175, %v1319
  %v1321 = vpop.f32.mrb[0].mxu0
  %1322 = vmatprep.mubr.f32.mxu0 %v168
  %1323 = vmatmul.mubr.f32.gmra.mrb[0].mxu0 %v167
  %v1324 = vpop.f32.mrb[0].mxu0
  %v1325 = vadd.f32 %v1180, %v1324
  %v1326 = vpop.f32.mrb[0].mxu0
  %1327 = vmatprep.mubr.f32.mxu0 %v181
  %1328 = vmatmul.mubr.f32.gmra.mrb[0].mxu0 %v180
  %v1329 = vpop.f32.mrb[0].mxu0
  %v1330 = vadd.f32 %v1185, %v1329
  %v1331 = vpop.f32.mrb[0].mxu0
  %1332 = vmatprep.mubr.f32.mxu0 %v194
  %1333 = vmatmul.mubr.f32.gmra.mrb[0].mxu0 %v193
  %v1334 = vpop.f32.mrb[0].mxu0
  %v1335 = vadd.f32 %v1190, %v1334
  %v1336 = vpop.f32.mrb[0].mxu0
  %1337 = vmatprep.mubr.f32.mxu0 %v207
  %1338 = vmatmul.mubr.f32.gmra.mrb[0].mxu0 %v206
  %v1339 = vpop.f32.mrb[0].mxu0
  %v1340 = vadd.f32 %v1195, %v1339
  %v1341 = vpop.f32.mrb[0].mxu0
  %1342 = vmatprep.mubr.f32.mxu0 %v220
  %1343 = vmatmul.mubr.f32.gmra.mrb[0].mxu0 %v219
  %v1344 = vpop.f32.mrb[0].mxu0
  %v1345 = vadd.f32 %v1200, %v1344
  %v1346 = vpop.f32.mrb[0].mxu0
  %1347 = vdwg.mxu0
  %1348 = vmatprep.subr.mxu0 0.0
  %1349 = vmatpush1.msra.mxu0 %v414
  %1350 = vmatprep.subr.mxu0 0.0
  %1351 = vmatpush1.msra.mxu0 %v415
  %1352 = vmatprep.subr.mxu0 0.0
  %1353 = vmatpush1.msra.mxu0 %v416
  %1354 = vmatprep.subr.mxu0 0.0
  %1355 = vmatpush1.msra.mxu0 %v417
  %1356 = vmatprep.subr.mxu0 0.0
  %1357 = vmatpush1.msra.mxu0 %v418
  %1358 = vmatprep.subr.mxu0 0.0
  %1359 = vmatpush1.msra.mxu0 %v419
  %1360 = vmatprep.subr.mxu0 0.0
  %1361 = vmatpush1.msra.mxu0 %v420
  %1362 = vmatprep.subr.mxu0 0.0
  %1363 = vmatpush1.msra.mxu0 %v421
  %1364 = vmatprep.subr.mxu0 0.0
  %1365 = vmatpush1.msra.mxu0 0.0
  %1366 = vmatprep.subr.mxu0 0.0
  %1367 = vmatpush1.msra.mxu0 0.0
  %1368 = vmatprep.subr.mxu0 0.0
  %1369 = vmatpush1.msra.mxu0 0.0
  %1370 = vmatprep.subr.mxu0 0.0
  %1371 = vmatpush1.msra.mxu0 0.0
  %1372 = vmatprep.subr.mxu0 0.0
  %1373 = vmatpush1.msra.mxu0 0.0
  %1374 = vmatprep.subr.mxu0 0.0
  %1375 = vmatpush1.msra.mxu0 0.0
  %1376 = vmatprep.subr.mxu0 0.0
  %1377 = vmatpush1.msra.mxu0 0.0
  %1378 = vmatprep.subr.mxu0 0.0
  %1379 = vmatpush1.msra.mxu0 0.0
  %1380 = vmatprep.subr.mxu0 0.0
  %1381 = vmatpush1.msra.mxu0 0.0
  %1382 = vmatprep.subr.mxu0 0.0
  %1383 = vmatpush1.msra.mxu0 0.0
  %1384 = vmatprep.subr.mxu0 0.0
  %1385 = vmatpush1.msra.mxu0 0.0
  %1386 = vmatprep.subr.mxu0 0.0
  %1387 = vmatpush1.msra.mxu0 0.0
  %1388 = vmatprep.subr.mxu0 0.0
  %1389 = vmatpush1.msra.mxu0 0.0
  %1390 = vmatprep.subr.mxu0 0.0
  %1391 = vmatpush1.msra.mxu0 0.0
  %1392 = vmatprep.subr.mxu0 0.0
  %1393 = vmatpush1.msra.mxu0 0.0
  %1394 = vmatprep.subr.mxu0 0.0
  %1395 = vmatpush1.msra.mxu0 0.0
  %1396 = vmatprep.subr.mxu0 0.0
  %1397 = vmatpush1.msra.mxu0 0.0
  %1398 = vmatprep.subr.mxu0 0.0
  %1399 = vmatpush1.msra.mxu0 0.0
  %1400 = vmatprep.subr.mxu0 0.0
  %1401 = vmatpush1.msra.mxu0 0.0
  %1402 = vmatprep.subr.mxu0 0.0
  %1403 = vmatpush1.msra.mxu0 0.0
  %1404 = vmatprep.subr.mxu0 0.0
  %1405 = vmatpush1.msra.mxu0 0.0
  %1406 = vmatprep.subr.mxu0 0.0
  %1407 = vmatpush1.msra.mxu0 0.0
  %1408 = vmatprep.subr.mxu0 0.0
  %1409 = vmatpush1.msra.mxu0 0.0
  %1410 = vmatprep.subr.mxu0 0.0
  %1411 = vmatpush1.msra.mxu0 0.0
  %1412 = vmatprep.mubr.f32.mxu0 0.0
  %1413 = vmatmul.mubr.f32.gmra.mrb[0].mxu0 %v431
  %v1414 = vpop.f32.mrb[0].mxu0
  %v1415 = vadd.f32 %v1270, %v1414
  %v1416 = vpop.f32.mrb[0].mxu0
  %1417 = vmatprep.mubr.f32.mxu0 0.0
  %1418 = vmatmul.mubr.f32.gmra.mrb[0].mxu0 %v434
  %v1419 = vpop.f32.mrb[0].mxu0
  %v1420 = vadd.f32 %v1275, %v1419
  %v1421 = vpop.f32.mrb[0].mxu0
  %1422 = vmatprep.mubr.f32.mxu0 0.0
  %1423 = vmatmul.mubr.f32.gmra.mrb[0].mxu0 %v437
  %v1424 = vpop.f32.mrb[0].mxu0
  %v1425 = vadd.f32 %v1280, %v1424
  %v1426 = vpop.f32.mrb[0].mxu0
  %1427 = vmatprep.mubr.f32.mxu0 0.0
  %1428 = vmatmul.mubr.f32.gmra.mrb[0].mxu0 %v440
  %v1429 = vpop.f32.mrb[0].mxu0
  %v1430 = vadd.f32 %v1285, %v1429
  %v1431 = vpop.f32.mrb[0].mxu0
  %1432 = vmatprep.mubr.f32.mxu0 0.0
  %1433 = vmatmul.mubr.f32.gmra.mrb[0].mxu0 %v443
  %v1434 = vpop.f32.mrb[0].mxu0
  %v1435 = vadd.f32 %v1290, %v1434
  %v1436 = vpop.f32.mrb[0].mxu0
  %1437 = vmatprep.mubr.f32.mxu0 0.0
  %1438 = vmatmul.mubr.f32.gmra.mrb[0].mxu0 %v446
  %v1439 = vpop.f32.mrb[0].mxu0
  %v1440 = vadd.f32 %v1295, %v1439
  %v1441 = vpop.f32.mrb[0].mxu0
  %1442 = vmatprep.mubr.f32.mxu0 0.0
  %1443 = vmatmul.mubr.f32.gmra.mrb[0].mxu0 %v449
  %v1444 = vpop.f32.mrb[0].mxu0
  %v1445 = vadd.f32 %v1300, %v1444
  %v1446 = vpop.f32.mrb[0].mxu0
  %1447 = vmatprep.mubr.f32.mxu0 0.0
  %1448 = vmatmul.mubr.f32.gmra.mrb[0].mxu0 %v452
  %v1449 = vpop.f32.mrb[0].mxu0
  %v1450 = vadd.f32 %v1305, %v1449
  %v1451 = vpop.f32.mrb[0].mxu0
  %1452 = vmatprep.mubr.f32.mxu0 0.0
  %1453 = vmatmul.mubr.f32.gmra.mrb[0].mxu0 %v455
  %v1454 = vpop.f32.mrb[0].mxu0
  %v1455 = vadd.f32 %v1310, %v1454
  %v1456 = vpop.f32.mrb[0].mxu0
  %1457 = vmatprep.mubr.f32.mxu0 0.0
  %1458 = vmatmul.mubr.f32.gmra.mrb[0].mxu0 %v458
  %v1459 = vpop.f32.mrb[0].mxu0
  %v1460 = vadd.f32 %v1315, %v1459
  %v1461 = vpop.f32.mrb[0].mxu0
  %1462 = vmatprep.mubr.f32.mxu0 0.0
  %1463 = vmatmul.mubr.f32.gmra.mrb[0].mxu0 %v461
  %v1464 = vpop.f32.mrb[0].mxu0
  %v1465 = vadd.f32 %v1320, %v1464
  %v1466 = vpop.f32.mrb[0].mxu0
  %1467 = vmatprep.mubr.f32.mxu0 0.0
  %1468 = vmatmul.mubr.f32.gmra.mrb[0].mxu0 %v464
  %v1469 = vpop.f32.mrb[0].mxu0
  %v1470 = vadd.f32 %v1325, %v1469
  %v1471 = vpop.f32.mrb[0].mxu0
  %1472 = vmatprep.mubr.f32.mxu0 0.0
  %1473 = vmatmul.mubr.f32.gmra.mrb[0].mxu0 %v467
  %v1474 = vpop.f32.mrb[0].mxu0
  %v1475 = vadd.f32 %v1330, %v1474
  %v1476 = vpop.f32.mrb[0].mxu0
  %1477 = vmatprep.mubr.f32.mxu0 0.0
  %1478 = vmatmul.mubr.f32.gmra.mrb[0].mxu0 %v470
  %v1479 = vpop.f32.mrb[0].mxu0
  %v1480 = vadd.f32 %v1335, %v1479
  %v1481 = vpop.f32.mrb[0].mxu0
  %1482 = vmatprep.mubr.f32.mxu0 0.0
  %1483 = vmatmul.mubr.f32.gmra.mrb[0].mxu0 %v473
  %v1484 = vpop.f32.mrb[0].mxu0
  %v1485 = vadd.f32 %v1340, %v1484
  %v1486 = vpop.f32.mrb[0].mxu0
  %1487 = vmatprep.mubr.f32.mxu0 0.0
  %1488 = vmatmul.mubr.f32.gmra.mrb[0].mxu0 %v476
  %v1489 = vpop.f32.mrb[0].mxu0
  %v1490 = vadd.f32 %v1345, %v1489
  %v1491 = vpop.f32.mrb[0].mxu0
  %1492 = vdwg.mxu0
  %v1493 = vmax.f32 %v1415, 0.0
  %v1494 = vmax.f32 %v1420, 0.0
  %v1495 = vmax.f32 %v1425, 0.0
  %v1496 = vmax.f32 %v1430, 0.0
  %v1497 = vmax.f32 %v1435, 0.0
  %v1498 = vmax.f32 %v1440, 0.0
  %v1499 = vmax.f32 %v1445, 0.0
  %v1500 = vmax.f32 %v1450, 0.0
  %v1501 = vmax.f32 %v1455, 0.0
  %v1502 = vmax.f32 %v1460, 0.0
  %v1503 = vmax.f32 %v1465, 0.0
  %v1504 = vmax.f32 %v1470, 0.0
  %v1505 = vmax.f32 %v1475, 0.0
  %v1506 = vmax.f32 %v1480, 0.0
  %v1507 = vmax.f32 %v1485, 0.0
  %v1508 = vmax.f32 %v1490, 0.0
  %vm1509 = vcmask 261120
  %1510 = vst.msk [vmem:[%s3] sm:$0xff] %vm1509, %v1493
  %1511 = vst.msk [vmem:[%s3 + $0x8] sm:$0xff] %vm1509, %v1494
  %1512 = vst.msk [vmem:[%s3 + $0x10] sm:$0xff] %vm1509, %v1495
  %1513 = vst.msk [vmem:[%s3 + $0x18] sm:$0xff] %vm1509, %v1496
  %1514 = vst.msk [vmem:[%s3 + $0x20] sm:$0xff] %vm1509, %v1497
  %1515 = vst.msk [vmem:[%s3 + $0x28] sm:$0xff] %vm1509, %v1498
  %1516 = vst.msk [vmem:[%s3 + $0x30] sm:$0xff] %vm1509, %v1499
  %1517 = vst.msk [vmem:[%s3 + $0x38] sm:$0xff] %vm1509, %v1500
  %1518 = vst.msk [vmem:[%s3 + $0x40] sm:$0xff] %vm1509, %v1501
  %1519 = vst.msk [vmem:[%s3 + $0x48] sm:$0xff] %vm1509, %v1502
  %1520 = vst.msk [vmem:[%s3 + $0x50] sm:$0xff] %vm1509, %v1503
  %1521 = vst.msk [vmem:[%s3 + $0x58] sm:$0xff] %vm1509, %v1504
  %1522 = vst.msk [vmem:[%s3 + $0x60] sm:$0xff] %vm1509, %v1505
  %1523 = vst.msk [vmem:[%s3 + $0x68] sm:$0xff] %vm1509, %v1506
  %1524 = vst.msk [vmem:[%s3 + $0x70] sm:$0xff] %vm1509, %v1507
  %1525 = vst.msk [vmem:[%s3 + $0x78] sm:$0xff] %vm1509, %v1508
  // Predicated region
  $region14: #{duel_cnn_forward.4} parent=0 // pred_check
    _
  $region15: #{duel_cnn_forward.4} parent=0 // pred_check_branch
    %1527 = sbr.rel (0) target = $region17
  $region16: #{duel_cnn_forward.4} parent=0 // pred_region
    _
  $region17: #{duel_cnn_forward.4} parent=0 // pred_fallthru
    _
  // Predicated region
  $region18: #{duel_cnn_forward.4} parent=0 // pred_check
    _
  $region19: #{duel_cnn_forward.4} parent=0 // pred_check_branch
    %1529 = sbr.rel (0) target = $region21
  $region20: #{duel_cnn_forward.4} parent=0 // pred_region
    _
  $region21: #{duel_cnn_forward.4} parent=0 // pred_fallthru
    _

// kernel: duel_cnn_forward.5
$region0: #{duel_cnn_forward.5}
  #allocation0 [shape = 'u32[]', space=smem, size = 0x4, offset = 0x4, fixed_abs, tag = 'smem constant byte address 0x4 - core index']
  #allocation1 [shape = 'u32[144,128]{1,0:T(1,128)}', space=vmem, size = 0x12000, scoped, tag = 'internal scratch']
  %s0 = inlined_call_operand.vmem [shape: f32[2,2048], index: 0, kind: input, shape index: {}]
  %s1 = inlined_call_operand.vmem [shape: f32[2048,128], index: 1, kind: input, shape index: {}]
  %s2 = inlined_call_operand.vmem [shape: f32[1,128], index: 2, kind: input, shape index: {}]
  %s3 = inlined_call_operand.vmem [shape: f32[128,7], index: 3, kind: input, shape index: {}]
  %s4 = inlined_call_operand.vmem [shape: f32[1,7], index: 4, kind: input, shape index: {}]
  %s5 = inlined_call_operand.vmem [shape: f32[2,7], index: 5, kind: output, shape index: {}]
  %s6 = sld [smem:[#allocation0]]
  $region30: #{duel_cnn_forward.5} parent=0
    _
  %s8 = ssub.s32 1, %s6
  %s9 = scalar_select 0, %s8, %s6
  // Predicated region
  $region2: #{duel_cnn_forward.5} parent=0 // pred_check
    _
  $region3: #{duel_cnn_forward.5} parent=0 // pred_check_branch
    %11 = sbr.rel (0) target = $region5
  $region4: #{duel_cnn_forward.5} parent=0 // pred_region
    _
  $region5: #{duel_cnn_forward.5} parent=0 // pred_fallthru
    _
  // Predicated region
  $region6: #{duel_cnn_forward.5} parent=0 // pred_check
    _
  $region7: #{duel_cnn_forward.5} parent=0 // pred_check_branch
    %13 = sbr.rel (0) target = $region9
  $region8: #{duel_cnn_forward.5} parent=0 // pred_region
    _
  $region9: #{duel_cnn_forward.5} parent=0 // pred_fallthru
    _
  // Predicated region
  $region10: #{duel_cnn_forward.5} parent=0 // pred_check
    _
  $region11: #{duel_cnn_forward.5} parent=0 // pred_check_branch
    %15 = sbr.rel (0) target = $region13
  $region12: #{duel_cnn_forward.5} parent=0 // pred_region
    _
  $region13: #{duel_cnn_forward.5} parent=0 // pred_fallthru
    _
  // Predicated region
  $region14: #{duel_cnn_forward.5} parent=0 // pred_check
    _
  $region15: #{duel_cnn_forward.5} parent=0 // pred_check_branch
    %17 = sbr.rel (0) target = $region17
  $region16: #{duel_cnn_forward.5} parent=0 // pred_region
    _
  $region17: #{duel_cnn_forward.5} parent=0 // pred_fallthru
    _
  // Predicated region
  $region18: #{duel_cnn_forward.5} parent=0 // pred_check
    _
  $region19: #{duel_cnn_forward.5} parent=0 // pred_check_branch
    %19 = sbr.rel (0) target = $region21
  $region20: #{duel_cnn_forward.5} parent=0 // pred_region
    _
  $region21: #{duel_cnn_forward.5} parent=0 // pred_fallthru
    _
  %v20 = vld [vmem:[%s0] sm:$0xff]
  %v21 = vld [vmem:[%s0 + $0x8] sm:$0xff]
  %v22 = vld [vmem:[%s0 + $0x10] sm:$0xff]
  %v23 = vld [vmem:[%s0 + $0x18] sm:$0xff]
  %v24 = vld [vmem:[%s1] sm:$0xff]
  %v25 = vld [vmem:[%s1 + $0x8] sm:$0xff]
  %v26 = vld [vmem:[%s1 + $0x10] sm:$0xff]
  %v27 = vld [vmem:[%s1 + $0x18] sm:$0xff]
  %v28 = vld [vmem:[%s1 + $0x20] sm:$0xff]
  %v29 = vld [vmem:[%s1 + $0x28] sm:$0xff]
  %v30 = vld [vmem:[%s1 + $0x30] sm:$0xff]
  %v31 = vld [vmem:[%s1 + $0x38] sm:$0xff]
  %v32 = vld [vmem:[%s1 + $0x40] sm:$0xff]
  %v33 = vld [vmem:[%s1 + $0x48] sm:$0xff]
  %v34 = vld [vmem:[%s1 + $0x50] sm:$0xff]
  %v35 = vld [vmem:[%s1 + $0x58] sm:$0xff]
  %v36 = vld [vmem:[%s1 + $0x60] sm:$0xff]
  %v37 = vld [vmem:[%s1 + $0x68] sm:$0xff]
  %v38 = vld [vmem:[%s1 + $0x70] sm:$0xff]
  %v39 = vld [vmem:[%s1 + $0x78] sm:$0xff]
  %v40 = vld [vmem:[%s1 + $0x80] sm:$0xff]
  %v41 = vld [vmem:[%s1 + $0x88] sm:$0xff]
  %v42 = vld [vmem:[%s1 + $0x90] sm:$0xff]
  %v43 = vld [vmem:[%s1 + $0x98] sm:$0xff]
  %v44 = vld [vmem:[%s1 + $0xa0] sm:$0xff]
  %v45 = vld [vmem:[%s1 + $0xa8] sm:$0xff]
  %v46 = vld [vmem:[%s1 + $0xb0] sm:$0xff]
  %v47 = vld [vmem:[%s1 + $0xb8] sm:$0xff]
  %v48 = vld [vmem:[%s1 + $0xc0] sm:$0xff]
  %v49 = vld [vmem:[%s1 + $0xc8] sm:$0xff]
  %v50 = vld [vmem:[%s1 + $0xd0] sm:$0xff]
  %v51 = vld [vmem:[%s1 + $0xd8] sm:$0xff]
  %v52 = vld [vmem:[%s1 + $0xe0] sm:$0xff]
  %v53 = vld [vmem:[%s1 + $0xe8] sm:$0xff]
  %v54 = vld [vmem:[%s1 + $0xf0] sm:$0xff]
  %v55 = vld [vmem:[%s1 + $0xf8] sm:$0xff]
  %v56 = vld [vmem:[%s1 + $0x100] sm:$0xff]
  %v57 = vld [vmem:[%s1 + $0x108] sm:$0xff]
  %v58 = vld [vmem:[%s1 + $0x110] sm:$0xff]
  %v59 = vld [vmem:[%s1 + $0x118] sm:$0xff]
  %v60 = vld [vmem:[%s1 + $0x120] sm:$0xff]
  %v61 = vld [vmem:[%s1 + $0x128] sm:$0xff]
  %v62 = vld [vmem:[%s1 + $0x130] sm:$0xff]
  %v63 = vld [vmem:[%s1 + $0x138] sm:$0xff]
  %v64 = vld [vmem:[%s1 + $0x140] sm:$0xff]
  %v65 = vld [vmem:[%s1 + $0x148] sm:$0xff]
  %v66 = vld [vmem:[%s1 + $0x150] sm:$0xff]
  %v67 = vld [vmem:[%s1 + $0x158] sm:$0xff]
  %v68 = vld [vmem:[%s1 + $0x160] sm:$0xff]
  %v69 = vld [vmem:[%s1 + $0x168] sm:$0xff]
  %v70 = vld [vmem:[%s1 + $0x170] sm:$0xff]
  %v71 = vld [vmem:[%s1 + $0x178] sm:$0xff]
  %v72 = vld [vmem:[%s1 + $0x180] sm:$0xff]
  %v73 = vld [vmem:[%s1 + $0x188] sm:$0xff]
  %v74 = vld [vmem:[%s1 + $0x190] sm:$0xff]
  %v75 = vld [vmem:[%s1 + $0x198] sm:$0xff]
  %v76 = vld [vmem:[%s1 + $0x1a0] sm:$0xff]
  %v77 = vld [vmem:[%s1 + $0x1a8] sm:$0xff]
  %v78 = vld [vmem:[%s1 + $0x1b0] sm:$0xff]
  %v79 = vld [vmem:[%s1 + $0x1b8] sm:$0xff]
  %v80 = vld [vmem:[%s1 + $0x1c0] sm:$0xff]
  %v81 = vld [vmem:[%s1 + $0x1c8] sm:$0xff]
  %v82 = vld [vmem:[%s1 + $0x1d0] sm:$0xff]
  %v83 = vld [vmem:[%s1 + $0x1d8] sm:$0xff]
  %v84 = vld [vmem:[%s1 + $0x1e0] sm:$0xff]
  %v85 = vld [vmem:[%s1 + $0x1e8] sm:$0xff]
  %v86 = vld [vmem:[%s1 + $0x1f0] sm:$0xff]
  %v87 = vld [vmem:[%s1 + $0x1f8] sm:$0xff]
  %v88 = vld [vmem:[%s1 + $0x200] sm:$0xff]
  %v89 = vld [vmem:[%s1 + $0x208] sm:$0xff]
  %v90 = vld [vmem:[%s1 + $0x210] sm:$0xff]
  %v91 = vld [vmem:[%s1 + $0x218] sm:$0xff]
  %v92 = vld [vmem:[%s1 + $0x220] sm:$0xff]
  %v93 = vld [vmem:[%s1 + $0x228] sm:$0xff]
  %v94 = vld [vmem:[%s1 + $0x230] sm:$0xff]
  %v95 = vld [vmem:[%s1 + $0x238] sm:$0xff]
  %v96 = vld [vmem:[%s1 + $0x240] sm:$0xff]
  %v97 = vld [vmem:[%s1 + $0x248] sm:$0xff]
  %v98 = vld [vmem:[%s1 + $0x250] sm:$0xff]
  %v99 = vld [vmem:[%s1 + $0x258] sm:$0xff]
  %v100 = vld [vmem:[%s1 + $0x260] sm:$0xff]
  %v101 = vld [vmem:[%s1 + $0x268] sm:$0xff]
  %v102 = vld [vmem:[%s1 + $0x270] sm:$0xff]
  %v103 = vld [vmem:[%s1 + $0x278] sm:$0xff]
  %v104 = vld [vmem:[%s1 + $0x280] sm:$0xff]
  %v105 = vld [vmem:[%s1 + $0x288] sm:$0xff]
  %v106 = vld [vmem:[%s1 + $0x290] sm:$0xff]
  %v107 = vld [vmem:[%s1 + $0x298] sm:$0xff]
  %v108 = vld [vmem:[%s1 + $0x2a0] sm:$0xff]
  %v109 = vld [vmem:[%s1 + $0x2a8] sm:$0xff]
  %v110 = vld [vmem:[%s1 + $0x2b0] sm:$0xff]
  %v111 = vld [vmem:[%s1 + $0x2b8] sm:$0xff]
  %v112 = vld [vmem:[%s1 + $0x2c0] sm:$0xff]
  %v113 = vld [vmem:[%s1 + $0x2c8] sm:$0xff]
  %v114 = vld [vmem:[%s1 + $0x2d0] sm:$0xff]
  %v115 = vld [vmem:[%s1 + $0x2d8] sm:$0xff]
  %v116 = vld [vmem:[%s1 + $0x2e0] sm:$0xff]
  %v117 = vld [vmem:[%s1 + $0x2e8] sm:$0xff]
  %v118 = vld [vmem:[%s1 + $0x2f0] sm:$0xff]
  %v119 = vld [vmem:[%s1 + $0x2f8] sm:$0xff]
  %v120 = vld [vmem:[%s1 + $0x300] sm:$0xff]
  %v121 = vld [vmem:[%s1 + $0x308] sm:$0xff]
  %v122 = vld [vmem:[%s1 + $0x310] sm:$0xff]
  %v123 = vld [vmem:[%s1 + $0x318] sm:$0xff]
  %v124 = vld [vmem:[%s1 + $0x320] sm:$0xff]
  %v125 = vld [vmem:[%s1 + $0x328] sm:$0xff]
  %v126 = vld [vmem:[%s1 + $0x330] sm:$0xff]
  %v127 = vld [vmem:[%s1 + $0x338] sm:$0xff]
  %v128 = vld [vmem:[%s1 + $0x340] sm:$0xff]
  %v129 = vld [vmem:[%s1 + $0x348] sm:$0xff]
  %v130 = vld [vmem:[%s1 + $0x350] sm:$0xff]
  %v131 = vld [vmem:[%s1 + $0x358] sm:$0xff]
  %v132 = vld [vmem:[%s1 + $0x360] sm:$0xff]
  %v133 = vld [vmem:[%s1 + $0x368] sm:$0xff]
  %v134 = vld [vmem:[%s1 + $0x370] sm:$0xff]
  %v135 = vld [vmem:[%s1 + $0x378] sm:$0xff]
  %v136 = vld [vmem:[%s1 + $0x380] sm:$0xff]
  %v137 = vld [vmem:[%s1 + $0x388] sm:$0xff]
  %v138 = vld [vmem:[%s1 + $0x390] sm:$0xff]
  %v139 = vld [vmem:[%s1 + $0x398] sm:$0xff]
  %v140 = vld [vmem:[%s1 + $0x3a0] sm:$0xff]
  %v141 = vld [vmem:[%s1 + $0x3a8] sm:$0xff]
  %v142 = vld [vmem:[%s1 + $0x3b0] sm:$0xff]
  %v143 = vld [vmem:[%s1 + $0x3b8] sm:$0xff]
  %v144 = vld [vmem:[%s1 + $0x3c0] sm:$0xff]
  %v145 = vld [vmem:[%s1 + $0x3c8] sm:$0xff]
  %v146 = vld [vmem:[%s1 + $0x3d0] sm:$0xff]
  %v147 = vld [vmem:[%s1 + $0x3d8] sm:$0xff]
  %v148 = vld [vmem:[%s1 + $0x3e0] sm:$0xff]
  %v149 = vld [vmem:[%s1 + $0x3e8] sm:$0xff]
  %v150 = vld [vmem:[%s1 + $0x3f0] sm:$0xff]
  %v151 = vld [vmem:[%s1 + $0x3f8] sm:$0xff]
  %v152 = vld [vmem:[%s1 + $0x400] sm:$0xff]
  %v153 = vld [vmem:[%s1 + $0x408] sm:$0xff]
  %v154 = vld [vmem:[%s1 + $0x410] sm:$0xff]
  %v155 = vld [vmem:[%s1 + $0x418] sm:$0xff]
  %v156 = vld [vmem:[%s1 + $0x420] sm:$0xff]
  %v157 = vld [vmem:[%s1 + $0x428] sm:$0xff]
  %v158 = vld [vmem:[%s1 + $0x430] sm:$0xff]
  %v159 = vld [vmem:[%s1 + $0x438] sm:$0xff]
  %v160 = vld [vmem:[%s1 + $0x440] sm:$0xff]
  %v161 = vld [vmem:[%s1 + $0x448] sm:$0xff]
  %v162 = vld [vmem:[%s1 + $0x450] sm:$0xff]
  %v163 = vld [vmem:[%s1 + $0x458] sm:$0xff]
  %v164 = vld [vmem:[%s1 + $0x460] sm:$0xff]
  %v165 = vld [vmem:[%s1 + $0x468] sm:$0xff]
  %v166 = vld [vmem:[%s1 + $0x470] sm:$0xff]
  %v167 = vld [vmem:[%s1 + $0x478] sm:$0xff]
  %v168 = vld [vmem:[%s1 + $0x480] sm:$0xff]
  %v169 = vld [vmem:[%s1 + $0x488] sm:$0xff]
  %v170 = vld [vmem:[%s1 + $0x490] sm:$0xff]
  %v171 = vld [vmem:[%s1 + $0x498] sm:$0xff]
  %v172 = vld [vmem:[%s1 + $0x4a0] sm:$0xff]
  %v173 = vld [vmem:[%s1 + $0x4a8] sm:$0xff]
  %v174 = vld [vmem:[%s1 + $0x4b0] sm:$0xff]
  %v175 = vld [vmem:[%s1 + $0x4b8] sm:$0xff]
  %v176 = vld [vmem:[%s1 + $0x4c0] sm:$0xff]
  %v177 = vld [vmem:[%s1 + $0x4c8] sm:$0xff]
  %v178 = vld [vmem:[%s1 + $0x4d0] sm:$0xff]
  %v179 = vld [vmem:[%s1 + $0x4d8] sm:$0xff]
  %v180 = vld [vmem:[%s1 + $0x4e0] sm:$0xff]
  %v181 = vld [vmem:[%s1 + $0x4e8] sm:$0xff]
  %v182 = vld [vmem:[%s1 + $0x4f0] sm:$0xff]
  %v183 = vld [vmem:[%s1 + $0x4f8] sm:$0xff]
  %v184 = vld [vmem:[%s1 + $0x500] sm:$0xff]
  %v185 = vld [vmem:[%s1 + $0x508] sm:$0xff]
  %v186 = vld [vmem:[%s1 + $0x510] sm:$0xff]
  %v187 = vld [vmem:[%s1 + $0x518] sm:$0xff]
  %v188 = vld [vmem:[%s1 + $0x520] sm:$0xff]
  %v189 = vld [vmem:[%s1 + $0x528] sm:$0xff]
  %v190 = vld [vmem:[%s1 + $0x530] sm:$0xff]
  %v191 = vld [vmem:[%s1 + $0x538] sm:$0xff]
  %v192 = vld [vmem:[%s1 + $0x540] sm:$0xff]
  %v193 = vld [vmem:[%s1 + $0x548] sm:$0xff]
  %v194 = vld [vmem:[%s1 + $0x550] sm:$0xff]
  %v195 = vld [vmem:[%s1 + $0x558] sm:$0xff]
  %v196 = vld [vmem:[%s1 + $0x560] sm:$0xff]
  %v197 = vld [vmem:[%s1 + $0x568] sm:$0xff]
  %v198 = vld [vmem:[%s1 + $0x570] sm:$0xff]
  %v199 = vld [vmem:[%s1 + $0x578] sm:$0xff]
  %v200 = vld [vmem:[%s1 + $0x580] sm:$0xff]
  %v201 = vld [vmem:[%s1 + $0x588] sm:$0xff]
  %v202 = vld [vmem:[%s1 + $0x590] sm:$0xff]
  %v203 = vld [vmem:[%s1 + $0x598] sm:$0xff]
  %v204 = vld [vmem:[%s1 + $0x5a0] sm:$0xff]
  %v205 = vld [vmem:[%s1 + $0x5a8] sm:$0xff]
  %v206 = vld [vmem:[%s1 + $0x5b0] sm:$0xff]
  %v207 = vld [vmem:[%s1 + $0x5b8] sm:$0xff]
  %v208 = vld [vmem:[%s1 + $0x5c0] sm:$0xff]
  %v209 = vld [vmem:[%s1 + $0x5c8] sm:$0xff]
  %v210 = vld [vmem:[%s1 + $0x5d0] sm:$0xff]
  %v211 = vld [vmem:[%s1 + $0x5d8] sm:$0xff]
  %v212 = vld [vmem:[%s1 + $0x5e0] sm:$0xff]
  %v213 = vld [vmem:[%s1 + $0x5e8] sm:$0xff]
  %v214 = vld [vmem:[%s1 + $0x5f0] sm:$0xff]
  %v215 = vld [vmem:[%s1 + $0x5f8] sm:$0xff]
  %v216 = vld [vmem:[%s1 + $0x600] sm:$0xff]
  %v217 = vld [vmem:[%s1 + $0x608] sm:$0xff]
  %v218 = vld [vmem:[%s1 + $0x610] sm:$0xff]
  %v219 = vld [vmem:[%s1 + $0x618] sm:$0xff]
  %v220 = vld [vmem:[%s1 + $0x620] sm:$0xff]
  %v221 = vld [vmem:[%s1 + $0x628] sm:$0xff]
  %v222 = vld [vmem:[%s1 + $0x630] sm:$0xff]
  %v223 = vld [vmem:[%s1 + $0x638] sm:$0xff]
  %v224 = vld [vmem:[%s1 + $0x640] sm:$0xff]
  %v225 = vld [vmem:[%s1 + $0x648] sm:$0xff]
  %v226 = vld [vmem:[%s1 + $0x650] sm:$0xff]
  %v227 = vld [vmem:[%s1 + $0x658] sm:$0xff]
  %v228 = vld [vmem:[%s1 + $0x660] sm:$0xff]
  %v229 = vld [vmem:[%s1 + $0x668] sm:$0xff]
  %v230 = vld [vmem:[%s1 + $0x670] sm:$0xff]
  %v231 = vld [vmem:[%s1 + $0x678] sm:$0xff]
  %v232 = vld [vmem:[%s1 + $0x680] sm:$0xff]
  %v233 = vld [vmem:[%s1 + $0x688] sm:$0xff]
  %v234 = vld [vmem:[%s1 + $0x690] sm:$0xff]
  %v235 = vld [vmem:[%s1 + $0x698] sm:$0xff]
  %v236 = vld [vmem:[%s1 + $0x6a0] sm:$0xff]
  %v237 = vld [vmem:[%s1 + $0x6a8] sm:$0xff]
  %v238 = vld [vmem:[%s1 + $0x6b0] sm:$0xff]
  %v239 = vld [vmem:[%s1 + $0x6b8] sm:$0xff]
  %v240 = vld [vmem:[%s1 + $0x6c0] sm:$0xff]
  %v241 = vld [vmem:[%s1 + $0x6c8] sm:$0xff]
  %v242 = vld [vmem:[%s1 + $0x6d0] sm:$0xff]
  %v243 = vld [vmem:[%s1 + $0x6d8] sm:$0xff]
  %v244 = vld [vmem:[%s1 + $0x6e0] sm:$0xff]
  %v245 = vld [vmem:[%s1 + $0x6e8] sm:$0xff]
  %v246 = vld [vmem:[%s1 + $0x6f0] sm:$0xff]
  %v247 = vld [vmem:[%s1 + $0x6f8] sm:$0xff]
  %v248 = vld [vmem:[%s1 + $0x700] sm:$0xff]
  %v249 = vld [vmem:[%s1 + $0x708] sm:$0xff]
  %v250 = vld [vmem:[%s1 + $0x710] sm:$0xff]
  %v251 = vld [vmem:[%s1 + $0x718] sm:$0xff]
  %v252 = vld [vmem:[%s1 + $0x720] sm:$0xff]
  %v253 = vld [vmem:[%s1 + $0x728] sm:$0xff]
  %v254 = vld [vmem:[%s1 + $0x730] sm:$0xff]
  %v255 = vld [vmem:[%s1 + $0x738] sm:$0xff]
  %v256 = vld [vmem:[%s1 + $0x740] sm:$0xff]
  %v257 = vld [vmem:[%s1 + $0x748] sm:$0xff]
  %v258 = vld [vmem:[%s1 + $0x750] sm:$0xff]
  %v259 = vld [vmem:[%s1 + $0x758] sm:$0xff]
  %v260 = vld [vmem:[%s1 + $0x760] sm:$0xff]
  %v261 = vld [vmem:[%s1 + $0x768] sm:$0xff]
  %v262 = vld [vmem:[%s1 + $0x770] sm:$0xff]
  %v263 = vld [vmem:[%s1 + $0x778] sm:$0xff]
  %v264 = vld [vmem:[%s1 + $0x780] sm:$0xff]
  %v265 = vld [vmem:[%s1 + $0x788] sm:$0xff]
  %v266 = vld [vmem:[%s1 + $0x790] sm:$0xff]
  %v267 = vld [vmem:[%s1 + $0x798] sm:$0xff]
  %v268 = vld [vmem:[%s1 + $0x7a0] sm:$0xff]
  %v269 = vld [vmem:[%s1 + $0x7a8] sm:$0xff]
  %v270 = vld [vmem:[%s1 + $0x7b0] sm:$0xff]
  %v271 = vld [vmem:[%s1 + $0x7b8] sm:$0xff]
  %v272 = vld [vmem:[%s1 + $0x7c0] sm:$0xff]
  %v273 = vld [vmem:[%s1 + $0x7c8] sm:$0xff]
  %v274 = vld [vmem:[%s1 + $0x7d0] sm:$0xff]
  %v275 = vld [vmem:[%s1 + $0x7d8] sm:$0xff]
  %v276 = vld [vmem:[%s1 + $0x7e0] sm:$0xff]
  %v277 = vld [vmem:[%s1 + $0x7e8] sm:$0xff]
  %v278 = vld [vmem:[%s1 + $0x7f0] sm:$0xff]
  %v279 = vld [vmem:[%s1 + $0x7f8] sm:$0xff]
  %v280 = vld [vmem:[%s2] sm:$0x1]
  %v282 = vlaneseq
  %v283 = vshrl.u32 %v282, 7
  %v284 = vsub.s32 0, %v283
  %v285 = vrot.slane %v280, %v284
  %v291 = vcombine.high %v20, %v20
  %v293 = vunpack.c.l.s4 1983009808
  %v294 = vunpack.c.0.s8 %v293
  %v295 = vlaneseq
  %v296 = vshrl.u32 %v295, 7
  %v297 = vsub.s32 %v294, %v296
  %v298 = vrot.slane %v20, %v297
  %v300 = vunpack.c.l.s4 1983009808
  %v301 = vunpack.c.0.s8 %v300
  %v302 = vlaneseq
  %v303 = vshrl.u32 %v302, 7
  %v304 = vsub.s32 %v301, %v303
  %v305 = vrot.slane %v291, %v304
  %v306 = vcombine.high %v298, %v298
  %v307 = vcombine.high %v305, %v305
  %v308 = vcombine.high %v21, %v21
  %v310 = vunpack.c.l.s4 1983009808
  %v311 = vunpack.c.0.s8 %v310
  %v312 = vlaneseq
  %v313 = vshrl.u32 %v312, 7
  %v314 = vsub.s32 %v311, %v313
  %v315 = vrot.slane %v21, %v314
  %v317 = vunpack.c.l.s4 1983009808
  %v318 = vunpack.c.0.s8 %v317
  %v319 = vlaneseq
  %v320 = vshrl.u32 %v319, 7
  %v321 = vsub.s32 %v318, %v320
  %v322 = vrot.slane %v308, %v321
  %v323 = vcombine.high %v315, %v315
  %v324 = vcombine.high %v322, %v322
  %v325 = vcombine.high %v22, %v22
  %v327 = vunpack.c.l.s4 1983009808
  %v328 = vunpack.c.0.s8 %v327
  %v329 = vlaneseq
  %v330 = vshrl.u32 %v329, 7
  %v331 = vsub.s32 %v328, %v330
  %v332 = vrot.slane %v22, %v331
  %v334 = vunpack.c.l.s4 1983009808
  %v335 = vunpack.c.0.s8 %v334
  %v336 = vlaneseq
  %v337 = vshrl.u32 %v336, 7
  %v338 = vsub.s32 %v335, %v337
  %v339 = vrot.slane %v325, %v338
  %v340 = vcombine.high %v332, %v332
  %v341 = vcombine.high %v339, %v339
  %v342 = vcombine.high %v23, %v23
  %v344 = vunpack.c.l.s4 1983009808
  %v345 = vunpack.c.0.s8 %v344
  %v346 = vlaneseq
  %v347 = vshrl.u32 %v346, 7
  %v348 = vsub.s32 %v345, %v347
  %v349 = vrot.slane %v23, %v348
  %v351 = vunpack.c.l.s4 1983009808
  %v352 = vunpack.c.0.s8 %v351
  %v353 = vlaneseq
  %v354 = vshrl.u32 %v353, 7
  %v355 = vsub.s32 %v352, %v354
  %v356 = vrot.slane %v342, %v355
  %v357 = vcombine.high %v349, %v349
  %v358 = vcombine.high %v356, %v356
  %375 = vmatprep.subr.mxu0 0.0
  %376 = vmatpush1.msra.mxu0 %v24
  %377 = vmatprep.subr.mxu0 0.0
  %378 = vmatpush1.msra.mxu0 %v25
  %379 = vmatprep.subr.mxu0 0.0
  %380 = vmatpush1.msra.mxu0 %v26
  %381 = vmatprep.subr.mxu0 0.0
  %382 = vmatpush1.msra.mxu0 %v27
  %383 = vmatprep.subr.mxu0 0.0
  %384 = vmatpush1.msra.mxu0 %v28
  %385 = vmatprep.subr.mxu0 0.0
  %386 = vmatpush1.msra.mxu0 %v29
  %387 = vmatprep.subr.mxu0 0.0
  %388 = vmatpush1.msra.mxu0 %v30
  %389 = vmatprep.subr.mxu0 0.0
  %390 = vmatpush1.msra.mxu0 %v31
  %391 = vmatprep.subr.mxu0 0.0
  %392 = vmatpush1.msra.mxu0 %v32
  %393 = vmatprep.subr.mxu0 0.0
  %394 = vmatpush1.msra.mxu0 %v33
  %395 = vmatprep.subr.mxu0 0.0
  %396 = vmatpush1.msra.mxu0 %v34
  %397 = vmatprep.subr.mxu0 0.0
  %398 = vmatpush1.msra.mxu0 %v35
  %399 = vmatprep.subr.mxu0 0.0
  %400 = vmatpush1.msra.mxu0 %v36
  %401 = vmatprep.subr.mxu0 0.0
  %402 = vmatpush1.msra.mxu0 %v37
  %403 = vmatprep.subr.mxu0 0.0
  %404 = vmatpush1.msra.mxu0 %v38
  %405 = vmatprep.subr.mxu0 0.0
  %406 = vmatpush1.msra.mxu0 %v39
  %407 = vmatprep.subr.mxu0 0.0
  %408 = vmatpush1.msra.mxu0 %v40
  %409 = vmatprep.subr.mxu0 0.0
  %410 = vmatpush1.msra.mxu0 %v41
  %411 = vmatprep.subr.mxu0 0.0
  %412 = vmatpush1.msra.mxu0 %v42
  %413 = vmatprep.subr.mxu0 0.0
  %414 = vmatpush1.msra.mxu0 %v43
  %415 = vmatprep.subr.mxu0 0.0
  %416 = vmatpush1.msra.mxu0 %v44
  %417 = vmatprep.subr.mxu0 0.0
  %418 = vmatpush1.msra.mxu0 %v45
  %419 = vmatprep.subr.mxu0 0.0
  %420 = vmatpush1.msra.mxu0 %v46
  %421 = vmatprep.subr.mxu0 0.0
  %422 = vmatpush1.msra.mxu0 %v47
  %423 = vmatprep.subr.mxu0 0.0
  %424 = vmatpush1.msra.mxu0 %v48
  %425 = vmatprep.subr.mxu0 0.0
  %426 = vmatpush1.msra.mxu0 %v49
  %427 = vmatprep.subr.mxu0 0.0
  %428 = vmatpush1.msra.mxu0 %v50
  %429 = vmatprep.subr.mxu0 0.0
  %430 = vmatpush1.msra.mxu0 %v51
  %431 = vmatprep.subr.mxu0 0.0
  %432 = vmatpush1.msra.mxu0 %v52
  %433 = vmatprep.subr.mxu0 0.0
  %434 = vmatpush1.msra.mxu0 %v53
  %435 = vmatprep.subr.mxu0 0.0
  %436 = vmatpush1.msra.mxu0 %v54
  %437 = vmatprep.subr.mxu0 0.0
  %438 = vmatpush1.msra.mxu0 %v55
  %439 = vmatprep.mubr.f32.mxu0 %v306
  %440 = vmatmul.mubr.f32.gmra.mrb[0].mxu0 %v298
  %v441 = vpop.f32.mrb[0].mxu0
  %v442 = vadd.f32 %v285, %v441
  %v443 = vpop.f32.mrb[0].mxu0
  %444 = vdwg.mxu0
  %445 = vmatprep.subr.mxu0 0.0
  %446 = vmatpush1.msra.mxu0 %v56
  %447 = vmatprep.subr.mxu0 0.0
  %448 = vmatpush1.msra.mxu0 %v57
  %449 = vmatprep.subr.mxu0 0.0
  %450 = vmatpush1.msra.mxu0 %v58
  %451 = vmatprep.subr.mxu0 0.0
  %452 = vmatpush1.msra.mxu0 %v59
  %453 = vmatprep.subr.mxu0 0.0
  %454 = vmatpush1.msra.mxu0 %v60
  %455 = vmatprep.subr.mxu0 0.0
  %456 = vmatpush1.msra.mxu0 %v61
  %457 = vmatprep.subr.mxu0 0.0
  %458 = vmatpush1.msra.mxu0 %v62
  %459 = vmatprep.subr.mxu0 0.0
  %460 = vmatpush1.msra.mxu0 %v63
  %461 = vmatprep.subr.mxu0 0.0
  %462 = vmatpush1.msra.mxu0 %v64
  %463 = vmatprep.subr.mxu0 0.0
  %464 = vmatpush1.msra.mxu0 %v65
  %465 = vmatprep.subr.mxu0 0.0
  %466 = vmatpush1.msra.mxu0 %v66
  %467 = vmatprep.subr.mxu0 0.0
  %468 = vmatpush1.msra.mxu0 %v67
  %469 = vmatprep.subr.mxu0 0.0
  %470 = vmatpush1.msra.mxu0 %v68
  %471 = vmatprep.subr.mxu0 0.0
  %472 = vmatpush1.msra.mxu0 %v69
  %473 = vmatprep.subr.mxu0 0.0
  %474 = vmatpush1.msra.mxu0 %v70
  %475 = vmatprep.subr.mxu0 0.0
  %476 = vmatpush1.msra.mxu0 %v71
  %477 = vmatprep.subr.mxu0 0.0
  %478 = vmatpush1.msra.mxu0 %v72
  %479 = vmatprep.subr.mxu0 0.0
  %480 = vmatpush1.msra.mxu0 %v73
  %481 = vmatprep.subr.mxu0 0.0
  %482 = vmatpush1.msra.mxu0 %v74
  %483 = vmatprep.subr.mxu0 0.0
  %484 = vmatpush1.msra.mxu0 %v75
  %485 = vmatprep.subr.mxu0 0.0
  %486 = vmatpush1.msra.mxu0 %v76
  %487 = vmatprep.subr.mxu0 0.0
  %488 = vmatpush1.msra.mxu0 %v77
  %489 = vmatprep.subr.mxu0 0.0
  %490 = vmatpush1.msra.mxu0 %v78
  %491 = vmatprep.subr.mxu0 0.0
  %492 = vmatpush1.msra.mxu0 %v79
  %493 = vmatprep.subr.mxu0 0.0
  %494 = vmatpush1.msra.mxu0 %v80
  %495 = vmatprep.subr.mxu0 0.0
  %496 = vmatpush1.msra.mxu0 %v81
  %497 = vmatprep.subr.mxu0 0.0
  %498 = vmatpush1.msra.mxu0 %v82
  %499 = vmatprep.subr.mxu0 0.0
  %500 = vmatpush1.msra.mxu0 %v83
  %501 = vmatprep.subr.mxu0 0.0
  %502 = vmatpush1.msra.mxu0 %v84
  %503 = vmatprep.subr.mxu0 0.0
  %504 = vmatpush1.msra.mxu0 %v85
  %505 = vmatprep.subr.mxu0 0.0
  %506 = vmatpush1.msra.mxu0 %v86
  %507 = vmatprep.subr.mxu0 0.0
  %508 = vmatpush1.msra.mxu0 %v87
  %509 = vmatprep.mubr.f32.mxu0 %v307
  %510 = vmatmul.mubr.f32.gmra.mrb[0].mxu0 %v305
  %v511 = vpop.f32.mrb[0].mxu0
  %v512 = vadd.f32 %v442, %v511
  %v513 = vpop.f32.mrb[0].mxu0
  %514 = vdwg.mxu0
  %515 = vmatprep.subr.mxu0 0.0
  %516 = vmatpush1.msra.mxu0 %v88
  %517 = vmatprep.subr.mxu0 0.0
  %518 = vmatpush1.msra.mxu0 %v89
  %519 = vmatprep.subr.mxu0 0.0
  %520 = vmatpush1.msra.mxu0 %v90
  %521 = vmatprep.subr.mxu0 0.0
  %522 = vmatpush1.msra.mxu0 %v91
  %523 = vmatprep.subr.mxu0 0.0
  %524 = vmatpush1.msra.mxu0 %v92
  %525 = vmatprep.subr.mxu0 0.0
  %526 = vmatpush1.msra.mxu0 %v93
  %527 = vmatprep.subr.mxu0 0.0
  %528 = vmatpush1.msra.mxu0 %v94
  %529 = vmatprep.subr.mxu0 0.0
  %530 = vmatpush1.msra.mxu0 %v95
  %531 = vmatprep.subr.mxu0 0.0
  %532 = vmatpush1.msra.mxu0 %v96
  %533 = vmatprep.subr.mxu0 0.0
  %534 = vmatpush1.msra.mxu0 %v97
  %535 = vmatprep.subr.mxu0 0.0
  %536 = vmatpush1.msra.mxu0 %v98
  %537 = vmatprep.subr.mxu0 0.0
  %538 = vmatpush1.msra.mxu0 %v99
  %539 = vmatprep.subr.mxu0 0.0
  %540 = vmatpush1.msra.mxu0 %v100
  %541 = vmatprep.subr.mxu0 0.0
  %542 = vmatpush1.msra.mxu0 %v101
  %543 = vmatprep.subr.mxu0 0.0
  %544 = vmatpush1.msra.mxu0 %v102
  %545 = vmatprep.subr.mxu0 0.0
  %546 = vmatpush1.msra.mxu0 %v103
  %547 = vmatprep.subr.mxu0 0.0
  %548 = vmatpush1.msra.mxu0 %v104
  %549 = vmatprep.subr.mxu0 0.0
  %550 = vmatpush1.msra.mxu0 %v105
  %551 = vmatprep.subr.mxu0 0.0
  %552 = vmatpush1.msra.mxu0 %v106
  %553 = vmatprep.subr.mxu0 0.0
  %554 = vmatpush1.msra.mxu0 %v107
  %555 = vmatprep.subr.mxu0 0.0
  %556 = vmatpush1.msra.mxu0 %v108
  %557 = vmatprep.subr.mxu0 0.0
  %558 = vmatpush1.msra.mxu0 %v109
  %559 = vmatprep.subr.mxu0 0.0
  %560 = vmatpush1.msra.mxu0 %v110
  %561 = vmatprep.subr.mxu0 0.0
  %562 = vmatpush1.msra.mxu0 %v111
  %563 = vmatprep.subr.mxu0 0.0
  %564 = vmatpush1.msra.mxu0 %v112
  %565 = vmatprep.subr.mxu0 0.0
  %566 = vmatpush1.msra.mxu0 %v113
  %567 = vmatprep.subr.mxu0 0.0
  %568 = vmatpush1.msra.mxu0 %v114
  %569 = vmatprep.subr.mxu0 0.0
  %570 = vmatpush1.msra.mxu0 %v115
  %571 = vmatprep.subr.mxu0 0.0
  %572 = vmatpush1.msra.mxu0 %v116
  %573 = vmatprep.subr.mxu0 0.0
  %574 = vmatpush1.msra.mxu0 %v117
  %575 = vmatprep.subr.mxu0 0.0
  %576 = vmatpush1.msra.mxu0 %v118
  %577 = vmatprep.subr.mxu0 0.0
  %578 = vmatpush1.msra.mxu0 %v119
  %579 = vmatprep.mubr.f32.mxu0 %v323
  %580 = vmatmul.mubr.f32.gmra.mrb[0].mxu0 %v315
  %v581 = vpop.f32.mrb[0].mxu0
  %v582 = vadd.f32 %v512, %v581
  %v583 = vpop.f32.mrb[0].mxu0
  %584 = vdwg.mxu0
  %585 = vmatprep.subr.mxu0 0.0
  %586 = vmatpush1.msra.mxu0 %v120
  %587 = vmatprep.subr.mxu0 0.0
  %588 = vmatpush1.msra.mxu0 %v121
  %589 = vmatprep.subr.mxu0 0.0
  %590 = vmatpush1.msra.mxu0 %v122
  %591 = vmatprep.subr.mxu0 0.0
  %592 = vmatpush1.msra.mxu0 %v123
  %593 = vmatprep.subr.mxu0 0.0
  %594 = vmatpush1.msra.mxu0 %v124
  %595 = vmatprep.subr.mxu0 0.0
  %596 = vmatpush1.msra.mxu0 %v125
  %597 = vmatprep.subr.mxu0 0.0
  %598 = vmatpush1.msra.mxu0 %v126
  %599 = vmatprep.subr.mxu0 0.0
  %600 = vmatpush1.msra.mxu0 %v127
  %601 = vmatprep.subr.mxu0 0.0
  %602 = vmatpush1.msra.mxu0 %v128
  %603 = vmatprep.subr.mxu0 0.0
  %604 = vmatpush1.msra.mxu0 %v129
  %605 = vmatprep.subr.mxu0 0.0
  %606 = vmatpush1.msra.mxu0 %v130
  %607 = vmatprep.subr.mxu0 0.0
  %608 = vmatpush1.msra.mxu0 %v131
  %609 = vmatprep.subr.mxu0 0.0
  %610 = vmatpush1.msra.mxu0 %v132
  %611 = vmatprep.subr.mxu0 0.0
  %612 = vmatpush1.msra.mxu0 %v133
  %613 = vmatprep.subr.mxu0 0.0
  %614 = vmatpush1.msra.mxu0 %v134
  %615 = vmatprep.subr.mxu0 0.0
  %616 = vmatpush1.msra.mxu0 %v135
  %617 = vmatprep.subr.mxu0 0.0
  %618 = vmatpush1.msra.mxu0 %v136
  %619 = vmatprep.subr.mxu0 0.0
  %620 = vmatpush1.msra.mxu0 %v137
  %621 = vmatprep.subr.mxu0 0.0
  %622 = vmatpush1.msra.mxu0 %v138
  %623 = vmatprep.subr.mxu0 0.0
  %624 = vmatpush1.msra.mxu0 %v139
  %625 = vmatprep.subr.mxu0 0.0
  %626 = vmatpush1.msra.mxu0 %v140
  %627 = vmatprep.subr.mxu0 0.0
  %628 = vmatpush1.msra.mxu0 %v141
  %629 = vmatprep.subr.mxu0 0.0
  %630 = vmatpush1.msra.mxu0 %v142
  %631 = vmatprep.subr.mxu0 0.0
  %632 = vmatpush1.msra.mxu0 %v143
  %633 = vmatprep.subr.mxu0 0.0
  %634 = vmatpush1.msra.mxu0 %v144
  %635 = vmatprep.subr.mxu0 0.0
  %636 = vmatpush1.msra.mxu0 %v145
  %637 = vmatprep.subr.mxu0 0.0
  %638 = vmatpush1.msra.mxu0 %v146
  %639 = vmatprep.subr.mxu0 0.0
  %640 = vmatpush1.msra.mxu0 %v147
  %641 = vmatprep.subr.mxu0 0.0
  %642 = vmatpush1.msra.mxu0 %v148
  %643 = vmatprep.subr.mxu0 0.0
  %644 = vmatpush1.msra.mxu0 %v149
  %645 = vmatprep.subr.mxu0 0.0
  %646 = vmatpush1.msra.mxu0 %v150
  %647 = vmatprep.subr.mxu0 0.0
  %648 = vmatpush1.msra.mxu0 %v151
  %649 = vmatprep.mubr.f32.mxu0 %v324
  %650 = vmatmul.mubr.f32.gmra.mrb[0].mxu0 %v322
  %v651 = vpop.f32.mrb[0].mxu0
  %v652 = vadd.f32 %v582, %v651
  %v653 = vpop.f32.mrb[0].mxu0
  %654 = vdwg.mxu0
  %655 = vmatprep.subr.mxu0 0.0
  %656 = vmatpush1.msra.mxu0 %v152
  %657 = vmatprep.subr.mxu0 0.0
  %658 = vmatpush1.msra.mxu0 %v153
  %659 = vmatprep.subr.mxu0 0.0
  %660 = vmatpush1.msra.mxu0 %v154
  %661 = vmatprep.subr.mxu0 0.0
  %662 = vmatpush1.msra.mxu0 %v155
  %663 = vmatprep.subr.mxu0 0.0
  %664 = vmatpush1.msra.mxu0 %v156
  %665 = vmatprep.subr.mxu0 0.0
  %666 = vmatpush1.msra.mxu0 %v157
  %667 = vmatprep.subr.mxu0 0.0
  %668 = vmatpush1.msra.mxu0 %v158
  %669 = vmatprep.subr.mxu0 0.0
  %670 = vmatpush1.msra.mxu0 %v159
  %671 = vmatprep.subr.mxu0 0.0
  %672 = vmatpush1.msra.mxu0 %v160
  %673 = vmatprep.subr.mxu0 0.0
  %674 = vmatpush1.msra.mxu0 %v161
  %675 = vmatprep.subr.mxu0 0.0
  %676 = vmatpush1.msra.mxu0 %v162
  %677 = vmatprep.subr.mxu0 0.0
  %678 = vmatpush1.msra.mxu0 %v163
  %679 = vmatprep.subr.mxu0 0.0
  %680 = vmatpush1.msra.mxu0 %v164
  %681 = vmatprep.subr.mxu0 0.0
  %682 = vmatpush1.msra.mxu0 %v165
  %683 = vmatprep.subr.mxu0 0.0
  %684 = vmatpush1.msra.mxu0 %v166
  %685 = vmatprep.subr.mxu0 0.0
  %686 = vmatpush1.msra.mxu0 %v167
  %687 = vmatprep.subr.mxu0 0.0
  %688 = vmatpush1.msra.mxu0 %v168
  %689 = vmatprep.subr.mxu0 0.0
  %690 = vmatpush1.msra.mxu0 %v169
  %691 = vmatprep.subr.mxu0 0.0
  %692 = vmatpush1.msra.mxu0 %v170
  %693 = vmatprep.subr.mxu0 0.0
  %694 = vmatpush1.msra.mxu0 %v171
  %695 = vmatprep.subr.mxu0 0.0
  %696 = vmatpush1.msra.mxu0 %v172
  %697 = vmatprep.subr.mxu0 0.0
  %698 = vmatpush1.msra.mxu0 %v173
  %699 = vmatprep.subr.mxu0 0.0
  %700 = vmatpush1.msra.mxu0 %v174
  %701 = vmatprep.subr.mxu0 0.0
  %702 = vmatpush1.msra.mxu0 %v175
  %703 = vmatprep.subr.mxu0 0.0
  %704 = vmatpush1.msra.mxu0 %v176
  %705 = vmatprep.subr.mxu0 0.0
  %706 = vmatpush1.msra.mxu0 %v177
  %707 = vmatprep.subr.mxu0 0.0
  %708 = vmatpush1.msra.mxu0 %v178
  %709 = vmatprep.subr.mxu0 0.0
  %710 = vmatpush1.msra.mxu0 %v179
  %711 = vmatprep.subr.mxu0 0.0
  %712 = vmatpush1.msra.mxu0 %v180
  %713 = vmatprep.subr.mxu0 0.0
  %714 = vmatpush1.msra.mxu0 %v181
  %715 = vmatprep.subr.mxu0 0.0
  %716 = vmatpush1.msra.mxu0 %v182
  %717 = vmatprep.subr.mxu0 0.0
  %718 = vmatpush1.msra.mxu0 %v183
  %719 = vmatprep.mubr.f32.mxu0 %v340
  %720 = vmatmul.mubr.f32.gmra.mrb[0].mxu0 %v332
  %v721 = vpop.f32.mrb[0].mxu0
  %v722 = vadd.f32 %v652, %v721
  %v723 = vpop.f32.mrb[0].mxu0
  %724 = vdwg.mxu0
  %725 = vmatprep.subr.mxu0 0.0
  %726 = vmatpush1.msra.mxu0 %v184
  %727 = vmatprep.subr.mxu0 0.0
  %728 = vmatpush1.msra.mxu0 %v185
  %729 = vmatprep.subr.mxu0 0.0
  %730 = vmatpush1.msra.mxu0 %v186
  %731 = vmatprep.subr.mxu0 0.0
  %732 = vmatpush1.msra.mxu0 %v187
  %733 = vmatprep.subr.mxu0 0.0
  %734 = vmatpush1.msra.mxu0 %v188
  %735 = vmatprep.subr.mxu0 0.0
  %736 = vmatpush1.msra.mxu0 %v189
  %737 = vmatprep.subr.mxu0 0.0
  %738 = vmatpush1.msra.mxu0 %v190
  %739 = vmatprep.subr.mxu0 0.0
  %740 = vmatpush1.msra.mxu0 %v191
  %741 = vmatprep.subr.mxu0 0.0
  %742 = vmatpush1.msra.mxu0 %v192
  %743 = vmatprep.subr.mxu0 0.0
  %744 = vmatpush1.msra.mxu0 %v193
  %745 = vmatprep.subr.mxu0 0.0
  %746 = vmatpush1.msra.mxu0 %v194
  %747 = vmatprep.subr.mxu0 0.0
  %748 = vmatpush1.msra.mxu0 %v195
  %749 = vmatprep.subr.mxu0 0.0
  %750 = vmatpush1.msra.mxu0 %v196
  %751 = vmatprep.subr.mxu0 0.0
  %752 = vmatpush1.msra.mxu0 %v197
  %753 = vmatprep.subr.mxu0 0.0
  %754 = vmatpush1.msra.mxu0 %v198
  %755 = vmatprep.subr.mxu0 0.0
  %756 = vmatpush1.msra.mxu0 %v199
  %757 = vmatprep.subr.mxu0 0.0
  %758 = vmatpush1.msra.mxu0 %v200
  %759 = vmatprep.subr.mxu0 0.0
  %760 = vmatpush1.msra.mxu0 %v201
  %761 = vmatprep.subr.mxu0 0.0
  %762 = vmatpush1.msra.mxu0 %v202
  %763 = vmatprep.subr.mxu0 0.0
  %764 = vmatpush1.msra.mxu0 %v203
  %765 = vmatprep.subr.mxu0 0.0
  %766 = vmatpush1.msra.mxu0 %v204
  %767 = vmatprep.subr.mxu0 0.0
  %768 = vmatpush1.msra.mxu0 %v205
  %769 = vmatprep.subr.mxu0 0.0
  %770 = vmatpush1.msra.mxu0 %v206
  %771 = vmatprep.subr.mxu0 0.0
  %772 = vmatpush1.msra.mxu0 %v207
  %773 = vmatprep.subr.mxu0 0.0
  %774 = vmatpush1.msra.mxu0 %v208
  %775 = vmatprep.subr.mxu0 0.0
  %776 = vmatpush1.msra.mxu0 %v209
  %777 = vmatprep.subr.mxu0 0.0
  %778 = vmatpush1.msra.mxu0 %v210
  %779 = vmatprep.subr.mxu0 0.0
  %780 = vmatpush1.msra.mxu0 %v211
  %781 = vmatprep.subr.mxu0 0.0
  %782 = vmatpush1.msra.mxu0 %v212
  %783 = vmatprep.subr.mxu0 0.0
  %784 = vmatpush1.msra.mxu0 %v213
  %785 = vmatprep.subr.mxu0 0.0
  %786 = vmatpush1.msra.mxu0 %v214
  %787 = vmatprep.subr.mxu0 0.0
  %788 = vmatpush1.msra.mxu0 %v215
  %789 = vmatprep.mubr.f32.mxu0 %v341
  %790 = vmatmul.mubr.f32.gmra.mrb[0].mxu0 %v339
  %v791 = vpop.f32.mrb[0].mxu0
  %v792 = vadd.f32 %v722, %v791
  %v793 = vpop.f32.mrb[0].mxu0
  %794 = vdwg.mxu0
  %795 = vmatprep.subr.mxu0 0.0
  %796 = vmatpush1.msra.mxu0 %v216
  %797 = vmatprep.subr.mxu0 0.0
  %798 = vmatpush1.msra.mxu0 %v217
  %799 = vmatprep.subr.mxu0 0.0
  %800 = vmatpush1.msra.mxu0 %v218
  %801 = vmatprep.subr.mxu0 0.0
  %802 = vmatpush1.msra.mxu0 %v219
  %803 = vmatprep.subr.mxu0 0.0
  %804 = vmatpush1.msra.mxu0 %v220
  %805 = vmatprep.subr.mxu0 0.0
  %806 = vmatpush1.msra.mxu0 %v221
  %807 = vmatprep.subr.mxu0 0.0
  %808 = vmatpush1.msra.mxu0 %v222
  %809 = vmatprep.subr.mxu0 0.0
  %810 = vmatpush1.msra.mxu0 %v223
  %811 = vmatprep.subr.mxu0 0.0
  %812 = vmatpush1.msra.mxu0 %v224
  %813 = vmatprep.subr.mxu0 0.0
  %814 = vmatpush1.msra.mxu0 %v225
  %815 = vmatprep.subr.mxu0 0.0
  %816 = vmatpush1.msra.mxu0 %v226
  %817 = vmatprep.subr.mxu0 0.0
  %818 = vmatpush1.msra.mxu0 %v227
  %819 = vmatprep.subr.mxu0 0.0
  %820 = vmatpush1.msra.mxu0 %v228
  %821 = vmatprep.subr.mxu0 0.0
  %822 = vmatpush1.msra.mxu0 %v229
  %823 = vmatprep.subr.mxu0 0.0
  %824 = vmatpush1.msra.mxu0 %v230
  %825 = vmatprep.subr.mxu0 0.0
  %826 = vmatpush1.msra.mxu0 %v231
  %827 = vmatprep.subr.mxu0 0.0
  %828 = vmatpush1.msra.mxu0 %v232
  %829 = vmatprep.subr.mxu0 0.0
  %830 = vmatpush1.msra.mxu0 %v233
  %831 = vmatprep.subr.mxu0 0.0
  %832 = vmatpush1.msra.mxu0 %v234
  %833 = vmatprep.subr.mxu0 0.0
  %834 = vmatpush1.msra.mxu0 %v235
  %835 = vmatprep.subr.mxu0 0.0
  %836 = vmatpush1.msra.mxu0 %v236
  %837 = vmatprep.subr.mxu0 0.0
  %838 = vmatpush1.msra.mxu0 %v237
  %839 = vmatprep.subr.mxu0 0.0
  %840 = vmatpush1.msra.mxu0 %v238
  %841 = vmatprep.subr.mxu0 0.0
  %842 = vmatpush1.msra.mxu0 %v239
  %843 = vmatprep.subr.mxu0 0.0
  %844 = vmatpush1.msra.mxu0 %v240
  %845 = vmatprep.subr.mxu0 0.0
  %846 = vmatpush1.msra.mxu0 %v241
  %847 = vmatprep.subr.mxu0 0.0
  %848 = vmatpush1.msra.mxu0 %v242
  %849 = vmatprep.subr.mxu0 0.0
  %850 = vmatpush1.msra.mxu0 %v243
  %851 = vmatprep.subr.mxu0 0.0
  %852 = vmatpush1.msra.mxu0 %v244
  %853 = vmatprep.subr.mxu0 0.0
  %854 = vmatpush1.msra.mxu0 %v245
  %855 = vmatprep.subr.mxu0 0.0
  %856 = vmatpush1.msra.mxu0 %v246
  %857 = vmatprep.subr.mxu0 0.0
  %858 = vmatpush1.msra.mxu0 %v247
  %859 = vmatprep.mubr.f32.mxu0 %v357
  %860 = vmatmul.mubr.f32.gmra.mrb[0].mxu0 %v349
  %v861 = vpop.f32.mrb[0].mxu0
  %v862 = vadd.f32 %v792, %v861
  %v863 = vpop.f32.mrb[0].mxu0
  %864 = vdwg.mxu0
  %865 = vmatprep.subr.mxu0 0.0
  %866 = vmatpush1.msra.mxu0 %v248
  %867 = vmatprep.subr.mxu0 0.0
  %868 = vmatpush1.msra.mxu0 %v249
  %869 = vmatprep.subr.mxu0 0.0
  %870 = vmatpush1.msra.mxu0 %v250
  %871 = vmatprep.subr.mxu0 0.0
  %872 = vmatpush1.msra.mxu0 %v251
  %873 = vmatprep.subr.mxu0 0.0
  %874 = vmatpush1.msra.mxu0 %v252
  %875 = vmatprep.subr.mxu0 0.0
  %876 = vmatpush1.msra.mxu0 %v253
  %877 = vmatprep.subr.mxu0 0.0
  %878 = vmatpush1.msra.mxu0 %v254
  %879 = vmatprep.subr.mxu0 0.0
  %880 = vmatpush1.msra.mxu0 %v255
  %881 = vmatprep.subr.mxu0 0.0
  %882 = vmatpush1.msra.mxu0 %v256
  %883 = vmatprep.subr.mxu0 0.0
  %884 = vmatpush1.msra.mxu0 %v257
  %885 = vmatprep.subr.mxu0 0.0
  %886 = vmatpush1.msra.mxu0 %v258
  %887 = vmatprep.subr.mxu0 0.0
  %888 = vmatpush1.msra.mxu0 %v259
  %889 = vmatprep.subr.mxu0 0.0
  %890 = vmatpush1.msra.mxu0 %v260
  %891 = vmatprep.subr.mxu0 0.0
  %892 = vmatpush1.msra.mxu0 %v261
  %893 = vmatprep.subr.mxu0 0.0
  %894 = vmatpush1.msra.mxu0 %v262
  %895 = vmatprep.subr.mxu0 0.0
  %896 = vmatpush1.msra.mxu0 %v263
  %897 = vmatprep.subr.mxu0 0.0
  %898 = vmatpush1.msra.mxu0 %v264
  %899 = vmatprep.subr.mxu0 0.0
  %900 = vmatpush1.msra.mxu0 %v265
  %901 = vmatprep.subr.mxu0 0.0
  %902 = vmatpush1.msra.mxu0 %v266
  %903 = vmatprep.subr.mxu0 0.0
  %904 = vmatpush1.msra.mxu0 %v267
  %905 = vmatprep.subr.mxu0 0.0
  %906 = vmatpush1.msra.mxu0 %v268
  %907 = vmatprep.subr.mxu0 0.0
  %908 = vmatpush1.msra.mxu0 %v269
  %909 = vmatprep.subr.mxu0 0.0
  %910 = vmatpush1.msra.mxu0 %v270
  %911 = vmatprep.subr.mxu0 0.0
  %912 = vmatpush1.msra.mxu0 %v271
  %913 = vmatprep.subr.mxu0 0.0
  %914 = vmatpush1.msra.mxu0 %v272
  %915 = vmatprep.subr.mxu0 0.0
  %916 = vmatpush1.msra.mxu0 %v273
  %917 = vmatprep.subr.mxu0 0.0
  %918 = vmatpush1.msra.mxu0 %v274
  %919 = vmatprep.subr.mxu0 0.0
  %920 = vmatpush1.msra.mxu0 %v275
  %921 = vmatprep.subr.mxu0 0.0
  %922 = vmatpush1.msra.mxu0 %v276
  %923 = vmatprep.subr.mxu0 0.0
  %924 = vmatpush1.msra.mxu0 %v277
  %925 = vmatprep.subr.mxu0 0.0
  %926 = vmatpush1.msra.mxu0 %v278
  %927 = vmatprep.subr.mxu0 0.0
  %928 = vmatpush1.msra.mxu0 %v279
  %929 = vmatprep.mubr.f32.mxu0 %v358
  %930 = vmatmul.mubr.f32.gmra.mrb[0].mxu0 %v356
  %v931 = vpop.f32.mrb[0].mxu0
  %v932 = vadd.f32 %v862, %v931
  %v933 = vpop.f32.mrb[0].mxu0
  %934 = vdwg.mxu0
  %v935 = vmax.f32 %v932, 0.0
  %v936 = vld [vmem:[%s3] sm:$0xff]
  %v937 = vld [vmem:[%s3 + $0x8] sm:$0xff]
  %v938 = vld [vmem:[%s3 + $0x10] sm:$0xff]
  %v939 = vld [vmem:[%s3 + $0x18] sm:$0xff]
  %v940 = vld [vmem:[%s3 + $0x20] sm:$0xff]
  %v941 = vld [vmem:[%s3 + $0x28] sm:$0xff]
  %v942 = vld [vmem:[%s3 + $0x30] sm:$0xff]
  %v943 = vld [vmem:[%s3 + $0x38] sm:$0xff]
  %v944 = vld [vmem:[%s3 + $0x40] sm:$0xff]
  %v945 = vld [vmem:[%s3 + $0x48] sm:$0xff]
  %v946 = vld [vmem:[%s3 + $0x50] sm:$0xff]
  %v947 = vld [vmem:[%s3 + $0x58] sm:$0xff]
  %v948 = vld [vmem:[%s3 + $0x60] sm:$0xff]
  %v949 = vld [vmem:[%s3 + $0x68] sm:$0xff]
  %v950 = vld [vmem:[%s3 + $0x70] sm:$0xff]
  %v951 = vld [vmem:[%s3 + $0x78] sm:$0xff]
  %v952 = vld [vmem:[%s4] sm:$0x1]
  %v954 = vlaneseq
  %v955 = vshrl.u32 %v954, 7
  %v956 = vsub.s32 0, %v955
  %v957 = vrot.slane %v952, %v956
  %959 = vmatprep.subr.mxu0 0.0
  %960 = vmatpush1.msra.mxu0 %v936
  %961 = vmatprep.subr.mxu0 0.0
  %962 = vmatpush1.msra.mxu0 %v937
  %963 = vmatprep.subr.mxu0 0.0
  %964 = vmatpush1.msra.mxu0 %v938
  %965 = vmatprep.subr.mxu0 0.0
  %966 = vmatpush1.msra.mxu0 %v939
  %967 = vmatprep.subr.mxu0 0.0
  %968 = vmatpush1.msra.mxu0 %v940
  %969 = vmatprep.subr.mxu0 0.0
  %970 = vmatpush1.msra.mxu0 %v941
  %971 = vmatprep.subr.mxu0 0.0
  %972 = vmatpush1.msra.mxu0 %v942
  %973 = vmatprep.subr.mxu0 0.0
  %974 = vmatpush1.msra.mxu0 %v943
  %975 = vmatprep.subr.mxu0 0.0
  %976 = vmatpush1.msra.mxu0 %v944
  %977 = vmatprep.subr.mxu0 0.0
  %978 = vmatpush1.msra.mxu0 %v945
  %979 = vmatprep.subr.mxu0 0.0
  %980 = vmatpush1.msra.mxu0 %v946
  %981 = vmatprep.subr.mxu0 0.0
  %982 = vmatpush1.msra.mxu0 %v947
  %983 = vmatprep.subr.mxu0 0.0
  %984 = vmatpush1.msra.mxu0 %v948
  %985 = vmatprep.subr.mxu0 0.0
  %986 = vmatpush1.msra.mxu0 %v949
  %987 = vmatprep.subr.mxu0 0.0
  %988 = vmatpush1.msra.mxu0 %v950
  %989 = vmatprep.subr.mxu0 0.0
  %990 = vmatpush1.msra.mxu0 %v951
  %991 = vmatprep.subr.mxu0 0.0
  %992 = vmatpush1.msra.mxu0 0.0
  %993 = vmatprep.subr.mxu0 0.0
  %994 = vmatpush1.msra.mxu0 0.0
  %995 = vmatprep.subr.mxu0 0.0
  %996 = vmatpush1.msra.mxu0 0.0
  %997 = vmatprep.subr.mxu0 0.0
  %998 = vmatpush1.msra.mxu0 0.0
  %999 = vmatprep.subr.mxu0 0.0
  %1000 = vmatpush1.msra.mxu0 0.0
  %1001 = vmatprep.subr.mxu0 0.0
  %1002 = vmatpush1.msra.mxu0 0.0
  %1003 = vmatprep.subr.mxu0 0.0
  %1004 = vmatpush1.msra.mxu0 0.0
  %1005 = vmatprep.subr.mxu0 0.0
  %1006 = vmatpush1.msra.mxu0 0.0
  %1007 = vmatprep.subr.mxu0 0.0
  %1008 = vmatpush1.msra.mxu0 0.0
  %1009 = vmatprep.subr.mxu0 0.0
  %1010 = vmatpush1.msra.mxu0 0.0
  %1011 = vmatprep.subr.mxu0 0.0
  %1012 = vmatpush1.msra.mxu0 0.0
  %1013 = vmatprep.subr.mxu0 0.0
  %1014 = vmatpush1.msra.mxu0 0.0
  %1015 = vmatprep.subr.mxu0 0.0
  %1016 = vmatpush1.msra.mxu0 0.0
  %1017 = vmatprep.subr.mxu0 0.0
  %1018 = vmatpush1.msra.mxu0 0.0
  %1019 = vmatprep.subr.mxu0 0.0
  %1020 = vmatpush1.msra.mxu0 0.0
  %1021 = vmatprep.subr.mxu0 0.0
  %1022 = vmatpush1.msra.mxu0 0.0
  %1023 = vmatprep.mubr.f32.mxu0 0.0
  %1024 = vmatmul.mubr.f32.gmra.mrb[0].mxu0 %v935
  %v1025 = vpop.f32.mrb[0].mxu0
  %v1026 = vadd.f32 %v957, %v1025
  %v1027 = vpop.f32.mrb[0].mxu0
  %1028 = vdwg.mxu0
  %vm1029 = vcmask 50176
  %v1030 = vsel %vm1029, %v1026, 0.0
  %1031 = vadd.xlane.f32.xlu0 %v1030
  %v1032 = vpop.xlane.xlu0 %1031
  %v1033 = vrot.slane %v1032, 4
  %v1034 = vadd.f32 %v1032, %v1033
  %v1035 = vrot.slane %v1034, 2
  %v1036 = vadd.f32 %v1034, %v1035
  %v1037 = vrot.slane %v1036, 1
  %v1038 = vadd.f32 %v1036, %v1037
  %s1039 = vtos %v1038
  %vm1040 = vcmask 1024
  %v1041 = vsel %vm1040, %v1026, 0.0
  %1042 = vadd.xlane.f32.xlu0 %v1041
  %v1043 = vpop.xlane.xlu0 %1042
  %v1044 = vrot.slane %v1043, 4
  %v1045 = vadd.f32 %v1043, %v1044
  %v1046 = vrot.slane %v1045, 2
  %v1047 = vadd.f32 %v1045, %v1046
  %v1048 = vrot.slane %v1047, 1
  %v1049 = vadd.f32 %v1047, %v1048
  %s1050 = vtos %v1049
  %s1051 = ssub.f32 %s1039, %s1050
  %s1052 = smul.f32 %s1051, 0.083333336
  %1054 = vset.pattern.permute.xlu0 0
  %1055 = vperm.xlu0 %1054, %v1026
  %v1056 = vpop.permute.xlu0 %1055
  %v1058 = vadd.f32 %v1026, %v1056
  %v1059 = vstv %s1052
  %v1060 = vsub.f32 %v1058, %v1059
  %1061 = vst.msk [vmem:[%s5] sm:$0x3] %vm1029, %v1060
  // Predicated region
  $region22: #{duel_cnn_forward.5} parent=0 // pred_check
    _
  $region23: #{duel_cnn_forward.5} parent=0 // pred_check_branch
    %1063 = sbr.rel (0) target = $region25
  $region24: #{duel_cnn_forward.5} parent=0 // pred_region
    _
  $region25: #{duel_cnn_forward.5} parent=0 // pred_fallthru
    _
  // Predicated region
  $region26: #{duel_cnn_forward.5} parent=0 // pred_check
    _
  $region27: #{duel_cnn_forward.5} parent=0 // pred_check_branch
    %1065 = sbr.rel (0) target = $region29
  $region28: #{duel_cnn_forward.5} parent=0 // pred_region
    _
  $region29: #{duel_cnn_forward.5} parent=0 // pred_fallthru
    _

</llo_original>
